<compile_context>
chip_gen: v7x
topology: tpu7x:2x2x1
jax: 0.10.0
libtpu: 0.0.40
codegen_flags: <defaults>
</compile_context>

<pallas_src>
import jax
import jax.numpy as jnp
import numpy as np
from jax import lax
from jax.experimental import pallas as pl
from jax.experimental.pallas import tpu as pltpu


def _round_up(x, m):
    return ((x + m - 1) // m) * m


# ----------------------------------------------------------------------------
# Pallas kernel
# ----------------------------------------------------------------------------
def _softmax_rows(logits):
    """Row softmax with EUP exp + approximate reciprocal (free VLIW slot)."""
    m = jnp.max(logits, axis=-1, keepdims=True)
    e = jnp.exp(logits - m)
    denom = jnp.sum(e, axis=-1, keepdims=True)
    return e * pl.reciprocal(denom, approx=True)


def deepred_kernel(x_ref, wih_ref, whh_ref, bih_ref, bhh_ref,
                   u_out_ref, i_out_ref, hist_ref):
    # x_ref: (H, 2B, I_pad), time-major; rows [0:B] = user hist, [B:2B] = item.
    H, B2, I = x_ref.shape
    B = B2 // 2
    E = whh_ref.shape[0]          # padded embedding size (lane-dense, 128k)
    G3 = 3 * E

    w_hh = whh_ref[...]                                        # (E, 3E)
    # Hoisted bias broadcasts (JAX does not CSE broadcast_in_dim in the
    # unrolled loop).
    b_hh = jnp.broadcast_to(bhh_ref[...], (B2, G3))

    # Hoisted input projection: one big (H*2B, I) @ (I, 3E) matmul for ALL
    # timesteps of BOTH streams, instead of 2*H tiny matmuls in the loop.
    x_flat = x_ref[...].reshape(H * B2, I)
    gi_all = (jnp.dot(x_flat, wih_ref[...],
                      preferred_element_type=jnp.float32)
              + jnp.broadcast_to(bih_ref[...], (H * B2, G3)))
    gi_all = gi_all.reshape(H, B2, G3)

    # Fused sequential GRU recurrence (shared encoder weights).  Only the
    # hidden-side matmul is truly serial.  H is small and static -> unrolled.
    # TODO(synk): if H grows, switch to lax.fori_loop(..., unroll=True).
    h = jnp.zeros((B2, E), jnp.float32)
    for t in range(H):
        gi = gi_all[t]                                          # (2B, 3E)
        gh = jnp.dot(h, w_hh, preferred_element_type=jnp.float32) + b_hh
        r = jax.nn.sigmoid(gi[:, :E] + gh[:, :E])
        z = jax.nn.sigmoid(gi[:, E:2 * E] + gh[:, E:2 * E])
        n = jnp.tanh(gi[:, 2 * E:] + r * gh[:, 2 * E:])
        h = (1.0 - z) * n + z * h
        hist_ref[t, :, :] = h        # dense, sublane-aligned (2B, E) slab store

    hist = hist_ref[...]                                        # (H, 2B, E)
    U = jnp.swapaxes(hist[:, :B, :], 0, 1)                      # (B, H, E)
    V = jnp.swapaxes(hist[:, B:, :], 0, 1)                      # (B, H, E)

    # alignment_scores = tanh(U @ V^T); padded E columns are zero so they do
    # not contribute to the contraction.
    S = jnp.tanh(jnp.einsum('bhe,bke->bhk', U, V,
                            preferred_element_type=jnp.float32))  # (B, H, H)

    inv_h = 1.0 / H                                             # 'mean' pooling
    u_att = _softmax_rows(jnp.sum(S, axis=-1) * inv_h)          # (B, H)
    i_att = _softmax_rows(jnp.sum(S, axis=-2) * inv_h)          # (B, H)

    # attention-weighted sum -> lane-dense (B_TILE, E_pad) output slabs.
    u_out_ref[...] = jnp.sum(U * u_att[:, :, None], axis=1)
    i_out_ref[...] = jnp.sum(V * i_att[:, :, None], axis=1)


# ----------------------------------------------------------------------------
# Wrapper: padding, user/item fusion, batch grid
# ----------------------------------------------------------------------------
def deepred_edge_forward(x_user, x_item, w_ih, w_hh, b_ih, b_hh,
                         *, b_tile=None):
    """x_user/x_item: (B, H, E+1) float32.
    w_ih: (3E, E+1), w_hh: (3E, E), b_ih/b_hh: (3E,)  (PyTorch GRU layout).
    Returns (B, E) user and item short-term embeddings."""
    B, H, I = x_user.shape
    E = w_hh.shape[1]

    E_pad = _round_up(E, 128)          # lane-dense gates / hidden / outputs
    I_pad = _round_up(I, 128)          # lane-dense history features
    if b_tile is None:
        b_tile = min(_round_up(B, 8), 128)
    B_pad = _round_up(B, b_tile)
    G = B_pad // b_tile

    f32 = jnp.float32

    # --- pad GRU weights; each gate block placed at stride E_pad so padded
    #     hidden columns stay exactly zero through the recurrence. ---
    w_ih_p = jnp.zeros((I_pad, 3 * E_pad), f32)
    w_hh_p = jnp.zeros((E_pad, 3 * E_pad), f32)
    b_ih_p = jnp.zeros((1, 3 * E_pad), f32)
    b_hh_p = jnp.zeros((1, 3 * E_pad), f32)
    for g in range(3):
        c0 = g * E_pad
        w_ih_p = w_ih_p.at[:I, c0:c0 + E].set(w_ih[g * E:(g + 1) * E, :].T)
        w_hh_p = w_hh_p.at[:E, c0:c0 + E].set(w_hh[g * E:(g + 1) * E, :].T)
        b_ih_p = b_ih_p.at[0, c0:c0 + E].set(b_ih[g * E:(g + 1) * E])
        b_hh_p = b_hh_p.at[0, c0:c0 + E].set(b_hh[g * E:(g + 1) * E])

    # --- pad features and fuse user/item along the batch-tile axis, then go
    #     time-major: (G*H, 2*b_tile, I_pad). Layout plumbing only (XLA). ---
    def pad_x(x):
        return jnp.zeros((B_pad, H, I_pad), f32).at[:B, :, :I].set(x)

    xu = pad_x(x_user).reshape(G, b_tile, H, I_pad)
    xi = pad_x(x_item).reshape(G, b_tile, H, I_pad)
    x_fused = jnp.concatenate([xu, xi], axis=1)            # (G, 2bt, H, I_pad)
    x_fused = jnp.transpose(x_fused, (0, 2, 1, 3))         # (G, H, 2bt, I_pad)
    x_fused = x_fused.reshape(G * H, 2 * b_tile, I_pad)

    # TODO(synk): for v6e/v7x, casting x_fused / w_ih_p / w_hh_p to bfloat16
    # (f32 accumulation kept via preferred_element_type) roughly doubles MXU
    # throughput; kept f32 here for bit-tight parity with the reference.

    const_spec = lambda shape: pl.BlockSpec(shape, lambda g: tuple(0 for _ in shape))
    u_out, i_out = pl.pallas_call(
        deepred_kernel,
        out_shape=(jax.ShapeDtypeStruct((B_pad, E_pad), f32),
                   jax.ShapeDtypeStruct((B_pad, E_pad), f32)),
        grid=(G,),
        in_specs=[
            pl.BlockSpec((H, 2 * b_tile, I_pad), lambda g: (g, 0, 0)),
            const_spec((I_pad, 3 * E_pad)),        # weights stay VMEM-resident
            const_spec((E_pad, 3 * E_pad)),
            const_spec((1, 3 * E_pad)),
            const_spec((1, 3 * E_pad)),
        ],
        out_specs=(pl.BlockSpec((b_tile, E_pad), lambda g: (g, 0)),
                   pl.BlockSpec((b_tile, E_pad), lambda g: (g, 0))),
        scratch_shapes=[pltpu.VMEM((H, 2 * b_tile, E_pad), f32)],
        compiler_params=pltpu.CompilerParams(
            dimension_semantics=("parallel",)),    # megacore sharding on v7x
    )(x_fused, w_ih_p, w_hh_p, b_ih_p, b_hh_p)

    return u_out[:B, :E], i_out[:B, :E]


# ----------------------------------------------------------------------------
# Glue (plain JAX): Encoder.extract_history_features
# ----------------------------------------------------------------------------
def extract_history_features(raw_features, embedding_table):
    """raw_features: (B, 2H) of interleaved (node_id, time_delta)."""
    B, k2 = raw_features.shape
    assert k2 % 2 == 0
    H = k2 // 2
    rf = raw_features.reshape(B, H, 2)
    node_ids = rf[:, :, 0].astype(jnp.int32) + 1     # padding id -1 -> row 0
    deltas = rf[:, :, 1]
    node_emb = embedding_table[node_ids]             # (B, H, E) gather
    # TODO(synk): dropout is identity here (eval mode); training dropout not modeled.
    return jnp.concatenate(
        [node_emb, deltas[:, :, None]], axis=-1).astype(jnp.float32)


# ----------------------------------------------------------------------------
# Pure-JAX reference (for correctness check)
# ----------------------------------------------------------------------------
def reference_forward(x_user, x_item, w_ih, w_hh, b_ih, b_hh):
    E = w_hh.shape[1]

    def gru_seq(x):
        B = x.shape[0]

        def step(h, x_t):
            gi = x_t @ w_ih.T + b_ih
            gh = h @ w_hh.T + b_hh
            i_r, i_z, i_n = gi[:, :E], gi[:, E:2 * E], gi[:, 2 * E:]
            h_r, h_z, h_n = gh[:, :E], gh[:, E:2 * E], gh[:, 2 * E:]
            r = jax.nn.sigmoid(i_r + h_r)
            z = jax.nn.sigmoid(i_z + h_z)
            n = jnp.tanh(i_n + r * h_n)
            h_new = (1.0 - z) * n + z * h
            return h_new, h_new

        h0 = jnp.zeros((B, E), jnp.float32)
        _, hs = lax.scan(step, h0, jnp.swapaxes(x, 0, 1))
        return jnp.swapaxes(hs, 0, 1)

    U = gru_seq(x_user)
    V = gru_seq(x_item)
    S = jnp.tanh(jnp.einsum('bhe,bke->bhk', U, V))
    u_att = jax.nn.softmax(jnp.mean(S, axis=-1), axis=1)
    i_att = jax.nn.softmax(jnp.mean(S, axis=-2), axis=1)
    return (jnp.sum(U * u_att[..., None], axis=1),
            jnp.sum(V * i_att[..., None], axis=1))


# ----------------------------------------------------------------------------
# Main
# ----------------------------------------------------------------------------
if __name__ == "__main__":
    B, H, E = 4, 8, 32           # batch, history_size, embedding_size
    nb_users, nb_items = 10, 12
    I = E + 1                    # GRU input size = embedding_size + 1

    key = jax.random.PRNGKey(0)
    ks = jax.random.split(key, 12)

    # deterministic parameter init (shapes from the PyTorch module's __init__)
    user_long_term = jax.random.normal(ks[0], (nb_users + 1, E), jnp.float32)
    item_long_term = jax.random.normal(ks[1], (nb_items + 1, E), jnp.float32)
    scale = 1.0 / np.sqrt(E)
    w_ih = jax.random.uniform(ks[2], (3 * E, I), jnp.float32, -scale, scale)
    w_hh = jax.random.uniform(ks[3], (3 * E, E), jnp.float32, -scale, scale)
    b_ih = jax.random.uniform(ks[4], (3 * E,), jnp.float32, -scale, scale)
    b_hh = jax.random.uniform(ks[5], (3 * E,), jnp.float32, -scale, scale)

    # interaction batch: user_ids / item_ids + raw history features
    user_ids = jax.random.randint(ks[6], (B,), 0, nb_users)
    item_ids = jax.random.randint(ks[7], (B,), 0, nb_items)

    # user history = past items (id in [-1, nb_items-1], -1 == padding),
    # item history = past users
    u_hist_ids = jax.random.randint(ks[8], (B, H), -1, nb_items).astype(jnp.float32)
    u_deltas = jax.random.uniform(ks[9], (B, H), jnp.float32)
    user_features = jnp.stack([u_hist_ids, u_deltas], axis=-1).reshape(B, 2 * H)

    i_hist_ids = jax.random.randint(ks[10], (B, H), -1, nb_users).astype(jnp.float32)
    i_deltas = jax.random.uniform(ks[11], (B, H), jnp.float32)
    item_features = jnp.stack([i_hist_ids, i_deltas], axis=-1).reshape(B, 2 * H)

    # Encoder feature extraction (glue): user history looks up item embeddings
    # and vice versa.
    x_user = extract_history_features(user_features, item_long_term)  # (B, H, E+1)
    x_item = extract_history_features(item_features, user_long_term)  # (B, H, E+1)

    # Pallas kernel: fused GRU encoding + alignment attention + pooled
    # short-term embeddings.
    u_short, i_short = deepred_edge_forward(
        x_user, x_item, w_ih, w_hh, b_ih, b_hh)
    u_short = jax.block_until_ready(u_short)
    i_short = jax.block_until_ready(i_short)

    # memory update (glue, mirrors self.user_short_term_embeddings[user_ids]=...)
    user_mem = jnp.zeros((nb_users, E), jnp.float32).at[user_ids].set(u_short)
    item_mem = jnp.zeros((nb_items, E), jnp.float32).at[item_ids].set(i_short)
    jax.block_until_ready((user_mem, item_mem))

    # correctness check against pure-JAX reference (tolerance loosened slightly
    # for the approximate EUP reciprocal in the in-kernel softmax).
    u_ref, i_ref = reference_forward(x_user, x_item, w_ih, w_hh, b_ih, b_hh)
    np.testing.assert_allclose(np.asarray(u_short), np.asarray(u_ref),
                               rtol=5e-3, atol=5e-3)
    np.testing.assert_allclose(np.asarray(i_short), np.asarray(i_ref),
                               rtol=5e-3, atol=5e-3)

    print("KERNEL_OK")
</pallas_src>

<mosaic_0001>
module attributes {stable_mosaic.version = 11 : i64} {
  func.func @deepred_kernel(%arg0: i32, %arg1: memref<8x16x128xf32, #tpu.memory_space<vmem>>, %arg2: memref<128x384xf32, #tpu.memory_space<vmem>>, %arg3: memref<128x384xf32, #tpu.memory_space<vmem>>, %arg4: memref<1x384xf32, #tpu.memory_space<vmem>>, %arg5: memref<1x384xf32, #tpu.memory_space<vmem>>, %arg6: memref<8x128xf32, #tpu.memory_space<vmem>>, %arg7: memref<8x128xf32, #tpu.memory_space<vmem>>, %arg8: memref<8x16x128xf32, #tpu.memory_space<vmem>>) attributes {dimension_semantics = [#tpu.dimension_semantics<parallel>], iteration_bounds = array<i64: 1>, scalar_prefetch = 0 : i64, scratch_operands = 1 : i64, tpu.core_type = #tpu.core_type<tc>, window_params = [{transform_indices = @transform_0, window_bounds = array<i64: 8, 16, 128>}, {pipeline_mode = #tpu.pipeline_mode<synchronous>, transform_indices = @transform_1, window_bounds = array<i64: 128, 384>}, {pipeline_mode = #tpu.pipeline_mode<synchronous>, transform_indices = @transform_2, window_bounds = array<i64: 128, 384>}, {pipeline_mode = #tpu.pipeline_mode<synchronous>, transform_indices = @transform_3, window_bounds = array<i64: 1, 384>}, {pipeline_mode = #tpu.pipeline_mode<synchronous>, transform_indices = @transform_4, window_bounds = array<i64: 1, 384>}, {transform_indices = @transform_5, window_bounds = array<i64: 8, 128>}, {transform_indices = @transform_6, window_bounds = array<i64: 8, 128>}]} {
    %c0 = arith.constant 0 : index
    %c0_0 = arith.constant 0 : index
    %0 = vector.load %arg3[%c0, %c0_0] : memref<128x384xf32, #tpu.memory_space<vmem>>, vector<128x384xf32>
    %c0_1 = arith.constant 0 : index
    %c0_2 = arith.constant 0 : index
    %1 = vector.load %arg5[%c0_1, %c0_2] : memref<1x384xf32, #tpu.memory_space<vmem>>, vector<1x384xf32>
    %2 = vector.shape_cast %1 : vector<1x384xf32> to vector<1x384xf32>
    %3 = vector.broadcast %2 : vector<1x384xf32> to vector<16x384xf32>
    %c0_3 = arith.constant 0 : index
    %c0_4 = arith.constant 0 : index
    %c0_5 = arith.constant 0 : index
    %4 = vector.load %arg1[%c0_3, %c0_4, %c0_5] : memref<8x16x128xf32, #tpu.memory_space<vmem>>, vector<8x16x128xf32>
    %5 = vector.shape_cast %4 : vector<8x16x128xf32> to vector<128x128xf32>
    %c0_6 = arith.constant 0 : index
    %c0_7 = arith.constant 0 : index
    %6 = vector.load %arg2[%c0_6, %c0_7] : memref<128x384xf32, #tpu.memory_space<vmem>>, vector<128x384xf32>
    %cst = arith.constant dense<0.000000e+00> : vector<128x384xf32>
    %7 = tpu.matmul %5, %6, %cst {dimension_numbers = #tpu.dot_dimension_numbers<[1], [0], [0], [1], [0, 0, 1, 1], [], []>} : vector<128x128xf32>, vector<128x384xf32>, vector<128x384xf32> -> vector<128x384xf32>
    %c0_8 = arith.constant 0 : index
    %c0_9 = arith.constant 0 : index
    %8 = vector.load %arg4[%c0_8, %c0_9] : memref<1x384xf32, #tpu.memory_space<vmem>>, vector<1x384xf32>
    %9 = vector.shape_cast %8 : vector<1x384xf32> to vector<1x384xf32>
    %10 = vector.broadcast %9 : vector<1x384xf32> to vector<128x384xf32>
    %11 = arith.addf %7, %10 : vector<128x384xf32>
    %12 = vector.shape_cast %11 : vector<128x384xf32> to vector<8x16x384xf32>
    %cst_10 = arith.constant 0.000000e+00 : f32
    %13 = vector.broadcast %cst_10 : f32 to vector<16x128xf32>
    %14 = vector.extract_strided_slice %12 {offsets = [0, 0, 0], sizes = [1, 16, 384], strides = [1, 1, 1]} : vector<8x16x384xf32> to vector<1x16x384xf32>
    %15 = vector.shape_cast %14 : vector<1x16x384xf32> to vector<16x384xf32>
    %cst_11 = arith.constant dense<0.000000e+00> : vector<16x384xf32>
    %16 = tpu.matmul %13, %0, %cst_11 {dimension_numbers = #tpu.dot_dimension_numbers<[1], [0], [0], [1], [0, 0, 1, 1], [], []>} : vector<16x128xf32>, vector<128x384xf32>, vector<16x384xf32> -> vector<16x384xf32>
    %17 = arith.addf %16, %3 : vector<16x384xf32>
    %18 = vector.extract_strided_slice %15 {offsets = [0, 0], sizes = [16, 128], strides = [1, 1]} : vector<16x384xf32> to vector<16x128xf32>
    %19 = vector.extract_strided_slice %17 {offsets = [0, 0], sizes = [16, 128], strides = [1, 1]} : vector<16x384xf32> to vector<16x128xf32>
    %20 = arith.addf %18, %19 : vector<16x128xf32>
    %21 = arith.negf %20 : vector<16x128xf32>
    %22 = math.exp %21 : vector<16x128xf32>
    %cst_12 = arith.constant 1.000000e+00 : f32
    %23 = vector.broadcast %cst_12 : f32 to vector<16x128xf32>
    %24 = arith.addf %23, %22 : vector<16x128xf32>
    %25 = arith.divf %23, %24 : vector<16x128xf32>
    %26 = vector.extract_strided_slice %15 {offsets = [0, 128], sizes = [16, 128], strides = [1, 1]} : vector<16x384xf32> to vector<16x128xf32>
    %27 = vector.extract_strided_slice %17 {offsets = [0, 128], sizes = [16, 128], strides = [1, 1]} : vector<16x384xf32> to vector<16x128xf32>
    %28 = arith.addf %26, %27 : vector<16x128xf32>
    %29 = arith.negf %28 : vector<16x128xf32>
    %30 = math.exp %29 : vector<16x128xf32>
    %cst_13 = arith.constant 1.000000e+00 : f32
    %31 = vector.broadcast %cst_13 : f32 to vector<16x128xf32>
    %32 = arith.addf %31, %30 : vector<16x128xf32>
    %33 = arith.divf %31, %32 : vector<16x128xf32>
    %34 = vector.extract_strided_slice %15 {offsets = [0, 256], sizes = [16, 128], strides = [1, 1]} : vector<16x384xf32> to vector<16x128xf32>
    %35 = vector.extract_strided_slice %17 {offsets = [0, 256], sizes = [16, 128], strides = [1, 1]} : vector<16x384xf32> to vector<16x128xf32>
    %36 = arith.mulf %25, %35 : vector<16x128xf32>
    %37 = arith.addf %34, %36 : vector<16x128xf32>
    %38 = math.tanh %37 : vector<16x128xf32>
    %cst_14 = arith.constant 1.000000e+00 : f32
    %39 = vector.broadcast %cst_14 : f32 to vector<16x128xf32>
    %40 = arith.subf %39, %33 : vector<16x128xf32>
    %41 = arith.mulf %40, %38 : vector<16x128xf32>
    %42 = arith.mulf %33, %13 : vector<16x128xf32>
    %43 = arith.addf %41, %42 : vector<16x128xf32>
    %c0_15 = arith.constant 0 : index
    %c0_16 = arith.constant 0 : index
    %c0_17 = arith.constant 0 : index
    %44 = vector.load %arg8[%c0_15, %c0_16, %c0_17] : memref<8x16x128xf32, #tpu.memory_space<vmem>>, vector<1x16x128xf32>
    %45 = vector.shape_cast %44 : vector<1x16x128xf32> to vector<16x128xf32>
    %46 = vector.shape_cast %43 : vector<16x128xf32> to vector<1x16x128xf32>
    tpu.vector_store %arg8[%c0_15, %c0_16, %c0_17], %46 {strides = array<i32>} : memref<8x16x128xf32, #tpu.memory_space<vmem>>, vector<1x16x128xf32>,
    %47 = vector.extract_strided_slice %12 {offsets = [1, 0, 0], sizes = [1, 16, 384], strides = [1, 1, 1]} : vector<8x16x384xf32> to vector<1x16x384xf32>
    %48 = vector.shape_cast %47 : vector<1x16x384xf32> to vector<16x384xf32>
    %cst_18 = arith.constant dense<0.000000e+00> : vector<16x384xf32>
    %49 = tpu.matmul %43, %0, %cst_18 {dimension_numbers = #tpu.dot_dimension_numbers<[1], [0], [0], [1], [0, 0, 1, 1], [], []>} : vector<16x128xf32>, vector<128x384xf32>, vector<16x384xf32> -> vector<16x384xf32>
    %50 = arith.addf %49, %3 : vector<16x384xf32>
    %51 = vector.extract_strided_slice %48 {offsets = [0, 0], sizes = [16, 128], strides = [1, 1]} : vector<16x384xf32> to vector<16x128xf32>
    %52 = vector.extract_strided_slice %50 {offsets = [0, 0], sizes = [16, 128], strides = [1, 1]} : vector<16x384xf32> to vector<16x128xf32>
    %53 = arith.addf %51, %52 : vector<16x128xf32>
    %54 = arith.negf %53 : vector<16x128xf32>
    %55 = math.exp %54 : vector<16x128xf32>
    %cst_19 = arith.constant 1.000000e+00 : f32
    %56 = vector.broadcast %cst_19 : f32 to vector<16x128xf32>
    %57 = arith.addf %56, %55 : vector<16x128xf32>
    %58 = arith.divf %56, %57 : vector<16x128xf32>
    %59 = vector.extract_strided_slice %48 {offsets = [0, 128], sizes = [16, 128], strides = [1, 1]} : vector<16x384xf32> to vector<16x128xf32>
    %60 = vector.extract_strided_slice %50 {offsets = [0, 128], sizes = [16, 128], strides = [1, 1]} : vector<16x384xf32> to vector<16x128xf32>
    %61 = arith.addf %59, %60 : vector<16x128xf32>
    %62 = arith.negf %61 : vector<16x128xf32>
    %63 = math.exp %62 : vector<16x128xf32>
    %cst_20 = arith.constant 1.000000e+00 : f32
    %64 = vector.broadcast %cst_20 : f32 to vector<16x128xf32>
    %65 = arith.addf %64, %63 : vector<16x128xf32>
    %66 = arith.divf %64, %65 : vector<16x128xf32>
    %67 = vector.extract_strided_slice %48 {offsets = [0, 256], sizes = [16, 128], strides = [1, 1]} : vector<16x384xf32> to vector<16x128xf32>
    %68 = vector.extract_strided_slice %50 {offsets = [0, 256], sizes = [16, 128], strides = [1, 1]} : vector<16x384xf32> to vector<16x128xf32>
    %69 = arith.mulf %58, %68 : vector<16x128xf32>
    %70 = arith.addf %67, %69 : vector<16x128xf32>
    %71 = math.tanh %70 : vector<16x128xf32>
    %cst_21 = arith.constant 1.000000e+00 : f32
    %72 = vector.broadcast %cst_21 : f32 to vector<16x128xf32>
    %73 = arith.subf %72, %66 : vector<16x128xf32>
    %74 = arith.mulf %73, %71 : vector<16x128xf32>
    %75 = arith.mulf %66, %43 : vector<16x128xf32>
    %76 = arith.addf %74, %75 : vector<16x128xf32>
    %c1 = arith.constant 1 : index
    %c0_22 = arith.constant 0 : index
    %c0_23 = arith.constant 0 : index
    %77 = vector.load %arg8[%c1, %c0_22, %c0_23] : memref<8x16x128xf32, #tpu.memory_space<vmem>>, vector<1x16x128xf32>
    %78 = vector.shape_cast %77 : vector<1x16x128xf32> to vector<16x128xf32>
    %79 = vector.shape_cast %76 : vector<16x128xf32> to vector<1x16x128xf32>
    tpu.vector_store %arg8[%c1, %c0_22, %c0_23], %79 {strides = array<i32>} : memref<8x16x128xf32, #tpu.memory_space<vmem>>, vector<1x16x128xf32>,
    %80 = vector.extract_strided_slice %12 {offsets = [2, 0, 0], sizes = [1, 16, 384], strides = [1, 1, 1]} : vector<8x16x384xf32> to vector<1x16x384xf32>
    %81 = vector.shape_cast %80 : vector<1x16x384xf32> to vector<16x384xf32>
    %cst_24 = arith.constant dense<0.000000e+00> : vector<16x384xf32>
    %82 = tpu.matmul %76, %0, %cst_24 {dimension_numbers = #tpu.dot_dimension_numbers<[1], [0], [0], [1], [0, 0, 1, 1], [], []>} : vector<16x128xf32>, vector<128x384xf32>, vector<16x384xf32> -> vector<16x384xf32>
    %83 = arith.addf %82, %3 : vector<16x384xf32>
    %84 = vector.extract_strided_slice %81 {offsets = [0, 0], sizes = [16, 128], strides = [1, 1]} : vector<16x384xf32> to vector<16x128xf32>
    %85 = vector.extract_strided_slice %83 {offsets = [0, 0], sizes = [16, 128], strides = [1, 1]} : vector<16x384xf32> to vector<16x128xf32>
    %86 = arith.addf %84, %85 : vector<16x128xf32>
    %87 = arith.negf %86 : vector<16x128xf32>
    %88 = math.exp %87 : vector<16x128xf32>
    %cst_25 = arith.constant 1.000000e+00 : f32
    %89 = vector.broadcast %cst_25 : f32 to vector<16x128xf32>
    %90 = arith.addf %89, %88 : vector<16x128xf32>
    %91 = arith.divf %89, %90 : vector<16x128xf32>
    %92 = vector.extract_strided_slice %81 {offsets = [0, 128], sizes = [16, 128], strides = [1, 1]} : vector<16x384xf32> to vector<16x128xf32>
    %93 = vector.extract_strided_slice %83 {offsets = [0, 128], sizes = [16, 128], strides = [1, 1]} : vector<16x384xf32> to vector<16x128xf32>
    %94 = arith.addf %92, %93 : vector<16x128xf32>
    %95 = arith.negf %94 : vector<16x128xf32>
    %96 = math.exp %95 : vector<16x128xf32>
    %cst_26 = arith.constant 1.000000e+00 : f32
    %97 = vector.broadcast %cst_26 : f32 to vector<16x128xf32>
    %98 = arith.addf %97, %96 : vector<16x128xf32>
    %99 = arith.divf %97, %98 : vector<16x128xf32>
    %100 = vector.extract_strided_slice %81 {offsets = [0, 256], sizes = [16, 128], strides = [1, 1]} : vector<16x384xf32> to vector<16x128xf32>
    %101 = vector.extract_strided_slice %83 {offsets = [0, 256], sizes = [16, 128], strides = [1, 1]} : vector<16x384xf32> to vector<16x128xf32>
    %102 = arith.mulf %91, %101 : vector<16x128xf32>
    %103 = arith.addf %100, %102 : vector<16x128xf32>
    %104 = math.tanh %103 : vector<16x128xf32>
    %cst_27 = arith.constant 1.000000e+00 : f32
    %105 = vector.broadcast %cst_27 : f32 to vector<16x128xf32>
    %106 = arith.subf %105, %99 : vector<16x128xf32>
    %107 = arith.mulf %106, %104 : vector<16x128xf32>
    %108 = arith.mulf %99, %76 : vector<16x128xf32>
    %109 = arith.addf %107, %108 : vector<16x128xf32>
    %c2 = arith.constant 2 : index
    %c0_28 = arith.constant 0 : index
    %c0_29 = arith.constant 0 : index
    %110 = vector.load %arg8[%c2, %c0_28, %c0_29] : memref<8x16x128xf32, #tpu.memory_space<vmem>>, vector<1x16x128xf32>
    %111 = vector.shape_cast %110 : vector<1x16x128xf32> to vector<16x128xf32>
    %112 = vector.shape_cast %109 : vector<16x128xf32> to vector<1x16x128xf32>
    tpu.vector_store %arg8[%c2, %c0_28, %c0_29], %112 {strides = array<i32>} : memref<8x16x128xf32, #tpu.memory_space<vmem>>, vector<1x16x128xf32>,
    %113 = vector.extract_strided_slice %12 {offsets = [3, 0, 0], sizes = [1, 16, 384], strides = [1, 1, 1]} : vector<8x16x384xf32> to vector<1x16x384xf32>
    %114 = vector.shape_cast %113 : vector<1x16x384xf32> to vector<16x384xf32>
    %cst_30 = arith.constant dense<0.000000e+00> : vector<16x384xf32>
    %115 = tpu.matmul %109, %0, %cst_30 {dimension_numbers = #tpu.dot_dimension_numbers<[1], [0], [0], [1], [0, 0, 1, 1], [], []>} : vector<16x128xf32>, vector<128x384xf32>, vector<16x384xf32> -> vector<16x384xf32>
    %116 = arith.addf %115, %3 : vector<16x384xf32>
    %117 = vector.extract_strided_slice %114 {offsets = [0, 0], sizes = [16, 128], strides = [1, 1]} : vector<16x384xf32> to vector<16x128xf32>
    %118 = vector.extract_strided_slice %116 {offsets = [0, 0], sizes = [16, 128], strides = [1, 1]} : vector<16x384xf32> to vector<16x128xf32>
    %119 = arith.addf %117, %118 : vector<16x128xf32>
    %120 = arith.negf %119 : vector<16x128xf32>
    %121 = math.exp %120 : vector<16x128xf32>
    %cst_31 = arith.constant 1.000000e+00 : f32
    %122 = vector.broadcast %cst_31 : f32 to vector<16x128xf32>
    %123 = arith.addf %122, %121 : vector<16x128xf32>
    %124 = arith.divf %122, %123 : vector<16x128xf32>
    %125 = vector.extract_strided_slice %114 {offsets = [0, 128], sizes = [16, 128], strides = [1, 1]} : vector<16x384xf32> to vector<16x128xf32>
    %126 = vector.extract_strided_slice %116 {offsets = [0, 128], sizes = [16, 128], strides = [1, 1]} : vector<16x384xf32> to vector<16x128xf32>
    %127 = arith.addf %125, %126 : vector<16x128xf32>
    %128 = arith.negf %127 : vector<16x128xf32>
    %129 = math.exp %128 : vector<16x128xf32>
    %cst_32 = arith.constant 1.000000e+00 : f32
    %130 = vector.broadcast %cst_32 : f32 to vector<16x128xf32>
    %131 = arith.addf %130, %129 : vector<16x128xf32>
    %132 = arith.divf %130, %131 : vector<16x128xf32>
    %133 = vector.extract_strided_slice %114 {offsets = [0, 256], sizes = [16, 128], strides = [1, 1]} : vector<16x384xf32> to vector<16x128xf32>
    %134 = vector.extract_strided_slice %116 {offsets = [0, 256], sizes = [16, 128], strides = [1, 1]} : vector<16x384xf32> to vector<16x128xf32>
    %135 = arith.mulf %124, %134 : vector<16x128xf32>
    %136 = arith.addf %133, %135 : vector<16x128xf32>
    %137 = math.tanh %136 : vector<16x128xf32>
    %cst_33 = arith.constant 1.000000e+00 : f32
    %138 = vector.broadcast %cst_33 : f32 to vector<16x128xf32>
    %139 = arith.subf %138, %132 : vector<16x128xf32>
    %140 = arith.mulf %139, %137 : vector<16x128xf32>
    %141 = arith.mulf %132, %109 : vector<16x128xf32>
    %142 = arith.addf %140, %141 : vector<16x128xf32>
    %c3 = arith.constant 3 : index
    %c0_34 = arith.constant 0 : index
    %c0_35 = arith.constant 0 : index
    %143 = vector.load %arg8[%c3, %c0_34, %c0_35] : memref<8x16x128xf32, #tpu.memory_space<vmem>>, vector<1x16x128xf32>
    %144 = vector.shape_cast %143 : vector<1x16x128xf32> to vector<16x128xf32>
    %145 = vector.shape_cast %142 : vector<16x128xf32> to vector<1x16x128xf32>
    tpu.vector_store %arg8[%c3, %c0_34, %c0_35], %145 {strides = array<i32>} : memref<8x16x128xf32, #tpu.memory_space<vmem>>, vector<1x16x128xf32>,
    %146 = vector.extract_strided_slice %12 {offsets = [4, 0, 0], sizes = [1, 16, 384], strides = [1, 1, 1]} : vector<8x16x384xf32> to vector<1x16x384xf32>
    %147 = vector.shape_cast %146 : vector<1x16x384xf32> to vector<16x384xf32>
    %cst_36 = arith.constant dense<0.000000e+00> : vector<16x384xf32>
    %148 = tpu.matmul %142, %0, %cst_36 {dimension_numbers = #tpu.dot_dimension_numbers<[1], [0], [0], [1], [0, 0, 1, 1], [], []>} : vector<16x128xf32>, vector<128x384xf32>, vector<16x384xf32> -> vector<16x384xf32>
    %149 = arith.addf %148, %3 : vector<16x384xf32>
    %150 = vector.extract_strided_slice %147 {offsets = [0, 0], sizes = [16, 128], strides = [1, 1]} : vector<16x384xf32> to vector<16x128xf32>
    %151 = vector.extract_strided_slice %149 {offsets = [0, 0], sizes = [16, 128], strides = [1, 1]} : vector<16x384xf32> to vector<16x128xf32>
    %152 = arith.addf %150, %151 : vector<16x128xf32>
    %153 = arith.negf %152 : vector<16x128xf32>
    %154 = math.exp %153 : vector<16x128xf32>
    %cst_37 = arith.constant 1.000000e+00 : f32
    %155 = vector.broadcast %cst_37 : f32 to vector<16x128xf32>
    %156 = arith.addf %155, %154 : vector<16x128xf32>
    %157 = arith.divf %155, %156 : vector<16x128xf32>
    %158 = vector.extract_strided_slice %147 {offsets = [0, 128], sizes = [16, 128], strides = [1, 1]} : vector<16x384xf32> to vector<16x128xf32>
    %159 = vector.extract_strided_slice %149 {offsets = [0, 128], sizes = [16, 128], strides = [1, 1]} : vector<16x384xf32> to vector<16x128xf32>
    %160 = arith.addf %158, %159 : vector<16x128xf32>
    %161 = arith.negf %160 : vector<16x128xf32>
    %162 = math.exp %161 : vector<16x128xf32>
    %cst_38 = arith.constant 1.000000e+00 : f32
    %163 = vector.broadcast %cst_38 : f32 to vector<16x128xf32>
    %164 = arith.addf %163, %162 : vector<16x128xf32>
    %165 = arith.divf %163, %164 : vector<16x128xf32>
    %166 = vector.extract_strided_slice %147 {offsets = [0, 256], sizes = [16, 128], strides = [1, 1]} : vector<16x384xf32> to vector<16x128xf32>
    %167 = vector.extract_strided_slice %149 {offsets = [0, 256], sizes = [16, 128], strides = [1, 1]} : vector<16x384xf32> to vector<16x128xf32>
    %168 = arith.mulf %157, %167 : vector<16x128xf32>
    %169 = arith.addf %166, %168 : vector<16x128xf32>
    %170 = math.tanh %169 : vector<16x128xf32>
    %cst_39 = arith.constant 1.000000e+00 : f32
    %171 = vector.broadcast %cst_39 : f32 to vector<16x128xf32>
    %172 = arith.subf %171, %165 : vector<16x128xf32>
    %173 = arith.mulf %172, %170 : vector<16x128xf32>
    %174 = arith.mulf %165, %142 : vector<16x128xf32>
    %175 = arith.addf %173, %174 : vector<16x128xf32>
    %c4 = arith.constant 4 : index
    %c0_40 = arith.constant 0 : index
    %c0_41 = arith.constant 0 : index
    %176 = vector.load %arg8[%c4, %c0_40, %c0_41] : memref<8x16x128xf32, #tpu.memory_space<vmem>>, vector<1x16x128xf32>
    %177 = vector.shape_cast %176 : vector<1x16x128xf32> to vector<16x128xf32>
    %178 = vector.shape_cast %175 : vector<16x128xf32> to vector<1x16x128xf32>
    tpu.vector_store %arg8[%c4, %c0_40, %c0_41], %178 {strides = array<i32>} : memref<8x16x128xf32, #tpu.memory_space<vmem>>, vector<1x16x128xf32>,
    %179 = vector.extract_strided_slice %12 {offsets = [5, 0, 0], sizes = [1, 16, 384], strides = [1, 1, 1]} : vector<8x16x384xf32> to vector<1x16x384xf32>
    %180 = vector.shape_cast %179 : vector<1x16x384xf32> to vector<16x384xf32>
    %cst_42 = arith.constant dense<0.000000e+00> : vector<16x384xf32>
    %181 = tpu.matmul %175, %0, %cst_42 {dimension_numbers = #tpu.dot_dimension_numbers<[1], [0], [0], [1], [0, 0, 1, 1], [], []>} : vector<16x128xf32>, vector<128x384xf32>, vector<16x384xf32> -> vector<16x384xf32>
    %182 = arith.addf %181, %3 : vector<16x384xf32>
    %183 = vector.extract_strided_slice %180 {offsets = [0, 0], sizes = [16, 128], strides = [1, 1]} : vector<16x384xf32> to vector<16x128xf32>
    %184 = vector.extract_strided_slice %182 {offsets = [0, 0], sizes = [16, 128], strides = [1, 1]} : vector<16x384xf32> to vector<16x128xf32>
    %185 = arith.addf %183, %184 : vector<16x128xf32>
    %186 = arith.negf %185 : vector<16x128xf32>
    %187 = math.exp %186 : vector<16x128xf32>
    %cst_43 = arith.constant 1.000000e+00 : f32
    %188 = vector.broadcast %cst_43 : f32 to vector<16x128xf32>
    %189 = arith.addf %188, %187 : vector<16x128xf32>
    %190 = arith.divf %188, %189 : vector<16x128xf32>
    %191 = vector.extract_strided_slice %180 {offsets = [0, 128], sizes = [16, 128], strides = [1, 1]} : vector<16x384xf32> to vector<16x128xf32>
    %192 = vector.extract_strided_slice %182 {offsets = [0, 128], sizes = [16, 128], strides = [1, 1]} : vector<16x384xf32> to vector<16x128xf32>
    %193 = arith.addf %191, %192 : vector<16x128xf32>
    %194 = arith.negf %193 : vector<16x128xf32>
    %195 = math.exp %194 : vector<16x128xf32>
    %cst_44 = arith.constant 1.000000e+00 : f32
    %196 = vector.broadcast %cst_44 : f32 to vector<16x128xf32>
    %197 = arith.addf %196, %195 : vector<16x128xf32>
    %198 = arith.divf %196, %197 : vector<16x128xf32>
    %199 = vector.extract_strided_slice %180 {offsets = [0, 256], sizes = [16, 128], strides = [1, 1]} : vector<16x384xf32> to vector<16x128xf32>
    %200 = vector.extract_strided_slice %182 {offsets = [0, 256], sizes = [16, 128], strides = [1, 1]} : vector<16x384xf32> to vector<16x128xf32>
    %201 = arith.mulf %190, %200 : vector<16x128xf32>
    %202 = arith.addf %199, %201 : vector<16x128xf32>
    %203 = math.tanh %202 : vector<16x128xf32>
    %cst_45 = arith.constant 1.000000e+00 : f32
    %204 = vector.broadcast %cst_45 : f32 to vector<16x128xf32>
    %205 = arith.subf %204, %198 : vector<16x128xf32>
    %206 = arith.mulf %205, %203 : vector<16x128xf32>
    %207 = arith.mulf %198, %175 : vector<16x128xf32>
    %208 = arith.addf %206, %207 : vector<16x128xf32>
    %c5 = arith.constant 5 : index
    %c0_46 = arith.constant 0 : index
    %c0_47 = arith.constant 0 : index
    %209 = vector.load %arg8[%c5, %c0_46, %c0_47] : memref<8x16x128xf32, #tpu.memory_space<vmem>>, vector<1x16x128xf32>
    %210 = vector.shape_cast %209 : vector<1x16x128xf32> to vector<16x128xf32>
    %211 = vector.shape_cast %208 : vector<16x128xf32> to vector<1x16x128xf32>
    tpu.vector_store %arg8[%c5, %c0_46, %c0_47], %211 {strides = array<i32>} : memref<8x16x128xf32, #tpu.memory_space<vmem>>, vector<1x16x128xf32>,
    %212 = vector.extract_strided_slice %12 {offsets = [6, 0, 0], sizes = [1, 16, 384], strides = [1, 1, 1]} : vector<8x16x384xf32> to vector<1x16x384xf32>
    %213 = vector.shape_cast %212 : vector<1x16x384xf32> to vector<16x384xf32>
    %cst_48 = arith.constant dense<0.000000e+00> : vector<16x384xf32>
    %214 = tpu.matmul %208, %0, %cst_48 {dimension_numbers = #tpu.dot_dimension_numbers<[1], [0], [0], [1], [0, 0, 1, 1], [], []>} : vector<16x128xf32>, vector<128x384xf32>, vector<16x384xf32> -> vector<16x384xf32>
    %215 = arith.addf %214, %3 : vector<16x384xf32>
    %216 = vector.extract_strided_slice %213 {offsets = [0, 0], sizes = [16, 128], strides = [1, 1]} : vector<16x384xf32> to vector<16x128xf32>
    %217 = vector.extract_strided_slice %215 {offsets = [0, 0], sizes = [16, 128], strides = [1, 1]} : vector<16x384xf32> to vector<16x128xf32>
    %218 = arith.addf %216, %217 : vector<16x128xf32>
    %219 = arith.negf %218 : vector<16x128xf32>
    %220 = math.exp %219 : vector<16x128xf32>
    %cst_49 = arith.constant 1.000000e+00 : f32
    %221 = vector.broadcast %cst_49 : f32 to vector<16x128xf32>
    %222 = arith.addf %221, %220 : vector<16x128xf32>
    %223 = arith.divf %221, %222 : vector<16x128xf32>
    %224 = vector.extract_strided_slice %213 {offsets = [0, 128], sizes = [16, 128], strides = [1, 1]} : vector<16x384xf32> to vector<16x128xf32>
    %225 = vector.extract_strided_slice %215 {offsets = [0, 128], sizes = [16, 128], strides = [1, 1]} : vector<16x384xf32> to vector<16x128xf32>
    %226 = arith.addf %224, %225 : vector<16x128xf32>
    %227 = arith.negf %226 : vector<16x128xf32>
    %228 = math.exp %227 : vector<16x128xf32>
    %cst_50 = arith.constant 1.000000e+00 : f32
    %229 = vector.broadcast %cst_50 : f32 to vector<16x128xf32>
    %230 = arith.addf %229, %228 : vector<16x128xf32>
    %231 = arith.divf %229, %230 : vector<16x128xf32>
    %232 = vector.extract_strided_slice %213 {offsets = [0, 256], sizes = [16, 128], strides = [1, 1]} : vector<16x384xf32> to vector<16x128xf32>
    %233 = vector.extract_strided_slice %215 {offsets = [0, 256], sizes = [16, 128], strides = [1, 1]} : vector<16x384xf32> to vector<16x128xf32>
    %234 = arith.mulf %223, %233 : vector<16x128xf32>
    %235 = arith.addf %232, %234 : vector<16x128xf32>
    %236 = math.tanh %235 : vector<16x128xf32>
    %cst_51 = arith.constant 1.000000e+00 : f32
    %237 = vector.broadcast %cst_51 : f32 to vector<16x128xf32>
    %238 = arith.subf %237, %231 : vector<16x128xf32>
    %239 = arith.mulf %238, %236 : vector<16x128xf32>
    %240 = arith.mulf %231, %208 : vector<16x128xf32>
    %241 = arith.addf %239, %240 : vector<16x128xf32>
    %c6 = arith.constant 6 : index
    %c0_52 = arith.constant 0 : index
    %c0_53 = arith.constant 0 : index
    %242 = vector.load %arg8[%c6, %c0_52, %c0_53] : memref<8x16x128xf32, #tpu.memory_space<vmem>>, vector<1x16x128xf32>
    %243 = vector.shape_cast %242 : vector<1x16x128xf32> to vector<16x128xf32>
    %244 = vector.shape_cast %241 : vector<16x128xf32> to vector<1x16x128xf32>
    tpu.vector_store %arg8[%c6, %c0_52, %c0_53], %244 {strides = array<i32>} : memref<8x16x128xf32, #tpu.memory_space<vmem>>, vector<1x16x128xf32>,
    %245 = vector.extract_strided_slice %12 {offsets = [7, 0, 0], sizes = [1, 16, 384], strides = [1, 1, 1]} : vector<8x16x384xf32> to vector<1x16x384xf32>
    %246 = vector.shape_cast %245 : vector<1x16x384xf32> to vector<16x384xf32>
    %cst_54 = arith.constant dense<0.000000e+00> : vector<16x384xf32>
    %247 = tpu.matmul %241, %0, %cst_54 {dimension_numbers = #tpu.dot_dimension_numbers<[1], [0], [0], [1], [0, 0, 1, 1], [], []>} : vector<16x128xf32>, vector<128x384xf32>, vector<16x384xf32> -> vector<16x384xf32>
    %248 = arith.addf %247, %3 : vector<16x384xf32>
    %249 = vector.extract_strided_slice %246 {offsets = [0, 0], sizes = [16, 128], strides = [1, 1]} : vector<16x384xf32> to vector<16x128xf32>
    %250 = vector.extract_strided_slice %248 {offsets = [0, 0], sizes = [16, 128], strides = [1, 1]} : vector<16x384xf32> to vector<16x128xf32>
    %251 = arith.addf %249, %250 : vector<16x128xf32>
    %252 = arith.negf %251 : vector<16x128xf32>
    %253 = math.exp %252 : vector<16x128xf32>
    %cst_55 = arith.constant 1.000000e+00 : f32
    %254 = vector.broadcast %cst_55 : f32 to vector<16x128xf32>
    %255 = arith.addf %254, %253 : vector<16x128xf32>
    %256 = arith.divf %254, %255 : vector<16x128xf32>
    %257 = vector.extract_strided_slice %246 {offsets = [0, 128], sizes = [16, 128], strides = [1, 1]} : vector<16x384xf32> to vector<16x128xf32>
    %258 = vector.extract_strided_slice %248 {offsets = [0, 128], sizes = [16, 128], strides = [1, 1]} : vector<16x384xf32> to vector<16x128xf32>
    %259 = arith.addf %257, %258 : vector<16x128xf32>
    %260 = arith.negf %259 : vector<16x128xf32>
    %261 = math.exp %260 : vector<16x128xf32>
    %cst_56 = arith.constant 1.000000e+00 : f32
    %262 = vector.broadcast %cst_56 : f32 to vector<16x128xf32>
    %263 = arith.addf %262, %261 : vector<16x128xf32>
    %264 = arith.divf %262, %263 : vector<16x128xf32>
    %265 = vector.extract_strided_slice %246 {offsets = [0, 256], sizes = [16, 128], strides = [1, 1]} : vector<16x384xf32> to vector<16x128xf32>
    %266 = vector.extract_strided_slice %248 {offsets = [0, 256], sizes = [16, 128], strides = [1, 1]} : vector<16x384xf32> to vector<16x128xf32>
    %267 = arith.mulf %256, %266 : vector<16x128xf32>
    %268 = arith.addf %265, %267 : vector<16x128xf32>
    %269 = math.tanh %268 : vector<16x128xf32>
    %cst_57 = arith.constant 1.000000e+00 : f32
    %270 = vector.broadcast %cst_57 : f32 to vector<16x128xf32>
    %271 = arith.subf %270, %264 : vector<16x128xf32>
    %272 = arith.mulf %271, %269 : vector<16x128xf32>
    %273 = arith.mulf %264, %241 : vector<16x128xf32>
    %274 = arith.addf %272, %273 : vector<16x128xf32>
    %c7 = arith.constant 7 : index
    %c0_58 = arith.constant 0 : index
    %c0_59 = arith.constant 0 : index
    %275 = vector.load %arg8[%c7, %c0_58, %c0_59] : memref<8x16x128xf32, #tpu.memory_space<vmem>>, vector<1x16x128xf32>
    %276 = vector.shape_cast %275 : vector<1x16x128xf32> to vector<16x128xf32>
    %277 = vector.shape_cast %274 : vector<16x128xf32> to vector<1x16x128xf32>
    tpu.vector_store %arg8[%c7, %c0_58, %c0_59], %277 {strides = array<i32>} : memref<8x16x128xf32, #tpu.memory_space<vmem>>, vector<1x16x128xf32>,
    %c0_60 = arith.constant 0 : index
    %c0_61 = arith.constant 0 : index
    %c0_62 = arith.constant 0 : index
    %278 = vector.load %arg8[%c0_60, %c0_61, %c0_62] : memref<8x16x128xf32, #tpu.memory_space<vmem>>, vector<8x16x128xf32>
    %279 = vector.extract_strided_slice %278 {offsets = [0, 0, 0], sizes = [8, 8, 128], strides = [1, 1, 1]} : vector<8x16x128xf32> to vector<8x8x128xf32>
    %280 = tpu.transpose %279, [1, 0, 2] : vector<8x8x128xf32> -> vector<8x8x128xf32>
    %281 = vector.extract_strided_slice %278 {offsets = [0, 8, 0], sizes = [8, 8, 128], strides = [1, 1, 1]} : vector<8x16x128xf32> to vector<8x8x128xf32>
    %282 = tpu.transpose %281, [1, 0, 2] : vector<8x8x128xf32> -> vector<8x8x128xf32>
    "tpu.trace_start"() <{level = 10 : i32, message = "bhe,bke->bhk"}> : () -> ()
    %cst_63 = arith.constant dense<0.000000e+00> : vector<8x8x8xf32>
    %283 = tpu.matmul %280, %282, %cst_63 {dimension_numbers = #tpu.dot_dimension_numbers<[2], [2], [1], [1], [0, 0, 0, 1, 1, 1], [0], [0]>} : vector<8x8x128xf32>, vector<8x8x128xf32>, vector<8x8x8xf32> -> vector<8x8x8xf32>
    "tpu.trace_stop"() : () -> ()
    %284 = math.tanh %283 : vector<8x8x8xf32>
    %cst_64 = arith.constant dense<0.000000e+00> : vector<8x8xf32>
    %285 = vector.multi_reduction <add>, %284, %cst_64 [2] : vector<8x8x8xf32> to vector<8x8xf32>
    %cst_65 = arith.constant 1.250000e-01 : f32
    %286 = vector.broadcast %cst_65 : f32 to vector<8x8xf32>
    %287 = arith.mulf %285, %286 : vector<8x8xf32>
    %cst_66 = arith.constant dense<0xFF800000> : vector<8xf32>
    %288 = vector.multi_reduction <maximumf>, %287, %cst_66 [1] : vector<8x8xf32> to vector<8xf32>
    %289 = vector.shape_cast %288 : vector<8xf32> to vector<8x1xf32>
    %290 = vector.broadcast %289 : vector<8x1xf32> to vector<8x8xf32>
    %291 = arith.subf %287, %290 : vector<8x8xf32>
    %292 = math.exp %291 : vector<8x8xf32>
    %cst_67 = arith.constant dense<0.000000e+00> : vector<8xf32>
    %293 = vector.multi_reduction <add>, %292, %cst_67 [1] : vector<8x8xf32> to vector<8xf32>
    %294 = vector.shape_cast %293 : vector<8xf32> to vector<8x1xf32>
    %295 = tpu.reciprocal %294 {approx = true} : vector<8x1xf32> -> vector<8x1xf32>
    %296 = vector.broadcast %295 : vector<8x1xf32> to vector<8x8xf32>
    %297 = arith.mulf %292, %296 : vector<8x8xf32>
    %cst_68 = arith.constant dense<0.000000e+00> : vector<8x8xf32>
    %298 = vector.multi_reduction <add>, %284, %cst_68 [1] : vector<8x8x8xf32> to vector<8x8xf32>
    %cst_69 = arith.constant 1.250000e-01 : f32
    %299 = vector.broadcast %cst_69 : f32 to vector<8x8xf32>
    %300 = arith.mulf %298, %299 : vector<8x8xf32>
    %cst_70 = arith.constant dense<0xFF800000> : vector<8xf32>
    %301 = vector.multi_reduction <maximumf>, %300, %cst_70 [1] : vector<8x8xf32> to vector<8xf32>
    %302 = vector.shape_cast %301 : vector<8xf32> to vector<8x1xf32>
    %303 = vector.broadcast %302 : vector<8x1xf32> to vector<8x8xf32>
    %304 = arith.subf %300, %303 : vector<8x8xf32>
    %305 = math.exp %304 : vector<8x8xf32>
    %cst_71 = arith.constant dense<0.000000e+00> : vector<8xf32>
    %306 = vector.multi_reduction <add>, %305, %cst_71 [1] : vector<8x8xf32> to vector<8xf32>
    %307 = vector.shape_cast %306 : vector<8xf32> to vector<8x1xf32>
    %308 = tpu.reciprocal %307 {approx = true} : vector<8x1xf32> -> vector<8x1xf32>
    %309 = vector.broadcast %308 : vector<8x1xf32> to vector<8x8xf32>
    %310 = arith.mulf %305, %309 : vector<8x8xf32>
    %311 = vector.shape_cast %297 : vector<8x8xf32> to vector<8x8x1xf32>
    %312 = vector.broadcast %311 : vector<8x8x1xf32> to vector<8x8x128xf32>
    %313 = arith.mulf %280, %312 : vector<8x8x128xf32>
    %cst_72 = arith.constant dense<0.000000e+00> : vector<8x128xf32>
    %314 = vector.multi_reduction <add>, %313, %cst_72 [1] : vector<8x8x128xf32> to vector<8x128xf32>
    %c0_73 = arith.constant 0 : index
    %c0_74 = arith.constant 0 : index
    %315 = vector.load %arg6[%c0_73, %c0_74] : memref<8x128xf32, #tpu.memory_space<vmem>>, vector<8x128xf32>
    tpu.vector_store %arg6[%c0_73, %c0_74], %314 {strides = array<i32>} : memref<8x128xf32, #tpu.memory_space<vmem>>, vector<8x128xf32>,
    %316 = vector.shape_cast %310 : vector<8x8xf32> to vector<8x8x1xf32>
    %317 = vector.broadcast %316 : vector<8x8x1xf32> to vector<8x8x128xf32>
    %318 = arith.mulf %282, %317 : vector<8x8x128xf32>
    %cst_75 = arith.constant dense<0.000000e+00> : vector<8x128xf32>
    %319 = vector.multi_reduction <add>, %318, %cst_75 [1] : vector<8x8x128xf32> to vector<8x128xf32>
    %c0_76 = arith.constant 0 : index
    %c0_77 = arith.constant 0 : index
    %320 = vector.load %arg7[%c0_76, %c0_77] : memref<8x128xf32, #tpu.memory_space<vmem>>, vector<8x128xf32>
    tpu.vector_store %arg7[%c0_76, %c0_77], %319 {strides = array<i32>} : memref<8x128xf32, #tpu.memory_space<vmem>>, vector<8x128xf32>,
    return
  }
  func.func @transform_0(%arg0: i32) -> (i32, i32, i32) {
    %c0_i32 = arith.constant 0 : i32
    %c0_i32_0 = arith.constant 0 : i32
    %c0_i32_1 = arith.constant 0 : i32
    return %arg0, %c0_i32, %c0_i32_0 : i32, i32, i32
  }
  func.func @transform_1(%arg0: i32) -> (i32, i32) {
    %c0_i32 = arith.constant 0 : i32
    %c0_i32_0 = arith.constant 0 : i32
    %c0_i32_1 = arith.constant 0 : i32
    return %c0_i32, %c0_i32_0 : i32, i32
  }
  func.func @transform_2(%arg0: i32) -> (i32, i32) {
    %c0_i32 = arith.constant 0 : i32
    %c0_i32_0 = arith.constant 0 : i32
    %c0_i32_1 = arith.constant 0 : i32
    return %c0_i32, %c0_i32_0 : i32, i32
  }
  func.func @transform_3(%arg0: i32) -> (i32, i32) {
    %c0_i32 = arith.constant 0 : i32
    %c0_i32_0 = arith.constant 0 : i32
    %c0_i32_1 = arith.constant 0 : i32
    return %c0_i32, %c0_i32_0 : i32, i32
  }
  func.func @transform_4(%arg0: i32) -> (i32, i32) {
    %c0_i32 = arith.constant 0 : i32
    %c0_i32_0 = arith.constant 0 : i32
    %c0_i32_1 = arith.constant 0 : i32
    return %c0_i32, %c0_i32_0 : i32, i32
  }
  func.func @transform_5(%arg0: i32) -> (i32, i32) {
    %c0_i32 = arith.constant 0 : i32
    %c0_i32_0 = arith.constant 0 : i32
    return %arg0, %c0_i32 : i32, i32
  }
  func.func @transform_6(%arg0: i32) -> (i32, i32) {
    %c0_i32 = arith.constant 0 : i32
    %c0_i32_0 = arith.constant 0 : i32
    return %arg0, %c0_i32 : i32, i32
  }
}

</mosaic_0001>

<llo_original>
// kernel: tpu_custom_call.1
$region0: #{tpu_custom_call.1}
  #allocation0 [shape = 'u32[]', space=smem, size = 0x4, offset = 0x4, fixed_abs, tag = 'smem constant byte address 0x4 - core index']
  #allocation1 [shape = 'u32[144,128]{1,0:T(1,128)}', space=vmem, size = 0x12000, scoped, tag = 'internal scratch']
  #allocation2 [shape = 'f32[8,16,128]{2,1,0:T(8,128)}', space=vmem, size = 0x10000, scoped, tag = 'scratch operand']
  %s0 = inlined_call_operand.hbm [shape: f32[8,16,128], index: 0, kind: input, shape index: {}]
  %s1 = inlined_call_operand.hbm [shape: f32[128,384], index: 1, kind: input, shape index: {}]
  %s2 = inlined_call_operand.hbm [shape: f32[128,384], index: 2, kind: input, shape index: {}]
  %s3 = inlined_call_operand.vmem [shape: f32[1,384], index: 3, kind: input, shape index: {}]
  %s4 = inlined_call_operand.vmem [shape: f32[1,384], index: 4, kind: input, shape index: {}]
  %s5 = inlined_call_operand.hbm [shape: f32[8,128], index: 5, kind: output, shape index: {0}]
  %s6 = inlined_call_operand.hbm [shape: f32[8,128], index: 6, kind: output, shape index: {1}]
  %7 = xla_tuple %s5, %s6
  %s8 = sld [smem:[#allocation0]]
  $region50: #{tpu_custom_call.1} parent=0
    _
  %s10 = ssub.s32 1, %s8
  %s11 = scalar_select 0, %s10, %s8
  $region1: #{tpu_custom_call.1} parent=0
    #allocation3 [shape = 'u8[65536]{0}', space=vmem, size = 0x10000, scoped, tag = 'input window, operand 0, single buffered']
    #allocation4 [shape = 's32[1]{0}', space=sflag, size = 0x4, scoped, tag = 'scoped memory for tpu_custom_call.1']
    #allocation5 [shape = 's32[1]{0}', space=sflag, size = 0x4, scoped, tag = 'scoped memory for tpu_custom_call.1']
    #allocation6 [shape = 'u8[196608]{0}', space=vmem, size = 0x30000, scoped, tag = 'input window, operand 1, single buffered']
    #allocation7 [shape = 's32[1]{0}', space=sflag, size = 0x4, scoped, tag = 'scoped memory for tpu_custom_call.1']
    #allocation8 [shape = 'u8[196608]{0}', space=vmem, size = 0x30000, scoped, tag = 'input window, operand 2, single buffered']
    #allocation9 [shape = 'u8[4096]{0}', space=vmem, size = 0x1000, scoped, tag = 'output window, operand 0, single buffered']
    #allocation10 [shape = 'u8[4096]{0}', space=vmem, size = 0x1000, scoped, tag = 'output window, operand 1, single buffered']
    #allocation11 [shape = 's32[1]{0}', space=sflag, size = 0x4, scoped, tag = 'scoped memory for tpu_custom_call.1']
    %12 = vsyncpa [#allocation4], 0
    %13 = vsyncpa [#allocation7], 0
    %14 = vsyncpa [#allocation5], 0
    %15 = vsyncpa [#allocation11], 0
    // Predicated region
    $region2: #{tpu_custom_call.1} parent=1 // pred_check
      _
    $region3: #{tpu_custom_call.1} parent=1 // pred_check_branch
      %17 = sbr.rel (0) target = $region5
    $region4: #{tpu_custom_call.1} parent=1 // pred_region
      %s19 = ssub.s32 2048, 2048
      %20 = vsyncadd [#allocation4], %s19
      %s21 = sshll.u32 [#allocation3], 4
      %s22 = int_to_ptr.vmem [resolvable:$true] %s21
      %27 = dma.hbm_to_vmem [thread:$0]  %s0, 2048, %s22, [#allocation4], 128, 128, 8
    $region5: #{tpu_custom_call.1} parent=1 // pred_fallthru
      _
    // Predicated region
    $region6: #{tpu_custom_call.1} parent=1 // pred_check
      _
    $region7: #{tpu_custom_call.1} parent=1 // pred_check_branch
      %29 = sbr.rel (0) target = $region9
    $region8: #{tpu_custom_call.1} parent=1 // pred_region
      %s31 = ssub.s32 6144, 6144
      %32 = vsyncadd [#allocation7], %s31
      %s33 = sshll.u32 [#allocation6], 4
      %s34 = int_to_ptr.vmem [resolvable:$true] %s33
      %39 = dma.hbm_to_vmem [thread:$0]  %s1, 6144, %s34, [#allocation7], 384, 384, 24
    $region9: #{tpu_custom_call.1} parent=1 // pred_fallthru
      _
    // Predicated region
    $region10: #{tpu_custom_call.1} parent=1 // pred_check
      _
    $region11: #{tpu_custom_call.1} parent=1 // pred_check_branch
      %41 = sbr.rel (0) target = $region13
    $region12: #{tpu_custom_call.1} parent=1 // pred_region
      %s43 = ssub.s32 6144, 6144
      %44 = vsyncadd [#allocation7], %s43
      %s45 = sshll.u32 [#allocation8], 4
      %s46 = int_to_ptr.vmem [resolvable:$true] %s45
      %51 = dma.hbm_to_vmem [thread:$0]  %s2, 6144, %s46, [#allocation7], 384, 384, 24
    $region13: #{tpu_custom_call.1} parent=1 // pred_fallthru
      _
    // Predicated region
    $region14: #{tpu_custom_call.1} parent=1 // pred_check
      _
    $region15: #{tpu_custom_call.1} parent=1 // pred_check_branch
      %53 = sbr.rel (0) target = $region17
    $region16: #{tpu_custom_call.1} parent=1 // pred_region
      _
    $region17: #{tpu_custom_call.1} parent=1 // pred_fallthru
      _
    // Predicated region
    $region18: #{tpu_custom_call.1} parent=1 // pred_check
      _
    $region19: #{tpu_custom_call.1} parent=1 // pred_check_branch
      %55 = sbr.rel (0) target = $region21
    $region20: #{tpu_custom_call.1} parent=1 // pred_region
      _
    $region21: #{tpu_custom_call.1} parent=1 // pred_fallthru
      _
    // Predicated region
    $region22: #{tpu_custom_call.1} parent=1 // pred_check
      _
    $region23: #{tpu_custom_call.1} parent=1 // pred_check_branch
      %57 = sbr.rel (0) target = $region25
    $region24: #{tpu_custom_call.1} parent=1 // pred_region
      %58 = dma.done [#allocation4], 2048
    $region25: #{tpu_custom_call.1} parent=1 // pred_fallthru
      _
    // Predicated region
    $region26: #{tpu_custom_call.1} parent=1 // pred_check
      _
    $region27: #{tpu_custom_call.1} parent=1 // pred_check_branch
      %60 = sbr.rel (0) target = $region29
    $region28: #{tpu_custom_call.1} parent=1 // pred_region
      %61 = dma.done [#allocation7], 6144
    $region29: #{tpu_custom_call.1} parent=1 // pred_fallthru
      _
    // Predicated region
    $region30: #{tpu_custom_call.1} parent=1 // pred_check
      _
    $region31: #{tpu_custom_call.1} parent=1 // pred_check_branch
      %63 = sbr.rel (0) target = $region33
    $region32: #{tpu_custom_call.1} parent=1 // pred_region
      %64 = dma.done [#allocation7], 6144
    $region33: #{tpu_custom_call.1} parent=1 // pred_fallthru
      _
    %v65 = vld [vmem:[#allocation8] sm:$0xff]
    %v66 = vld [vmem:[#allocation8 + $0x8] sm:$0xff]
    %v67 = vld [vmem:[#allocation8 + $0x10] sm:$0xff]
    %v68 = vld [vmem:[#allocation8 + $0x18] sm:$0xff]
    %v69 = vld [vmem:[#allocation8 + $0x20] sm:$0xff]
    %v70 = vld [vmem:[#allocation8 + $0x28] sm:$0xff]
    %v71 = vld [vmem:[#allocation8 + $0x30] sm:$0xff]
    %v72 = vld [vmem:[#allocation8 + $0x38] sm:$0xff]
    %v73 = vld [vmem:[#allocation8 + $0x40] sm:$0xff]
    %v74 = vld [vmem:[#allocation8 + $0x48] sm:$0xff]
    %v75 = vld [vmem:[#allocation8 + $0x50] sm:$0xff]
    %v76 = vld [vmem:[#allocation8 + $0x58] sm:$0xff]
    %v77 = vld [vmem:[#allocation8 + $0x60] sm:$0xff]
    %v78 = vld [vmem:[#allocation8 + $0x68] sm:$0xff]
    %v79 = vld [vmem:[#allocation8 + $0x70] sm:$0xff]
    %v80 = vld [vmem:[#allocation8 + $0x78] sm:$0xff]
    %v81 = vld [vmem:[#allocation8 + $0x80] sm:$0xff]
    %v82 = vld [vmem:[#allocation8 + $0x88] sm:$0xff]
    %v83 = vld [vmem:[#allocation8 + $0x90] sm:$0xff]
    %v84 = vld [vmem:[#allocation8 + $0x98] sm:$0xff]
    %v85 = vld [vmem:[#allocation8 + $0xa0] sm:$0xff]
    %v86 = vld [vmem:[#allocation8 + $0xa8] sm:$0xff]
    %v87 = vld [vmem:[#allocation8 + $0xb0] sm:$0xff]
    %v88 = vld [vmem:[#allocation8 + $0xb8] sm:$0xff]
    %v89 = vld [vmem:[#allocation8 + $0xc0] sm:$0xff]
    %v90 = vld [vmem:[#allocation8 + $0xc8] sm:$0xff]
    %v91 = vld [vmem:[#allocation8 + $0xd0] sm:$0xff]
    %v92 = vld [vmem:[#allocation8 + $0xd8] sm:$0xff]
    %v93 = vld [vmem:[#allocation8 + $0xe0] sm:$0xff]
    %v94 = vld [vmem:[#allocation8 + $0xe8] sm:$0xff]
    %v95 = vld [vmem:[#allocation8 + $0xf0] sm:$0xff]
    %v96 = vld [vmem:[#allocation8 + $0xf8] sm:$0xff]
    %v97 = vld [vmem:[#allocation8 + $0x100] sm:$0xff]
    %v98 = vld [vmem:[#allocation8 + $0x108] sm:$0xff]
    %v99 = vld [vmem:[#allocation8 + $0x110] sm:$0xff]
    %v100 = vld [vmem:[#allocation8 + $0x118] sm:$0xff]
    %v101 = vld [vmem:[#allocation8 + $0x120] sm:$0xff]
    %v102 = vld [vmem:[#allocation8 + $0x128] sm:$0xff]
    %v103 = vld [vmem:[#allocation8 + $0x130] sm:$0xff]
    %v104 = vld [vmem:[#allocation8 + $0x138] sm:$0xff]
    %v105 = vld [vmem:[#allocation8 + $0x140] sm:$0xff]
    %v106 = vld [vmem:[#allocation8 + $0x148] sm:$0xff]
    %v107 = vld [vmem:[#allocation8 + $0x150] sm:$0xff]
    %v108 = vld [vmem:[#allocation8 + $0x158] sm:$0xff]
    %v109 = vld [vmem:[#allocation8 + $0x160] sm:$0xff]
    %v110 = vld [vmem:[#allocation8 + $0x168] sm:$0xff]
    %v111 = vld [vmem:[#allocation8 + $0x170] sm:$0xff]
    %v112 = vld [vmem:[#allocation8 + $0x178] sm:$0xff]
    %v113 = vld [vmem:[%s4] sm:$0x7]
    %v115 = vlaneseq
    %v116 = vshrl.u32 %v115, 7
    %v117 = vsub.s32 0, %v116
    %v118 = vrot.slane %v113, %v117
    %v119 = vlaneseq
    %v120 = vshrl.u32 %v119, 7
    %v121 = vsub.s32 1, %v120
    %v122 = vrot.slane %v113, %v121
    %v123 = vlaneseq
    %v124 = vshrl.u32 %v123, 7
    %v125 = vsub.s32 2, %v124
    %v126 = vrot.slane %v113, %v125
    %v130 = vld [vmem:[#allocation3] sm:$0xff]
    %v131 = vld [vmem:[#allocation3 + $0x8] sm:$0xff]
    %v132 = vld [vmem:[#allocation3 + $0x10] sm:$0xff]
    %v133 = vld [vmem:[#allocation3 + $0x18] sm:$0xff]
    %v134 = vld [vmem:[#allocation3 + $0x20] sm:$0xff]
    %v135 = vld [vmem:[#allocation3 + $0x28] sm:$0xff]
    %v136 = vld [vmem:[#allocation3 + $0x30] sm:$0xff]
    %v137 = vld [vmem:[#allocation3 + $0x38] sm:$0xff]
    %v138 = vld [vmem:[#allocation3 + $0x40] sm:$0xff]
    %v139 = vld [vmem:[#allocation3 + $0x48] sm:$0xff]
    %v140 = vld [vmem:[#allocation3 + $0x50] sm:$0xff]
    %v141 = vld [vmem:[#allocation3 + $0x58] sm:$0xff]
    %v142 = vld [vmem:[#allocation3 + $0x60] sm:$0xff]
    %v143 = vld [vmem:[#allocation3 + $0x68] sm:$0xff]
    %v144 = vld [vmem:[#allocation3 + $0x70] sm:$0xff]
    %v145 = vld [vmem:[#allocation3 + $0x78] sm:$0xff]
    %v146 = vld [vmem:[#allocation6] sm:$0xff]
    %v147 = vld [vmem:[#allocation6 + $0x8] sm:$0xff]
    %v148 = vld [vmem:[#allocation6 + $0x10] sm:$0xff]
    %v149 = vld [vmem:[#allocation6 + $0x18] sm:$0xff]
    %v150 = vld [vmem:[#allocation6 + $0x20] sm:$0xff]
    %v151 = vld [vmem:[#allocation6 + $0x28] sm:$0xff]
    %v152 = vld [vmem:[#allocation6 + $0x30] sm:$0xff]
    %v153 = vld [vmem:[#allocation6 + $0x38] sm:$0xff]
    %v154 = vld [vmem:[#allocation6 + $0x40] sm:$0xff]
    %v155 = vld [vmem:[#allocation6 + $0x48] sm:$0xff]
    %v156 = vld [vmem:[#allocation6 + $0x50] sm:$0xff]
    %v157 = vld [vmem:[#allocation6 + $0x58] sm:$0xff]
    %v158 = vld [vmem:[#allocation6 + $0x60] sm:$0xff]
    %v159 = vld [vmem:[#allocation6 + $0x68] sm:$0xff]
    %v160 = vld [vmem:[#allocation6 + $0x70] sm:$0xff]
    %v161 = vld [vmem:[#allocation6 + $0x78] sm:$0xff]
    %v162 = vld [vmem:[#allocation6 + $0x80] sm:$0xff]
    %v163 = vld [vmem:[#allocation6 + $0x88] sm:$0xff]
    %v164 = vld [vmem:[#allocation6 + $0x90] sm:$0xff]
    %v165 = vld [vmem:[#allocation6 + $0x98] sm:$0xff]
    %v166 = vld [vmem:[#allocation6 + $0xa0] sm:$0xff]
    %v167 = vld [vmem:[#allocation6 + $0xa8] sm:$0xff]
    %v168 = vld [vmem:[#allocation6 + $0xb0] sm:$0xff]
    %v169 = vld [vmem:[#allocation6 + $0xb8] sm:$0xff]
    %v170 = vld [vmem:[#allocation6 + $0xc0] sm:$0xff]
    %v171 = vld [vmem:[#allocation6 + $0xc8] sm:$0xff]
    %v172 = vld [vmem:[#allocation6 + $0xd0] sm:$0xff]
    %v173 = vld [vmem:[#allocation6 + $0xd8] sm:$0xff]
    %v174 = vld [vmem:[#allocation6 + $0xe0] sm:$0xff]
    %v175 = vld [vmem:[#allocation6 + $0xe8] sm:$0xff]
    %v176 = vld [vmem:[#allocation6 + $0xf0] sm:$0xff]
    %v177 = vld [vmem:[#allocation6 + $0xf8] sm:$0xff]
    %v178 = vld [vmem:[#allocation6 + $0x100] sm:$0xff]
    %v179 = vld [vmem:[#allocation6 + $0x108] sm:$0xff]
    %v180 = vld [vmem:[#allocation6 + $0x110] sm:$0xff]
    %v181 = vld [vmem:[#allocation6 + $0x118] sm:$0xff]
    %v182 = vld [vmem:[#allocation6 + $0x120] sm:$0xff]
    %v183 = vld [vmem:[#allocation6 + $0x128] sm:$0xff]
    %v184 = vld [vmem:[#allocation6 + $0x130] sm:$0xff]
    %v185 = vld [vmem:[#allocation6 + $0x138] sm:$0xff]
    %v186 = vld [vmem:[#allocation6 + $0x140] sm:$0xff]
    %v187 = vld [vmem:[#allocation6 + $0x148] sm:$0xff]
    %v188 = vld [vmem:[#allocation6 + $0x150] sm:$0xff]
    %v189 = vld [vmem:[#allocation6 + $0x158] sm:$0xff]
    %v190 = vld [vmem:[#allocation6 + $0x160] sm:$0xff]
    %v191 = vld [vmem:[#allocation6 + $0x168] sm:$0xff]
    %v192 = vld [vmem:[#allocation6 + $0x170] sm:$0xff]
    %v193 = vld [vmem:[#allocation6 + $0x178] sm:$0xff]
    %v194 = vld [vmem:[%s3] sm:$0x7]
    %v196 = vlaneseq
    %v197 = vshrl.u32 %v196, 7
    %v198 = vsub.s32 0, %v197
    %v199 = vrot.slane %v194, %v198
    %v200 = vlaneseq
    %v201 = vshrl.u32 %v200, 7
    %v202 = vsub.s32 1, %v201
    %v203 = vrot.slane %v194, %v202
    %v204 = vlaneseq
    %v205 = vshrl.u32 %v204, 7
    %v206 = vsub.s32 2, %v205
    %v207 = vrot.slane %v194, %v206
    %211 = vmatprep.subr.mxu0 %v147
    %212 = vmatpush1.msra.mxu0 %v146
    %213 = vmatprep.subr.mxu0 %v150
    %214 = vmatpush1.msra.mxu0 %v149
    %215 = vmatprep.subr.mxu0 %v153
    %216 = vmatpush1.msra.mxu0 %v152
    %217 = vmatprep.subr.mxu0 %v156
    %218 = vmatpush1.msra.mxu0 %v155
    %219 = vmatprep.subr.mxu0 %v159
    %220 = vmatpush1.msra.mxu0 %v158
    %221 = vmatprep.subr.mxu0 %v162
    %222 = vmatpush1.msra.mxu0 %v161
    %223 = vmatprep.subr.mxu0 %v165
    %224 = vmatpush1.msra.mxu0 %v164
    %225 = vmatprep.subr.mxu0 %v168
    %226 = vmatpush1.msra.mxu0 %v167
    %227 = vmatprep.subr.mxu0 %v171
    %228 = vmatpush1.msra.mxu0 %v170
    %229 = vmatprep.subr.mxu0 %v174
    %230 = vmatpush1.msra.mxu0 %v173
    %231 = vmatprep.subr.mxu0 %v177
    %232 = vmatpush1.msra.mxu0 %v176
    %233 = vmatprep.subr.mxu0 %v180
    %234 = vmatpush1.msra.mxu0 %v179
    %235 = vmatprep.subr.mxu0 %v183
    %236 = vmatpush1.msra.mxu0 %v182
    %237 = vmatprep.subr.mxu0 %v186
    %238 = vmatpush1.msra.mxu0 %v185
    %239 = vmatprep.subr.mxu0 %v189
    %240 = vmatpush1.msra.mxu0 %v188
    %241 = vmatprep.subr.mxu0 %v192
    %242 = vmatpush1.msra.mxu0 %v191
    %243 = vmatprep.subr.mxu0 0.0
    %244 = vmatpush1.msra.mxu0 0.0
    %245 = vmatprep.subr.mxu0 0.0
    %246 = vmatpush1.msra.mxu0 0.0
    %247 = vmatprep.subr.mxu0 0.0
    %248 = vmatpush1.msra.mxu0 0.0
    %249 = vmatprep.subr.mxu0 0.0
    %250 = vmatpush1.msra.mxu0 0.0
    %251 = vmatprep.subr.mxu0 0.0
    %252 = vmatpush1.msra.mxu0 0.0
    %253 = vmatprep.subr.mxu0 0.0
    %254 = vmatpush1.msra.mxu0 0.0
    %255 = vmatprep.subr.mxu0 0.0
    %256 = vmatpush1.msra.mxu0 0.0
    %257 = vmatprep.subr.mxu0 0.0
    %258 = vmatpush1.msra.mxu0 0.0
    %259 = vmatprep.subr.mxu0 0.0
    %260 = vmatpush1.msra.mxu0 0.0
    %261 = vmatprep.subr.mxu0 0.0
    %262 = vmatpush1.msra.mxu0 0.0
    %263 = vmatprep.subr.mxu0 0.0
    %264 = vmatpush1.msra.mxu0 0.0
    %265 = vmatprep.subr.mxu0 0.0
    %266 = vmatpush1.msra.mxu0 0.0
    %267 = vmatprep.subr.mxu0 0.0
    %268 = vmatpush1.msra.mxu0 0.0
    %269 = vmatprep.subr.mxu0 0.0
    %270 = vmatpush1.msra.mxu0 0.0
    %271 = vmatprep.subr.mxu0 0.0
    %272 = vmatpush1.msra.mxu0 0.0
    %273 = vmatprep.subr.mxu0 0.0
    %274 = vmatpush1.msra.mxu0 0.0
    %275 = vmatprep.mubr.f32.mxu0 0.0
    %276 = vmatmul.mubr.f32.gmra.mrb[0].mxu0 %v130
    %v277 = vpop.f32.mrb[0].mxu0
    %v278 = vadd.f32 %v199, %v277
    %v279 = vpop.f32.mrb[0].mxu0
    %v280 = vadd.f32 %v203, %v279
    %281 = vmatprep.mubr.f32.mxu0 0.0
    %282 = vmatmul.mubr.f32.gmra.mrb[0].mxu0 %v131
    %v283 = vpop.f32.mrb[0].mxu0
    %v284 = vadd.f32 %v199, %v283
    %v285 = vpop.f32.mrb[0].mxu0
    %v286 = vadd.f32 %v203, %v285
    %287 = vmatprep.mubr.f32.mxu0 0.0
    %288 = vmatmul.mubr.f32.gmra.mrb[0].mxu0 %v132
    %v289 = vpop.f32.mrb[0].mxu0
    %v290 = vadd.f32 %v199, %v289
    %v291 = vpop.f32.mrb[0].mxu0
    %v292 = vadd.f32 %v203, %v291
    %293 = vmatprep.mubr.f32.mxu0 0.0
    %294 = vmatmul.mubr.f32.gmra.mrb[0].mxu0 %v133
    %v295 = vpop.f32.mrb[0].mxu0
    %v296 = vadd.f32 %v199, %v295
    %v297 = vpop.f32.mrb[0].mxu0
    %v298 = vadd.f32 %v203, %v297
    %299 = vmatprep.mubr.f32.mxu0 0.0
    %300 = vmatmul.mubr.f32.gmra.mrb[0].mxu0 %v134
    %v301 = vpop.f32.mrb[0].mxu0
    %v302 = vadd.f32 %v199, %v301
    %v303 = vpop.f32.mrb[0].mxu0
    %v304 = vadd.f32 %v203, %v303
    %305 = vmatprep.mubr.f32.mxu0 0.0
    %306 = vmatmul.mubr.f32.gmra.mrb[0].mxu0 %v135
    %v307 = vpop.f32.mrb[0].mxu0
    %v308 = vadd.f32 %v199, %v307
    %v309 = vpop.f32.mrb[0].mxu0
    %v310 = vadd.f32 %v203, %v309
    %311 = vmatprep.mubr.f32.mxu0 0.0
    %312 = vmatmul.mubr.f32.gmra.mrb[0].mxu0 %v136
    %v313 = vpop.f32.mrb[0].mxu0
    %v314 = vadd.f32 %v199, %v313
    %v315 = vpop.f32.mrb[0].mxu0
    %v316 = vadd.f32 %v203, %v315
    %317 = vmatprep.mubr.f32.mxu0 0.0
    %318 = vmatmul.mubr.f32.gmra.mrb[0].mxu0 %v137
    %v319 = vpop.f32.mrb[0].mxu0
    %v320 = vadd.f32 %v199, %v319
    %v321 = vpop.f32.mrb[0].mxu0
    %v322 = vadd.f32 %v203, %v321
    %323 = vmatprep.mubr.f32.mxu0 0.0
    %324 = vmatmul.mubr.f32.gmra.mrb[0].mxu0 %v138
    %v325 = vpop.f32.mrb[0].mxu0
    %v326 = vadd.f32 %v199, %v325
    %v327 = vpop.f32.mrb[0].mxu0
    %v328 = vadd.f32 %v203, %v327
    %329 = vmatprep.mubr.f32.mxu0 0.0
    %330 = vmatmul.mubr.f32.gmra.mrb[0].mxu0 %v139
    %v331 = vpop.f32.mrb[0].mxu0
    %v332 = vadd.f32 %v199, %v331
    %v333 = vpop.f32.mrb[0].mxu0
    %v334 = vadd.f32 %v203, %v333
    %335 = vmatprep.mubr.f32.mxu0 0.0
    %336 = vmatmul.mubr.f32.gmra.mrb[0].mxu0 %v140
    %v337 = vpop.f32.mrb[0].mxu0
    %v338 = vadd.f32 %v199, %v337
    %v339 = vpop.f32.mrb[0].mxu0
    %v340 = vadd.f32 %v203, %v339
    %341 = vmatprep.mubr.f32.mxu0 0.0
    %342 = vmatmul.mubr.f32.gmra.mrb[0].mxu0 %v141
    %v343 = vpop.f32.mrb[0].mxu0
    %v344 = vadd.f32 %v199, %v343
    %v345 = vpop.f32.mrb[0].mxu0
    %v346 = vadd.f32 %v203, %v345
    %347 = vmatprep.mubr.f32.mxu0 0.0
    %348 = vmatmul.mubr.f32.gmra.mrb[0].mxu0 %v142
    %v349 = vpop.f32.mrb[0].mxu0
    %v350 = vadd.f32 %v199, %v349
    %v351 = vpop.f32.mrb[0].mxu0
    %v352 = vadd.f32 %v203, %v351
    %353 = vmatprep.mubr.f32.mxu0 0.0
    %354 = vmatmul.mubr.f32.gmra.mrb[0].mxu0 %v143
    %v355 = vpop.f32.mrb[0].mxu0
    %v356 = vadd.f32 %v199, %v355
    %v357 = vpop.f32.mrb[0].mxu0
    %v358 = vadd.f32 %v203, %v357
    %359 = vmatprep.mubr.f32.mxu0 0.0
    %360 = vmatmul.mubr.f32.gmra.mrb[0].mxu0 %v144
    %v361 = vpop.f32.mrb[0].mxu0
    %v362 = vadd.f32 %v199, %v361
    %v363 = vpop.f32.mrb[0].mxu0
    %v364 = vadd.f32 %v203, %v363
    %365 = vmatprep.mubr.f32.mxu0 0.0
    %366 = vmatmul.mubr.f32.gmra.mrb[0].mxu0 %v145
    %v367 = vpop.f32.mrb[0].mxu0
    %v368 = vadd.f32 %v199, %v367
    %v369 = vpop.f32.mrb[0].mxu0
    %v370 = vadd.f32 %v203, %v369
    %371 = vdwg.mxu0
    %372 = vmatprep.subr.mxu0 0.0
    %373 = vmatpush1.msra.mxu0 %v148
    %374 = vmatprep.subr.mxu0 0.0
    %375 = vmatpush1.msra.mxu0 %v151
    %376 = vmatprep.subr.mxu0 0.0
    %377 = vmatpush1.msra.mxu0 %v154
    %378 = vmatprep.subr.mxu0 0.0
    %379 = vmatpush1.msra.mxu0 %v157
    %380 = vmatprep.subr.mxu0 0.0
    %381 = vmatpush1.msra.mxu0 %v160
    %382 = vmatprep.subr.mxu0 0.0
    %383 = vmatpush1.msra.mxu0 %v163
    %384 = vmatprep.subr.mxu0 0.0
    %385 = vmatpush1.msra.mxu0 %v166
    %386 = vmatprep.subr.mxu0 0.0
    %387 = vmatpush1.msra.mxu0 %v169
    %388 = vmatprep.subr.mxu0 0.0
    %389 = vmatpush1.msra.mxu0 %v172
    %390 = vmatprep.subr.mxu0 0.0
    %391 = vmatpush1.msra.mxu0 %v175
    %392 = vmatprep.subr.mxu0 0.0
    %393 = vmatpush1.msra.mxu0 %v178
    %394 = vmatprep.subr.mxu0 0.0
    %395 = vmatpush1.msra.mxu0 %v181
    %396 = vmatprep.subr.mxu0 0.0
    %397 = vmatpush1.msra.mxu0 %v184
    %398 = vmatprep.subr.mxu0 0.0
    %399 = vmatpush1.msra.mxu0 %v187
    %400 = vmatprep.subr.mxu0 0.0
    %401 = vmatpush1.msra.mxu0 %v190
    %402 = vmatprep.subr.mxu0 0.0
    %403 = vmatpush1.msra.mxu0 %v193
    %404 = vmatprep.subr.mxu0 0.0
    %405 = vmatpush1.msra.mxu0 0.0
    %406 = vmatprep.subr.mxu0 0.0
    %407 = vmatpush1.msra.mxu0 0.0
    %408 = vmatprep.subr.mxu0 0.0
    %409 = vmatpush1.msra.mxu0 0.0
    %410 = vmatprep.subr.mxu0 0.0
    %411 = vmatpush1.msra.mxu0 0.0
    %412 = vmatprep.subr.mxu0 0.0
    %413 = vmatpush1.msra.mxu0 0.0
    %414 = vmatprep.subr.mxu0 0.0
    %415 = vmatpush1.msra.mxu0 0.0
    %416 = vmatprep.subr.mxu0 0.0
    %417 = vmatpush1.msra.mxu0 0.0
    %418 = vmatprep.subr.mxu0 0.0
    %419 = vmatpush1.msra.mxu0 0.0
    %420 = vmatprep.subr.mxu0 0.0
    %421 = vmatpush1.msra.mxu0 0.0
    %422 = vmatprep.subr.mxu0 0.0
    %423 = vmatpush1.msra.mxu0 0.0
    %424 = vmatprep.subr.mxu0 0.0
    %425 = vmatpush1.msra.mxu0 0.0
    %426 = vmatprep.subr.mxu0 0.0
    %427 = vmatpush1.msra.mxu0 0.0
    %428 = vmatprep.subr.mxu0 0.0
    %429 = vmatpush1.msra.mxu0 0.0
    %430 = vmatprep.subr.mxu0 0.0
    %431 = vmatpush1.msra.mxu0 0.0
    %432 = vmatprep.subr.mxu0 0.0
    %433 = vmatpush1.msra.mxu0 0.0
    %434 = vmatprep.subr.mxu0 0.0
    %435 = vmatpush1.msra.mxu0 0.0
    %436 = vmatprep.mubr.f32.mxu0 0.0
    %437 = vmatmul.mubr.f32.gmra.mrb[0].mxu0 %v130
    %v438 = vpop.f32.mrb[0].mxu0
    %v439 = vadd.f32 %v207, %v438
    %v440 = vpop.f32.mrb[0].mxu0
    %441 = vmatprep.mubr.f32.mxu0 0.0
    %442 = vmatmul.mubr.f32.gmra.mrb[0].mxu0 %v131
    %v443 = vpop.f32.mrb[0].mxu0
    %v444 = vadd.f32 %v207, %v443
    %v445 = vpop.f32.mrb[0].mxu0
    %446 = vmatprep.mubr.f32.mxu0 0.0
    %447 = vmatmul.mubr.f32.gmra.mrb[0].mxu0 %v132
    %v448 = vpop.f32.mrb[0].mxu0
    %v449 = vadd.f32 %v207, %v448
    %v450 = vpop.f32.mrb[0].mxu0
    %451 = vmatprep.mubr.f32.mxu0 0.0
    %452 = vmatmul.mubr.f32.gmra.mrb[0].mxu0 %v133
    %v453 = vpop.f32.mrb[0].mxu0
    %v454 = vadd.f32 %v207, %v453
    %v455 = vpop.f32.mrb[0].mxu0
    %456 = vmatprep.mubr.f32.mxu0 0.0
    %457 = vmatmul.mubr.f32.gmra.mrb[0].mxu0 %v134
    %v458 = vpop.f32.mrb[0].mxu0
    %v459 = vadd.f32 %v207, %v458
    %v460 = vpop.f32.mrb[0].mxu0
    %461 = vmatprep.mubr.f32.mxu0 0.0
    %462 = vmatmul.mubr.f32.gmra.mrb[0].mxu0 %v135
    %v463 = vpop.f32.mrb[0].mxu0
    %v464 = vadd.f32 %v207, %v463
    %v465 = vpop.f32.mrb[0].mxu0
    %466 = vmatprep.mubr.f32.mxu0 0.0
    %467 = vmatmul.mubr.f32.gmra.mrb[0].mxu0 %v136
    %v468 = vpop.f32.mrb[0].mxu0
    %v469 = vadd.f32 %v207, %v468
    %v470 = vpop.f32.mrb[0].mxu0
    %471 = vmatprep.mubr.f32.mxu0 0.0
    %472 = vmatmul.mubr.f32.gmra.mrb[0].mxu0 %v137
    %v473 = vpop.f32.mrb[0].mxu0
    %v474 = vadd.f32 %v207, %v473
    %v475 = vpop.f32.mrb[0].mxu0
    %476 = vmatprep.mubr.f32.mxu0 0.0
    %477 = vmatmul.mubr.f32.gmra.mrb[0].mxu0 %v138
    %v478 = vpop.f32.mrb[0].mxu0
    %v479 = vadd.f32 %v207, %v478
    %v480 = vpop.f32.mrb[0].mxu0
    %481 = vmatprep.mubr.f32.mxu0 0.0
    %482 = vmatmul.mubr.f32.gmra.mrb[0].mxu0 %v139
    %v483 = vpop.f32.mrb[0].mxu0
    %v484 = vadd.f32 %v207, %v483
    %v485 = vpop.f32.mrb[0].mxu0
    %486 = vmatprep.mubr.f32.mxu0 0.0
    %487 = vmatmul.mubr.f32.gmra.mrb[0].mxu0 %v140
    %v488 = vpop.f32.mrb[0].mxu0
    %v489 = vadd.f32 %v207, %v488
    %v490 = vpop.f32.mrb[0].mxu0
    %491 = vmatprep.mubr.f32.mxu0 0.0
    %492 = vmatmul.mubr.f32.gmra.mrb[0].mxu0 %v141
    %v493 = vpop.f32.mrb[0].mxu0
    %v494 = vadd.f32 %v207, %v493
    %v495 = vpop.f32.mrb[0].mxu0
    %496 = vmatprep.mubr.f32.mxu0 0.0
    %497 = vmatmul.mubr.f32.gmra.mrb[0].mxu0 %v142
    %v498 = vpop.f32.mrb[0].mxu0
    %v499 = vadd.f32 %v207, %v498
    %v500 = vpop.f32.mrb[0].mxu0
    %501 = vmatprep.mubr.f32.mxu0 0.0
    %502 = vmatmul.mubr.f32.gmra.mrb[0].mxu0 %v143
    %v503 = vpop.f32.mrb[0].mxu0
    %v504 = vadd.f32 %v207, %v503
    %v505 = vpop.f32.mrb[0].mxu0
    %506 = vmatprep.mubr.f32.mxu0 0.0
    %507 = vmatmul.mubr.f32.gmra.mrb[0].mxu0 %v144
    %v508 = vpop.f32.mrb[0].mxu0
    %v509 = vadd.f32 %v207, %v508
    %v510 = vpop.f32.mrb[0].mxu0
    %511 = vmatprep.mubr.f32.mxu0 0.0
    %512 = vmatmul.mubr.f32.gmra.mrb[0].mxu0 %v145
    %v513 = vpop.f32.mrb[0].mxu0
    %v514 = vadd.f32 %v207, %v513
    %v515 = vpop.f32.mrb[0].mxu0
    %516 = vdwg.mxu0
    %517 = vmatprep.subr.mxu0 %v66
    %518 = vmatpush1.msra.mxu0 %v65
    %519 = vmatprep.subr.mxu0 %v69
    %520 = vmatpush1.msra.mxu0 %v68
    %521 = vmatprep.subr.mxu0 %v72
    %522 = vmatpush1.msra.mxu0 %v71
    %523 = vmatprep.subr.mxu0 %v75
    %524 = vmatpush1.msra.mxu0 %v74
    %525 = vmatprep.subr.mxu0 %v78
    %526 = vmatpush1.msra.mxu0 %v77
    %527 = vmatprep.subr.mxu0 %v81
    %528 = vmatpush1.msra.mxu0 %v80
    %529 = vmatprep.subr.mxu0 %v84
    %530 = vmatpush1.msra.mxu0 %v83
    %531 = vmatprep.subr.mxu0 %v87
    %532 = vmatpush1.msra.mxu0 %v86
    %533 = vmatprep.subr.mxu0 %v90
    %534 = vmatpush1.msra.mxu0 %v89
    %535 = vmatprep.subr.mxu0 %v93
    %536 = vmatpush1.msra.mxu0 %v92
    %537 = vmatprep.subr.mxu0 %v96
    %538 = vmatpush1.msra.mxu0 %v95
    %539 = vmatprep.subr.mxu0 %v99
    %540 = vmatpush1.msra.mxu0 %v98
    %541 = vmatprep.subr.mxu0 %v102
    %542 = vmatpush1.msra.mxu0 %v101
    %543 = vmatprep.subr.mxu0 %v105
    %544 = vmatpush1.msra.mxu0 %v104
    %545 = vmatprep.subr.mxu0 %v108
    %546 = vmatpush1.msra.mxu0 %v107
    %547 = vmatprep.subr.mxu0 %v111
    %548 = vmatpush1.msra.mxu0 %v110
    %549 = vmatprep.subr.mxu0 0.0
    %550 = vmatpush1.msra.mxu0 0.0
    %551 = vmatprep.subr.mxu0 0.0
    %552 = vmatpush1.msra.mxu0 0.0
    %553 = vmatprep.subr.mxu0 0.0
    %554 = vmatpush1.msra.mxu0 0.0
    %555 = vmatprep.subr.mxu0 0.0
    %556 = vmatpush1.msra.mxu0 0.0
    %557 = vmatprep.subr.mxu0 0.0
    %558 = vmatpush1.msra.mxu0 0.0
    %559 = vmatprep.subr.mxu0 0.0
    %560 = vmatpush1.msra.mxu0 0.0
    %561 = vmatprep.subr.mxu0 0.0
    %562 = vmatpush1.msra.mxu0 0.0
    %563 = vmatprep.subr.mxu0 0.0
    %564 = vmatpush1.msra.mxu0 0.0
    %565 = vmatprep.subr.mxu0 0.0
    %566 = vmatpush1.msra.mxu0 0.0
    %567 = vmatprep.subr.mxu0 0.0
    %568 = vmatpush1.msra.mxu0 0.0
    %569 = vmatprep.subr.mxu0 0.0
    %570 = vmatpush1.msra.mxu0 0.0
    %571 = vmatprep.subr.mxu0 0.0
    %572 = vmatpush1.msra.mxu0 0.0
    %573 = vmatprep.subr.mxu0 0.0
    %574 = vmatpush1.msra.mxu0 0.0
    %575 = vmatprep.subr.mxu0 0.0
    %576 = vmatpush1.msra.mxu0 0.0
    %577 = vmatprep.subr.mxu0 0.0
    %578 = vmatpush1.msra.mxu0 0.0
    %579 = vmatprep.subr.mxu0 0.0
    %580 = vmatpush1.msra.mxu0 0.0
    %581 = vmatprep.mubr.f32.mxu0 0.0
    %582 = vmatmul.mubr.f32.gmra.mrb[0].mxu0 0.0
    %v583 = vpop.f32.mrb[0].mxu0
    %v584 = vadd.f32 %v118, %v583
    %v585 = vpop.f32.mrb[0].mxu0
    %v586 = vadd.f32 %v122, %v585
    %587 = vmatprep.mubr.f32.mxu0 0.0
    %588 = vmatmul.mubr.f32.gmra.mrb[0].mxu0 0.0
    %v589 = vpop.f32.mrb[0].mxu0
    %v590 = vadd.f32 %v118, %v589
    %v591 = vpop.f32.mrb[0].mxu0
    %v592 = vadd.f32 %v122, %v591
    %593 = vdwg.mxu0
    %594 = vmatprep.subr.mxu0 0.0
    %595 = vmatpush1.msra.mxu0 %v67
    %596 = vmatprep.subr.mxu0 0.0
    %597 = vmatpush1.msra.mxu0 %v70
    %598 = vmatprep.subr.mxu0 0.0
    %599 = vmatpush1.msra.mxu0 %v73
    %600 = vmatprep.subr.mxu0 0.0
    %601 = vmatpush1.msra.mxu0 %v76
    %602 = vmatprep.subr.mxu0 0.0
    %603 = vmatpush1.msra.mxu0 %v79
    %604 = vmatprep.subr.mxu0 0.0
    %605 = vmatpush1.msra.mxu0 %v82
    %606 = vmatprep.subr.mxu0 0.0
    %607 = vmatpush1.msra.mxu0 %v85
    %608 = vmatprep.subr.mxu0 0.0
    %609 = vmatpush1.msra.mxu0 %v88
    %610 = vmatprep.subr.mxu0 0.0
    %611 = vmatpush1.msra.mxu0 %v91
    %612 = vmatprep.subr.mxu0 0.0
    %613 = vmatpush1.msra.mxu0 %v94
    %614 = vmatprep.subr.mxu0 0.0
    %615 = vmatpush1.msra.mxu0 %v97
    %616 = vmatprep.subr.mxu0 0.0
    %617 = vmatpush1.msra.mxu0 %v100
    %618 = vmatprep.subr.mxu0 0.0
    %619 = vmatpush1.msra.mxu0 %v103
    %620 = vmatprep.subr.mxu0 0.0
    %621 = vmatpush1.msra.mxu0 %v106
    %622 = vmatprep.subr.mxu0 0.0
    %623 = vmatpush1.msra.mxu0 %v109
    %624 = vmatprep.subr.mxu0 0.0
    %625 = vmatpush1.msra.mxu0 %v112
    %626 = vmatprep.subr.mxu0 0.0
    %627 = vmatpush1.msra.mxu0 0.0
    %628 = vmatprep.subr.mxu0 0.0
    %629 = vmatpush1.msra.mxu0 0.0
    %630 = vmatprep.subr.mxu0 0.0
    %631 = vmatpush1.msra.mxu0 0.0
    %632 = vmatprep.subr.mxu0 0.0
    %633 = vmatpush1.msra.mxu0 0.0
    %634 = vmatprep.subr.mxu0 0.0
    %635 = vmatpush1.msra.mxu0 0.0
    %636 = vmatprep.subr.mxu0 0.0
    %637 = vmatpush1.msra.mxu0 0.0
    %638 = vmatprep.subr.mxu0 0.0
    %639 = vmatpush1.msra.mxu0 0.0
    %640 = vmatprep.subr.mxu0 0.0
    %641 = vmatpush1.msra.mxu0 0.0
    %642 = vmatprep.subr.mxu0 0.0
    %643 = vmatpush1.msra.mxu0 0.0
    %644 = vmatprep.subr.mxu0 0.0
    %645 = vmatpush1.msra.mxu0 0.0
    %646 = vmatprep.subr.mxu0 0.0
    %647 = vmatpush1.msra.mxu0 0.0
    %648 = vmatprep.subr.mxu0 0.0
    %649 = vmatpush1.msra.mxu0 0.0
    %650 = vmatprep.subr.mxu0 0.0
    %651 = vmatpush1.msra.mxu0 0.0
    %652 = vmatprep.subr.mxu0 0.0
    %653 = vmatpush1.msra.mxu0 0.0
    %654 = vmatprep.subr.mxu0 0.0
    %655 = vmatpush1.msra.mxu0 0.0
    %656 = vmatprep.subr.mxu0 0.0
    %657 = vmatpush1.msra.mxu0 0.0
    %658 = vmatprep.mubr.f32.mxu0 0.0
    %659 = vmatmul.mubr.f32.gmra.mrb[0].mxu0 0.0
    %v660 = vpop.f32.mrb[0].mxu0
    %v661 = vadd.f32 %v126, %v660
    %v662 = vpop.f32.mrb[0].mxu0
    %663 = vmatprep.mubr.f32.mxu0 0.0
    %664 = vmatmul.mubr.f32.gmra.mrb[0].mxu0 0.0
    %v665 = vpop.f32.mrb[0].mxu0
    %v666 = vadd.f32 %v126, %v665
    %v667 = vpop.f32.mrb[0].mxu0
    %668 = vdwg.mxu0
    %v669 = vadd.f32 %v278, %v584
    %v670 = vadd.f32 %v284, %v590
    %v671 = vxor.u32 %v669, 2147483648
    %v672 = vxor.u32 %v670, 2147483648
    %v673 = vmul.f32 %v671, 1.442695
    %v674 = vpow.pop %v673
    %v675 = vmul.f32 %v672, 1.442695
    %v676 = vpow.pop %v675
    %v677 = vadd.f32 %v674, 1.0
    %v678 = vadd.f32 %v676, 1.0
    %v679 = vrcp.pop %v677
    %v680 = vmul.f32 1.0, %v679
    %v681 = vrcp.pop %v678
    %v682 = vmul.f32 1.0, %v681
    %v683 = vadd.f32 %v280, %v586
    %v684 = vadd.f32 %v286, %v592
    %v685 = vxor.u32 %v683, 2147483648
    %v686 = vxor.u32 %v684, 2147483648
    %v687 = vmul.f32 %v685, 1.442695
    %v688 = vpow.pop %v687
    %v689 = vmul.f32 %v686, 1.442695
    %v690 = vpow.pop %v689
    %v691 = vadd.f32 %v688, 1.0
    %v692 = vadd.f32 %v690, 1.0
    %v693 = vrcp.pop %v691
    %v694 = vmul.f32 1.0, %v693
    %v695 = vrcp.pop %v692
    %v696 = vmul.f32 1.0, %v695
    %v697 = vmul.f32 %v680, %v661
    %v698 = vmul.f32 %v682, %v666
    %v699 = vadd.f32 %v439, %v697
    %v700 = vadd.f32 %v444, %v698
    %v701 = vtanh.pop %v699
    %v702 = vtanh.pop %v700
    %v703 = vsub.f32 1.0, %v694
    %v704 = vsub.f32 1.0, %v696
    %v705 = vmul.f32 %v703, %v701
    %v706 = vmul.f32 %v704, %v702
    %v707 = vmul.f32 %v694, 0.0
    %v708 = vmul.f32 %v696, 0.0
    %v709 = vadd.f32 %v705, %v707
    %v710 = vadd.f32 %v706, %v708
    %711 = vst [vmem:[#allocation2] sm:$0xff] %v709
    %712 = vst [vmem:[#allocation2 + $0x8] sm:$0xff] %v710
    %713 = vmatprep.subr.mxu0 %v66
    %714 = vmatpush1.msra.mxu0 %v65
    %715 = vmatprep.subr.mxu0 %v69
    %716 = vmatpush1.msra.mxu0 %v68
    %717 = vmatprep.subr.mxu0 %v72
    %718 = vmatpush1.msra.mxu0 %v71
    %719 = vmatprep.subr.mxu0 %v75
    %720 = vmatpush1.msra.mxu0 %v74
    %721 = vmatprep.subr.mxu0 %v78
    %722 = vmatpush1.msra.mxu0 %v77
    %723 = vmatprep.subr.mxu0 %v81
    %724 = vmatpush1.msra.mxu0 %v80
    %725 = vmatprep.subr.mxu0 %v84
    %726 = vmatpush1.msra.mxu0 %v83
    %727 = vmatprep.subr.mxu0 %v87
    %728 = vmatpush1.msra.mxu0 %v86
    %729 = vmatprep.subr.mxu0 %v90
    %730 = vmatpush1.msra.mxu0 %v89
    %731 = vmatprep.subr.mxu0 %v93
    %732 = vmatpush1.msra.mxu0 %v92
    %733 = vmatprep.subr.mxu0 %v96
    %734 = vmatpush1.msra.mxu0 %v95
    %735 = vmatprep.subr.mxu0 %v99
    %736 = vmatpush1.msra.mxu0 %v98
    %737 = vmatprep.subr.mxu0 %v102
    %738 = vmatpush1.msra.mxu0 %v101
    %739 = vmatprep.subr.mxu0 %v105
    %740 = vmatpush1.msra.mxu0 %v104
    %741 = vmatprep.subr.mxu0 %v108
    %742 = vmatpush1.msra.mxu0 %v107
    %743 = vmatprep.subr.mxu0 %v111
    %744 = vmatpush1.msra.mxu0 %v110
    %745 = vmatprep.subr.mxu0 0.0
    %746 = vmatpush1.msra.mxu0 0.0
    %747 = vmatprep.subr.mxu0 0.0
    %748 = vmatpush1.msra.mxu0 0.0
    %749 = vmatprep.subr.mxu0 0.0
    %750 = vmatpush1.msra.mxu0 0.0
    %751 = vmatprep.subr.mxu0 0.0
    %752 = vmatpush1.msra.mxu0 0.0
    %753 = vmatprep.subr.mxu0 0.0
    %754 = vmatpush1.msra.mxu0 0.0
    %755 = vmatprep.subr.mxu0 0.0
    %756 = vmatpush1.msra.mxu0 0.0
    %757 = vmatprep.subr.mxu0 0.0
    %758 = vmatpush1.msra.mxu0 0.0
    %759 = vmatprep.subr.mxu0 0.0
    %760 = vmatpush1.msra.mxu0 0.0
    %761 = vmatprep.subr.mxu0 0.0
    %762 = vmatpush1.msra.mxu0 0.0
    %763 = vmatprep.subr.mxu0 0.0
    %764 = vmatpush1.msra.mxu0 0.0
    %765 = vmatprep.subr.mxu0 0.0
    %766 = vmatpush1.msra.mxu0 0.0
    %767 = vmatprep.subr.mxu0 0.0
    %768 = vmatpush1.msra.mxu0 0.0
    %769 = vmatprep.subr.mxu0 0.0
    %770 = vmatpush1.msra.mxu0 0.0
    %771 = vmatprep.subr.mxu0 0.0
    %772 = vmatpush1.msra.mxu0 0.0
    %773 = vmatprep.subr.mxu0 0.0
    %774 = vmatpush1.msra.mxu0 0.0
    %775 = vmatprep.subr.mxu0 0.0
    %776 = vmatpush1.msra.mxu0 0.0
    %777 = vmatprep.mubr.f32.mxu0 0.0
    %778 = vmatmul.mubr.f32.gmra.mrb[0].mxu0 %v709
    %v779 = vpop.f32.mrb[0].mxu0
    %v780 = vadd.f32 %v118, %v779
    %v781 = vpop.f32.mrb[0].mxu0
    %v782 = vadd.f32 %v122, %v781
    %783 = vmatprep.mubr.f32.mxu0 0.0
    %784 = vmatmul.mubr.f32.gmra.mrb[0].mxu0 %v710
    %v785 = vpop.f32.mrb[0].mxu0
    %v786 = vadd.f32 %v118, %v785
    %v787 = vpop.f32.mrb[0].mxu0
    %v788 = vadd.f32 %v122, %v787
    %789 = vdwg.mxu0
    %790 = vmatprep.subr.mxu0 0.0
    %791 = vmatpush1.msra.mxu0 %v67
    %792 = vmatprep.subr.mxu0 0.0
    %793 = vmatpush1.msra.mxu0 %v70
    %794 = vmatprep.subr.mxu0 0.0
    %795 = vmatpush1.msra.mxu0 %v73
    %796 = vmatprep.subr.mxu0 0.0
    %797 = vmatpush1.msra.mxu0 %v76
    %798 = vmatprep.subr.mxu0 0.0
    %799 = vmatpush1.msra.mxu0 %v79
    %800 = vmatprep.subr.mxu0 0.0
    %801 = vmatpush1.msra.mxu0 %v82
    %802 = vmatprep.subr.mxu0 0.0
    %803 = vmatpush1.msra.mxu0 %v85
    %804 = vmatprep.subr.mxu0 0.0
    %805 = vmatpush1.msra.mxu0 %v88
    %806 = vmatprep.subr.mxu0 0.0
    %807 = vmatpush1.msra.mxu0 %v91
    %808 = vmatprep.subr.mxu0 0.0
    %809 = vmatpush1.msra.mxu0 %v94
    %810 = vmatprep.subr.mxu0 0.0
    %811 = vmatpush1.msra.mxu0 %v97
    %812 = vmatprep.subr.mxu0 0.0
    %813 = vmatpush1.msra.mxu0 %v100
    %814 = vmatprep.subr.mxu0 0.0
    %815 = vmatpush1.msra.mxu0 %v103
    %816 = vmatprep.subr.mxu0 0.0
    %817 = vmatpush1.msra.mxu0 %v106
    %818 = vmatprep.subr.mxu0 0.0
    %819 = vmatpush1.msra.mxu0 %v109
    %820 = vmatprep.subr.mxu0 0.0
    %821 = vmatpush1.msra.mxu0 %v112
    %822 = vmatprep.subr.mxu0 0.0
    %823 = vmatpush1.msra.mxu0 0.0
    %824 = vmatprep.subr.mxu0 0.0
    %825 = vmatpush1.msra.mxu0 0.0
    %826 = vmatprep.subr.mxu0 0.0
    %827 = vmatpush1.msra.mxu0 0.0
    %828 = vmatprep.subr.mxu0 0.0
    %829 = vmatpush1.msra.mxu0 0.0
    %830 = vmatprep.subr.mxu0 0.0
    %831 = vmatpush1.msra.mxu0 0.0
    %832 = vmatprep.subr.mxu0 0.0
    %833 = vmatpush1.msra.mxu0 0.0
    %834 = vmatprep.subr.mxu0 0.0
    %835 = vmatpush1.msra.mxu0 0.0
    %836 = vmatprep.subr.mxu0 0.0
    %837 = vmatpush1.msra.mxu0 0.0
    %838 = vmatprep.subr.mxu0 0.0
    %839 = vmatpush1.msra.mxu0 0.0
    %840 = vmatprep.subr.mxu0 0.0
    %841 = vmatpush1.msra.mxu0 0.0
    %842 = vmatprep.subr.mxu0 0.0
    %843 = vmatpush1.msra.mxu0 0.0
    %844 = vmatprep.subr.mxu0 0.0
    %845 = vmatpush1.msra.mxu0 0.0
    %846 = vmatprep.subr.mxu0 0.0
    %847 = vmatpush1.msra.mxu0 0.0
    %848 = vmatprep.subr.mxu0 0.0
    %849 = vmatpush1.msra.mxu0 0.0
    %850 = vmatprep.subr.mxu0 0.0
    %851 = vmatpush1.msra.mxu0 0.0
    %852 = vmatprep.subr.mxu0 0.0
    %853 = vmatpush1.msra.mxu0 0.0
    %854 = vmatprep.mubr.f32.mxu0 0.0
    %855 = vmatmul.mubr.f32.gmra.mrb[0].mxu0 %v709
    %v856 = vpop.f32.mrb[0].mxu0
    %v857 = vadd.f32 %v126, %v856
    %v858 = vpop.f32.mrb[0].mxu0
    %859 = vmatprep.mubr.f32.mxu0 0.0
    %860 = vmatmul.mubr.f32.gmra.mrb[0].mxu0 %v710
    %v861 = vpop.f32.mrb[0].mxu0
    %v862 = vadd.f32 %v126, %v861
    %v863 = vpop.f32.mrb[0].mxu0
    %864 = vdwg.mxu0
    %v865 = vadd.f32 %v290, %v780
    %v866 = vadd.f32 %v296, %v786
    %v867 = vxor.u32 %v865, 2147483648
    %v868 = vxor.u32 %v866, 2147483648
    %v869 = vmul.f32 %v867, 1.442695
    %v870 = vpow.pop %v869
    %v871 = vmul.f32 %v868, 1.442695
    %v872 = vpow.pop %v871
    %v873 = vadd.f32 %v870, 1.0
    %v874 = vadd.f32 %v872, 1.0
    %v875 = vrcp.pop %v873
    %v876 = vmul.f32 1.0, %v875
    %v877 = vrcp.pop %v874
    %v878 = vmul.f32 1.0, %v877
    %v879 = vadd.f32 %v292, %v782
    %v880 = vadd.f32 %v298, %v788
    %v881 = vxor.u32 %v879, 2147483648
    %v882 = vxor.u32 %v880, 2147483648
    %v883 = vmul.f32 %v881, 1.442695
    %v884 = vpow.pop %v883
    %v885 = vmul.f32 %v882, 1.442695
    %v886 = vpow.pop %v885
    %v887 = vadd.f32 %v884, 1.0
    %v888 = vadd.f32 %v886, 1.0
    %v889 = vrcp.pop %v887
    %v890 = vmul.f32 1.0, %v889
    %v891 = vrcp.pop %v888
    %v892 = vmul.f32 1.0, %v891
    %v893 = vmul.f32 %v876, %v857
    %v894 = vmul.f32 %v878, %v862
    %v895 = vadd.f32 %v449, %v893
    %v896 = vadd.f32 %v454, %v894
    %v897 = vtanh.pop %v895
    %v898 = vtanh.pop %v896
    %v899 = vsub.f32 1.0, %v890
    %v900 = vsub.f32 1.0, %v892
    %v901 = vmul.f32 %v899, %v897
    %v902 = vmul.f32 %v900, %v898
    %v903 = vmul.f32 %v890, %v709
    %v904 = vmul.f32 %v892, %v710
    %v905 = vadd.f32 %v901, %v903
    %v906 = vadd.f32 %v902, %v904
    %s907 = scalar_lea.vmem [#allocation2], 16
    %908 = vst [vmem:[%s907] sm:$0xff] %v905
    %909 = vst [vmem:[%s907 + $0x8] sm:$0xff] %v906
    %910 = vmatprep.subr.mxu0 %v66
    %911 = vmatpush1.msra.mxu0 %v65
    %912 = vmatprep.subr.mxu0 %v69
    %913 = vmatpush1.msra.mxu0 %v68
    %914 = vmatprep.subr.mxu0 %v72
    %915 = vmatpush1.msra.mxu0 %v71
    %916 = vmatprep.subr.mxu0 %v75
    %917 = vmatpush1.msra.mxu0 %v74
    %918 = vmatprep.subr.mxu0 %v78
    %919 = vmatpush1.msra.mxu0 %v77
    %920 = vmatprep.subr.mxu0 %v81
    %921 = vmatpush1.msra.mxu0 %v80
    %922 = vmatprep.subr.mxu0 %v84
    %923 = vmatpush1.msra.mxu0 %v83
    %924 = vmatprep.subr.mxu0 %v87
    %925 = vmatpush1.msra.mxu0 %v86
    %926 = vmatprep.subr.mxu0 %v90
    %927 = vmatpush1.msra.mxu0 %v89
    %928 = vmatprep.subr.mxu0 %v93
    %929 = vmatpush1.msra.mxu0 %v92
    %930 = vmatprep.subr.mxu0 %v96
    %931 = vmatpush1.msra.mxu0 %v95
    %932 = vmatprep.subr.mxu0 %v99
    %933 = vmatpush1.msra.mxu0 %v98
    %934 = vmatprep.subr.mxu0 %v102
    %935 = vmatpush1.msra.mxu0 %v101
    %936 = vmatprep.subr.mxu0 %v105
    %937 = vmatpush1.msra.mxu0 %v104
    %938 = vmatprep.subr.mxu0 %v108
    %939 = vmatpush1.msra.mxu0 %v107
    %940 = vmatprep.subr.mxu0 %v111
    %941 = vmatpush1.msra.mxu0 %v110
    %942 = vmatprep.subr.mxu0 0.0
    %943 = vmatpush1.msra.mxu0 0.0
    %944 = vmatprep.subr.mxu0 0.0
    %945 = vmatpush1.msra.mxu0 0.0
    %946 = vmatprep.subr.mxu0 0.0
    %947 = vmatpush1.msra.mxu0 0.0
    %948 = vmatprep.subr.mxu0 0.0
    %949 = vmatpush1.msra.mxu0 0.0
    %950 = vmatprep.subr.mxu0 0.0
    %951 = vmatpush1.msra.mxu0 0.0
    %952 = vmatprep.subr.mxu0 0.0
    %953 = vmatpush1.msra.mxu0 0.0
    %954 = vmatprep.subr.mxu0 0.0
    %955 = vmatpush1.msra.mxu0 0.0
    %956 = vmatprep.subr.mxu0 0.0
    %957 = vmatpush1.msra.mxu0 0.0
    %958 = vmatprep.subr.mxu0 0.0
    %959 = vmatpush1.msra.mxu0 0.0
    %960 = vmatprep.subr.mxu0 0.0
    %961 = vmatpush1.msra.mxu0 0.0
    %962 = vmatprep.subr.mxu0 0.0
    %963 = vmatpush1.msra.mxu0 0.0
    %964 = vmatprep.subr.mxu0 0.0
    %965 = vmatpush1.msra.mxu0 0.0
    %966 = vmatprep.subr.mxu0 0.0
    %967 = vmatpush1.msra.mxu0 0.0
    %968 = vmatprep.subr.mxu0 0.0
    %969 = vmatpush1.msra.mxu0 0.0
    %970 = vmatprep.subr.mxu0 0.0
    %971 = vmatpush1.msra.mxu0 0.0
    %972 = vmatprep.subr.mxu0 0.0
    %973 = vmatpush1.msra.mxu0 0.0
    %974 = vmatprep.mubr.f32.mxu0 0.0
    %975 = vmatmul.mubr.f32.gmra.mrb[0].mxu0 %v905
    %v976 = vpop.f32.mrb[0].mxu0
    %v977 = vadd.f32 %v118, %v976
    %v978 = vpop.f32.mrb[0].mxu0
    %v979 = vadd.f32 %v122, %v978
    %980 = vmatprep.mubr.f32.mxu0 0.0
    %981 = vmatmul.mubr.f32.gmra.mrb[0].mxu0 %v906
    %v982 = vpop.f32.mrb[0].mxu0
    %v983 = vadd.f32 %v118, %v982
    %v984 = vpop.f32.mrb[0].mxu0
    %v985 = vadd.f32 %v122, %v984
    %986 = vdwg.mxu0
    %987 = vmatprep.subr.mxu0 0.0
    %988 = vmatpush1.msra.mxu0 %v67
    %989 = vmatprep.subr.mxu0 0.0
    %990 = vmatpush1.msra.mxu0 %v70
    %991 = vmatprep.subr.mxu0 0.0
    %992 = vmatpush1.msra.mxu0 %v73
    %993 = vmatprep.subr.mxu0 0.0
    %994 = vmatpush1.msra.mxu0 %v76
    %995 = vmatprep.subr.mxu0 0.0
    %996 = vmatpush1.msra.mxu0 %v79
    %997 = vmatprep.subr.mxu0 0.0
    %998 = vmatpush1.msra.mxu0 %v82
    %999 = vmatprep.subr.mxu0 0.0
    %1000 = vmatpush1.msra.mxu0 %v85
    %1001 = vmatprep.subr.mxu0 0.0
    %1002 = vmatpush1.msra.mxu0 %v88
    %1003 = vmatprep.subr.mxu0 0.0
    %1004 = vmatpush1.msra.mxu0 %v91
    %1005 = vmatprep.subr.mxu0 0.0
    %1006 = vmatpush1.msra.mxu0 %v94
    %1007 = vmatprep.subr.mxu0 0.0
    %1008 = vmatpush1.msra.mxu0 %v97
    %1009 = vmatprep.subr.mxu0 0.0
    %1010 = vmatpush1.msra.mxu0 %v100
    %1011 = vmatprep.subr.mxu0 0.0
    %1012 = vmatpush1.msra.mxu0 %v103
    %1013 = vmatprep.subr.mxu0 0.0
    %1014 = vmatpush1.msra.mxu0 %v106
    %1015 = vmatprep.subr.mxu0 0.0
    %1016 = vmatpush1.msra.mxu0 %v109
    %1017 = vmatprep.subr.mxu0 0.0
    %1018 = vmatpush1.msra.mxu0 %v112
    %1019 = vmatprep.subr.mxu0 0.0
    %1020 = vmatpush1.msra.mxu0 0.0
    %1021 = vmatprep.subr.mxu0 0.0
    %1022 = vmatpush1.msra.mxu0 0.0
    %1023 = vmatprep.subr.mxu0 0.0
    %1024 = vmatpush1.msra.mxu0 0.0
    %1025 = vmatprep.subr.mxu0 0.0
    %1026 = vmatpush1.msra.mxu0 0.0
    %1027 = vmatprep.subr.mxu0 0.0
    %1028 = vmatpush1.msra.mxu0 0.0
    %1029 = vmatprep.subr.mxu0 0.0
    %1030 = vmatpush1.msra.mxu0 0.0
    %1031 = vmatprep.subr.mxu0 0.0
    %1032 = vmatpush1.msra.mxu0 0.0
    %1033 = vmatprep.subr.mxu0 0.0
    %1034 = vmatpush1.msra.mxu0 0.0
    %1035 = vmatprep.subr.mxu0 0.0
    %1036 = vmatpush1.msra.mxu0 0.0
    %1037 = vmatprep.subr.mxu0 0.0
    %1038 = vmatpush1.msra.mxu0 0.0
    %1039 = vmatprep.subr.mxu0 0.0
    %1040 = vmatpush1.msra.mxu0 0.0
    %1041 = vmatprep.subr.mxu0 0.0
    %1042 = vmatpush1.msra.mxu0 0.0
    %1043 = vmatprep.subr.mxu0 0.0
    %1044 = vmatpush1.msra.mxu0 0.0
    %1045 = vmatprep.subr.mxu0 0.0
    %1046 = vmatpush1.msra.mxu0 0.0
    %1047 = vmatprep.subr.mxu0 0.0
    %1048 = vmatpush1.msra.mxu0 0.0
    %1049 = vmatprep.subr.mxu0 0.0
    %1050 = vmatpush1.msra.mxu0 0.0
    %1051 = vmatprep.mubr.f32.mxu0 0.0
    %1052 = vmatmul.mubr.f32.gmra.mrb[0].mxu0 %v905
    %v1053 = vpop.f32.mrb[0].mxu0
    %v1054 = vadd.f32 %v126, %v1053
    %v1055 = vpop.f32.mrb[0].mxu0
    %1056 = vmatprep.mubr.f32.mxu0 0.0
    %1057 = vmatmul.mubr.f32.gmra.mrb[0].mxu0 %v906
    %v1058 = vpop.f32.mrb[0].mxu0
    %v1059 = vadd.f32 %v126, %v1058
    %v1060 = vpop.f32.mrb[0].mxu0
    %1061 = vdwg.mxu0
    %v1062 = vadd.f32 %v302, %v977
    %v1063 = vadd.f32 %v308, %v983
    %v1064 = vxor.u32 %v1062, 2147483648
    %v1065 = vxor.u32 %v1063, 2147483648
    %v1066 = vmul.f32 %v1064, 1.442695
    %v1067 = vpow.pop %v1066
    %v1068 = vmul.f32 %v1065, 1.442695
    %v1069 = vpow.pop %v1068
    %v1070 = vadd.f32 %v1067, 1.0
    %v1071 = vadd.f32 %v1069, 1.0
    %v1072 = vrcp.pop %v1070
    %v1073 = vmul.f32 1.0, %v1072
    %v1074 = vrcp.pop %v1071
    %v1075 = vmul.f32 1.0, %v1074
    %v1076 = vadd.f32 %v304, %v979
    %v1077 = vadd.f32 %v310, %v985
    %v1078 = vxor.u32 %v1076, 2147483648
    %v1079 = vxor.u32 %v1077, 2147483648
    %v1080 = vmul.f32 %v1078, 1.442695
    %v1081 = vpow.pop %v1080
    %v1082 = vmul.f32 %v1079, 1.442695
    %v1083 = vpow.pop %v1082
    %v1084 = vadd.f32 %v1081, 1.0
    %v1085 = vadd.f32 %v1083, 1.0
    %v1086 = vrcp.pop %v1084
    %v1087 = vmul.f32 1.0, %v1086
    %v1088 = vrcp.pop %v1085
    %v1089 = vmul.f32 1.0, %v1088
    %v1090 = vmul.f32 %v1073, %v1054
    %v1091 = vmul.f32 %v1075, %v1059
    %v1092 = vadd.f32 %v459, %v1090
    %v1093 = vadd.f32 %v464, %v1091
    %v1094 = vtanh.pop %v1092
    %v1095 = vtanh.pop %v1093
    %v1096 = vsub.f32 1.0, %v1087
    %v1097 = vsub.f32 1.0, %v1089
    %v1098 = vmul.f32 %v1096, %v1094
    %v1099 = vmul.f32 %v1097, %v1095
    %v1100 = vmul.f32 %v1087, %v905
    %v1101 = vmul.f32 %v1089, %v906
    %v1102 = vadd.f32 %v1098, %v1100
    %v1103 = vadd.f32 %v1099, %v1101
    %s1104 = scalar_lea.vmem [#allocation2], 32
    %1105 = vst [vmem:[%s1104] sm:$0xff] %v1102
    %1106 = vst [vmem:[%s1104 + $0x8] sm:$0xff] %v1103
    %1107 = vmatprep.subr.mxu0 %v66
    %1108 = vmatpush1.msra.mxu0 %v65
    %1109 = vmatprep.subr.mxu0 %v69
    %1110 = vmatpush1.msra.mxu0 %v68
    %1111 = vmatprep.subr.mxu0 %v72
    %1112 = vmatpush1.msra.mxu0 %v71
    %1113 = vmatprep.subr.mxu0 %v75
    %1114 = vmatpush1.msra.mxu0 %v74
    %1115 = vmatprep.subr.mxu0 %v78
    %1116 = vmatpush1.msra.mxu0 %v77
    %1117 = vmatprep.subr.mxu0 %v81
    %1118 = vmatpush1.msra.mxu0 %v80
    %1119 = vmatprep.subr.mxu0 %v84
    %1120 = vmatpush1.msra.mxu0 %v83
    %1121 = vmatprep.subr.mxu0 %v87
    %1122 = vmatpush1.msra.mxu0 %v86
    %1123 = vmatprep.subr.mxu0 %v90
    %1124 = vmatpush1.msra.mxu0 %v89
    %1125 = vmatprep.subr.mxu0 %v93
    %1126 = vmatpush1.msra.mxu0 %v92
    %1127 = vmatprep.subr.mxu0 %v96
    %1128 = vmatpush1.msra.mxu0 %v95
    %1129 = vmatprep.subr.mxu0 %v99
    %1130 = vmatpush1.msra.mxu0 %v98
    %1131 = vmatprep.subr.mxu0 %v102
    %1132 = vmatpush1.msra.mxu0 %v101
    %1133 = vmatprep.subr.mxu0 %v105
    %1134 = vmatpush1.msra.mxu0 %v104
    %1135 = vmatprep.subr.mxu0 %v108
    %1136 = vmatpush1.msra.mxu0 %v107
    %1137 = vmatprep.subr.mxu0 %v111
    %1138 = vmatpush1.msra.mxu0 %v110
    %1139 = vmatprep.subr.mxu0 0.0
    %1140 = vmatpush1.msra.mxu0 0.0
    %1141 = vmatprep.subr.mxu0 0.0
    %1142 = vmatpush1.msra.mxu0 0.0
    %1143 = vmatprep.subr.mxu0 0.0
    %1144 = vmatpush1.msra.mxu0 0.0
    %1145 = vmatprep.subr.mxu0 0.0
    %1146 = vmatpush1.msra.mxu0 0.0
    %1147 = vmatprep.subr.mxu0 0.0
    %1148 = vmatpush1.msra.mxu0 0.0
    %1149 = vmatprep.subr.mxu0 0.0
    %1150 = vmatpush1.msra.mxu0 0.0
    %1151 = vmatprep.subr.mxu0 0.0
    %1152 = vmatpush1.msra.mxu0 0.0
    %1153 = vmatprep.subr.mxu0 0.0
    %1154 = vmatpush1.msra.mxu0 0.0
    %1155 = vmatprep.subr.mxu0 0.0
    %1156 = vmatpush1.msra.mxu0 0.0
    %1157 = vmatprep.subr.mxu0 0.0
    %1158 = vmatpush1.msra.mxu0 0.0
    %1159 = vmatprep.subr.mxu0 0.0
    %1160 = vmatpush1.msra.mxu0 0.0
    %1161 = vmatprep.subr.mxu0 0.0
    %1162 = vmatpush1.msra.mxu0 0.0
    %1163 = vmatprep.subr.mxu0 0.0
    %1164 = vmatpush1.msra.mxu0 0.0
    %1165 = vmatprep.subr.mxu0 0.0
    %1166 = vmatpush1.msra.mxu0 0.0
    %1167 = vmatprep.subr.mxu0 0.0
    %1168 = vmatpush1.msra.mxu0 0.0
    %1169 = vmatprep.subr.mxu0 0.0
    %1170 = vmatpush1.msra.mxu0 0.0
    %1171 = vmatprep.mubr.f32.mxu0 0.0
    %1172 = vmatmul.mubr.f32.gmra.mrb[0].mxu0 %v1102
    %v1173 = vpop.f32.mrb[0].mxu0
    %v1174 = vadd.f32 %v118, %v1173
    %v1175 = vpop.f32.mrb[0].mxu0
    %v1176 = vadd.f32 %v122, %v1175
    %1177 = vmatprep.mubr.f32.mxu0 0.0
    %1178 = vmatmul.mubr.f32.gmra.mrb[0].mxu0 %v1103
    %v1179 = vpop.f32.mrb[0].mxu0
    %v1180 = vadd.f32 %v118, %v1179
    %v1181 = vpop.f32.mrb[0].mxu0
    %v1182 = vadd.f32 %v122, %v1181
    %1183 = vdwg.mxu0
    %1184 = vmatprep.subr.mxu0 0.0
    %1185 = vmatpush1.msra.mxu0 %v67
    %1186 = vmatprep.subr.mxu0 0.0
    %1187 = vmatpush1.msra.mxu0 %v70
    %1188 = vmatprep.subr.mxu0 0.0
    %1189 = vmatpush1.msra.mxu0 %v73
    %1190 = vmatprep.subr.mxu0 0.0
    %1191 = vmatpush1.msra.mxu0 %v76
    %1192 = vmatprep.subr.mxu0 0.0
    %1193 = vmatpush1.msra.mxu0 %v79
    %1194 = vmatprep.subr.mxu0 0.0
    %1195 = vmatpush1.msra.mxu0 %v82
    %1196 = vmatprep.subr.mxu0 0.0
    %1197 = vmatpush1.msra.mxu0 %v85
    %1198 = vmatprep.subr.mxu0 0.0
    %1199 = vmatpush1.msra.mxu0 %v88
    %1200 = vmatprep.subr.mxu0 0.0
    %1201 = vmatpush1.msra.mxu0 %v91
    %1202 = vmatprep.subr.mxu0 0.0
    %1203 = vmatpush1.msra.mxu0 %v94
    %1204 = vmatprep.subr.mxu0 0.0
    %1205 = vmatpush1.msra.mxu0 %v97
    %1206 = vmatprep.subr.mxu0 0.0
    %1207 = vmatpush1.msra.mxu0 %v100
    %1208 = vmatprep.subr.mxu0 0.0
    %1209 = vmatpush1.msra.mxu0 %v103
    %1210 = vmatprep.subr.mxu0 0.0
    %1211 = vmatpush1.msra.mxu0 %v106
    %1212 = vmatprep.subr.mxu0 0.0
    %1213 = vmatpush1.msra.mxu0 %v109
    %1214 = vmatprep.subr.mxu0 0.0
    %1215 = vmatpush1.msra.mxu0 %v112
    %1216 = vmatprep.subr.mxu0 0.0
    %1217 = vmatpush1.msra.mxu0 0.0
    %1218 = vmatprep.subr.mxu0 0.0
    %1219 = vmatpush1.msra.mxu0 0.0
    %1220 = vmatprep.subr.mxu0 0.0
    %1221 = vmatpush1.msra.mxu0 0.0
    %1222 = vmatprep.subr.mxu0 0.0
    %1223 = vmatpush1.msra.mxu0 0.0
    %1224 = vmatprep.subr.mxu0 0.0
    %1225 = vmatpush1.msra.mxu0 0.0
    %1226 = vmatprep.subr.mxu0 0.0
    %1227 = vmatpush1.msra.mxu0 0.0
    %1228 = vmatprep.subr.mxu0 0.0
    %1229 = vmatpush1.msra.mxu0 0.0
    %1230 = vmatprep.subr.mxu0 0.0
    %1231 = vmatpush1.msra.mxu0 0.0
    %1232 = vmatprep.subr.mxu0 0.0
    %1233 = vmatpush1.msra.mxu0 0.0
    %1234 = vmatprep.subr.mxu0 0.0
    %1235 = vmatpush1.msra.mxu0 0.0
    %1236 = vmatprep.subr.mxu0 0.0
    %1237 = vmatpush1.msra.mxu0 0.0
    %1238 = vmatprep.subr.mxu0 0.0
    %1239 = vmatpush1.msra.mxu0 0.0
    %1240 = vmatprep.subr.mxu0 0.0
    %1241 = vmatpush1.msra.mxu0 0.0
    %1242 = vmatprep.subr.mxu0 0.0
    %1243 = vmatpush1.msra.mxu0 0.0
    %1244 = vmatprep.subr.mxu0 0.0
    %1245 = vmatpush1.msra.mxu0 0.0
    %1246 = vmatprep.subr.mxu0 0.0
    %1247 = vmatpush1.msra.mxu0 0.0
    %1248 = vmatprep.mubr.f32.mxu0 0.0
    %1249 = vmatmul.mubr.f32.gmra.mrb[0].mxu0 %v1102
    %v1250 = vpop.f32.mrb[0].mxu0
    %v1251 = vadd.f32 %v126, %v1250
    %v1252 = vpop.f32.mrb[0].mxu0
    %1253 = vmatprep.mubr.f32.mxu0 0.0
    %1254 = vmatmul.mubr.f32.gmra.mrb[0].mxu0 %v1103
    %v1255 = vpop.f32.mrb[0].mxu0
    %v1256 = vadd.f32 %v126, %v1255
    %v1257 = vpop.f32.mrb[0].mxu0
    %1258 = vdwg.mxu0
    %v1259 = vadd.f32 %v314, %v1174
    %v1260 = vadd.f32 %v320, %v1180
    %v1261 = vxor.u32 %v1259, 2147483648
    %v1262 = vxor.u32 %v1260, 2147483648
    %v1263 = vmul.f32 %v1261, 1.442695
    %v1264 = vpow.pop %v1263
    %v1265 = vmul.f32 %v1262, 1.442695
    %v1266 = vpow.pop %v1265
    %v1267 = vadd.f32 %v1264, 1.0
    %v1268 = vadd.f32 %v1266, 1.0
    %v1269 = vrcp.pop %v1267
    %v1270 = vmul.f32 1.0, %v1269
    %v1271 = vrcp.pop %v1268
    %v1272 = vmul.f32 1.0, %v1271
    %v1273 = vadd.f32 %v316, %v1176
    %v1274 = vadd.f32 %v322, %v1182
    %v1275 = vxor.u32 %v1273, 2147483648
    %v1276 = vxor.u32 %v1274, 2147483648
    %v1277 = vmul.f32 %v1275, 1.442695
    %v1278 = vpow.pop %v1277
    %v1279 = vmul.f32 %v1276, 1.442695
    %v1280 = vpow.pop %v1279
    %v1281 = vadd.f32 %v1278, 1.0
    %v1282 = vadd.f32 %v1280, 1.0
    %v1283 = vrcp.pop %v1281
    %v1284 = vmul.f32 1.0, %v1283
    %v1285 = vrcp.pop %v1282
    %v1286 = vmul.f32 1.0, %v1285
    %v1287 = vmul.f32 %v1270, %v1251
    %v1288 = vmul.f32 %v1272, %v1256
    %v1289 = vadd.f32 %v469, %v1287
    %v1290 = vadd.f32 %v474, %v1288
    %v1291 = vtanh.pop %v1289
    %v1292 = vtanh.pop %v1290
    %v1293 = vsub.f32 1.0, %v1284
    %v1294 = vsub.f32 1.0, %v1286
    %v1295 = vmul.f32 %v1293, %v1291
    %v1296 = vmul.f32 %v1294, %v1292
    %v1297 = vmul.f32 %v1284, %v1102
    %v1298 = vmul.f32 %v1286, %v1103
    %v1299 = vadd.f32 %v1295, %v1297
    %v1300 = vadd.f32 %v1296, %v1298
    %s1301 = scalar_lea.vmem [#allocation2], 48
    %1302 = vst [vmem:[%s1301] sm:$0xff] %v1299
    %1303 = vst [vmem:[%s1301 + $0x8] sm:$0xff] %v1300
    %1304 = vmatprep.subr.mxu0 %v66
    %1305 = vmatpush1.msra.mxu0 %v65
    %1306 = vmatprep.subr.mxu0 %v69
    %1307 = vmatpush1.msra.mxu0 %v68
    %1308 = vmatprep.subr.mxu0 %v72
    %1309 = vmatpush1.msra.mxu0 %v71
    %1310 = vmatprep.subr.mxu0 %v75
    %1311 = vmatpush1.msra.mxu0 %v74
    %1312 = vmatprep.subr.mxu0 %v78
    %1313 = vmatpush1.msra.mxu0 %v77
    %1314 = vmatprep.subr.mxu0 %v81
    %1315 = vmatpush1.msra.mxu0 %v80
    %1316 = vmatprep.subr.mxu0 %v84
    %1317 = vmatpush1.msra.mxu0 %v83
    %1318 = vmatprep.subr.mxu0 %v87
    %1319 = vmatpush1.msra.mxu0 %v86
    %1320 = vmatprep.subr.mxu0 %v90
    %1321 = vmatpush1.msra.mxu0 %v89
    %1322 = vmatprep.subr.mxu0 %v93
    %1323 = vmatpush1.msra.mxu0 %v92
    %1324 = vmatprep.subr.mxu0 %v96
    %1325 = vmatpush1.msra.mxu0 %v95
    %1326 = vmatprep.subr.mxu0 %v99
    %1327 = vmatpush1.msra.mxu0 %v98
    %1328 = vmatprep.subr.mxu0 %v102
    %1329 = vmatpush1.msra.mxu0 %v101
    %1330 = vmatprep.subr.mxu0 %v105
    %1331 = vmatpush1.msra.mxu0 %v104
    %1332 = vmatprep.subr.mxu0 %v108
    %1333 = vmatpush1.msra.mxu0 %v107
    %1334 = vmatprep.subr.mxu0 %v111
    %1335 = vmatpush1.msra.mxu0 %v110
    %1336 = vmatprep.subr.mxu0 0.0
    %1337 = vmatpush1.msra.mxu0 0.0
    %1338 = vmatprep.subr.mxu0 0.0
    %1339 = vmatpush1.msra.mxu0 0.0
    %1340 = vmatprep.subr.mxu0 0.0
    %1341 = vmatpush1.msra.mxu0 0.0
    %1342 = vmatprep.subr.mxu0 0.0
    %1343 = vmatpush1.msra.mxu0 0.0
    %1344 = vmatprep.subr.mxu0 0.0
    %1345 = vmatpush1.msra.mxu0 0.0
    %1346 = vmatprep.subr.mxu0 0.0
    %1347 = vmatpush1.msra.mxu0 0.0
    %1348 = vmatprep.subr.mxu0 0.0
    %1349 = vmatpush1.msra.mxu0 0.0
    %1350 = vmatprep.subr.mxu0 0.0
    %1351 = vmatpush1.msra.mxu0 0.0
    %1352 = vmatprep.subr.mxu0 0.0
    %1353 = vmatpush1.msra.mxu0 0.0
    %1354 = vmatprep.subr.mxu0 0.0
    %1355 = vmatpush1.msra.mxu0 0.0
    %1356 = vmatprep.subr.mxu0 0.0
    %1357 = vmatpush1.msra.mxu0 0.0
    %1358 = vmatprep.subr.mxu0 0.0
    %1359 = vmatpush1.msra.mxu0 0.0
    %1360 = vmatprep.subr.mxu0 0.0
    %1361 = vmatpush1.msra.mxu0 0.0
    %1362 = vmatprep.subr.mxu0 0.0
    %1363 = vmatpush1.msra.mxu0 0.0
    %1364 = vmatprep.subr.mxu0 0.0
    %1365 = vmatpush1.msra.mxu0 0.0
    %1366 = vmatprep.subr.mxu0 0.0
    %1367 = vmatpush1.msra.mxu0 0.0
    %1368 = vmatprep.mubr.f32.mxu0 0.0
    %1369 = vmatmul.mubr.f32.gmra.mrb[0].mxu0 %v1299
    %v1370 = vpop.f32.mrb[0].mxu0
    %v1371 = vadd.f32 %v118, %v1370
    %v1372 = vpop.f32.mrb[0].mxu0
    %v1373 = vadd.f32 %v122, %v1372
    %1374 = vmatprep.mubr.f32.mxu0 0.0
    %1375 = vmatmul.mubr.f32.gmra.mrb[0].mxu0 %v1300
    %v1376 = vpop.f32.mrb[0].mxu0
    %v1377 = vadd.f32 %v118, %v1376
    %v1378 = vpop.f32.mrb[0].mxu0
    %v1379 = vadd.f32 %v122, %v1378
    %1380 = vdwg.mxu0
    %1381 = vmatprep.subr.mxu0 0.0
    %1382 = vmatpush1.msra.mxu0 %v67
    %1383 = vmatprep.subr.mxu0 0.0
    %1384 = vmatpush1.msra.mxu0 %v70
    %1385 = vmatprep.subr.mxu0 0.0
    %1386 = vmatpush1.msra.mxu0 %v73
    %1387 = vmatprep.subr.mxu0 0.0
    %1388 = vmatpush1.msra.mxu0 %v76
    %1389 = vmatprep.subr.mxu0 0.0
    %1390 = vmatpush1.msra.mxu0 %v79
    %1391 = vmatprep.subr.mxu0 0.0
    %1392 = vmatpush1.msra.mxu0 %v82
    %1393 = vmatprep.subr.mxu0 0.0
    %1394 = vmatpush1.msra.mxu0 %v85
    %1395 = vmatprep.subr.mxu0 0.0
    %1396 = vmatpush1.msra.mxu0 %v88
    %1397 = vmatprep.subr.mxu0 0.0
    %1398 = vmatpush1.msra.mxu0 %v91
    %1399 = vmatprep.subr.mxu0 0.0
    %1400 = vmatpush1.msra.mxu0 %v94
    %1401 = vmatprep.subr.mxu0 0.0
    %1402 = vmatpush1.msra.mxu0 %v97
    %1403 = vmatprep.subr.mxu0 0.0
    %1404 = vmatpush1.msra.mxu0 %v100
    %1405 = vmatprep.subr.mxu0 0.0
    %1406 = vmatpush1.msra.mxu0 %v103
    %1407 = vmatprep.subr.mxu0 0.0
    %1408 = vmatpush1.msra.mxu0 %v106
    %1409 = vmatprep.subr.mxu0 0.0
    %1410 = vmatpush1.msra.mxu0 %v109
    %1411 = vmatprep.subr.mxu0 0.0
    %1412 = vmatpush1.msra.mxu0 %v112
    %1413 = vmatprep.subr.mxu0 0.0
    %1414 = vmatpush1.msra.mxu0 0.0
    %1415 = vmatprep.subr.mxu0 0.0
    %1416 = vmatpush1.msra.mxu0 0.0
    %1417 = vmatprep.subr.mxu0 0.0
    %1418 = vmatpush1.msra.mxu0 0.0
    %1419 = vmatprep.subr.mxu0 0.0
    %1420 = vmatpush1.msra.mxu0 0.0
    %1421 = vmatprep.subr.mxu0 0.0
    %1422 = vmatpush1.msra.mxu0 0.0
    %1423 = vmatprep.subr.mxu0 0.0
    %1424 = vmatpush1.msra.mxu0 0.0
    %1425 = vmatprep.subr.mxu0 0.0
    %1426 = vmatpush1.msra.mxu0 0.0
    %1427 = vmatprep.subr.mxu0 0.0
    %1428 = vmatpush1.msra.mxu0 0.0
    %1429 = vmatprep.subr.mxu0 0.0
    %1430 = vmatpush1.msra.mxu0 0.0
    %1431 = vmatprep.subr.mxu0 0.0
    %1432 = vmatpush1.msra.mxu0 0.0
    %1433 = vmatprep.subr.mxu0 0.0
    %1434 = vmatpush1.msra.mxu0 0.0
    %1435 = vmatprep.subr.mxu0 0.0
    %1436 = vmatpush1.msra.mxu0 0.0
    %1437 = vmatprep.subr.mxu0 0.0
    %1438 = vmatpush1.msra.mxu0 0.0
    %1439 = vmatprep.subr.mxu0 0.0
    %1440 = vmatpush1.msra.mxu0 0.0
    %1441 = vmatprep.subr.mxu0 0.0
    %1442 = vmatpush1.msra.mxu0 0.0
    %1443 = vmatprep.subr.mxu0 0.0
    %1444 = vmatpush1.msra.mxu0 0.0
    %1445 = vmatprep.mubr.f32.mxu0 0.0
    %1446 = vmatmul.mubr.f32.gmra.mrb[0].mxu0 %v1299
    %v1447 = vpop.f32.mrb[0].mxu0
    %v1448 = vadd.f32 %v126, %v1447
    %v1449 = vpop.f32.mrb[0].mxu0
    %1450 = vmatprep.mubr.f32.mxu0 0.0
    %1451 = vmatmul.mubr.f32.gmra.mrb[0].mxu0 %v1300
    %v1452 = vpop.f32.mrb[0].mxu0
    %v1453 = vadd.f32 %v126, %v1452
    %v1454 = vpop.f32.mrb[0].mxu0
    %1455 = vdwg.mxu0
    %v1456 = vadd.f32 %v326, %v1371
    %v1457 = vadd.f32 %v332, %v1377
    %v1458 = vxor.u32 %v1456, 2147483648
    %v1459 = vxor.u32 %v1457, 2147483648
    %v1460 = vmul.f32 %v1458, 1.442695
    %v1461 = vpow.pop %v1460
    %v1462 = vmul.f32 %v1459, 1.442695
    %v1463 = vpow.pop %v1462
    %v1464 = vadd.f32 %v1461, 1.0
    %v1465 = vadd.f32 %v1463, 1.0
    %v1466 = vrcp.pop %v1464
    %v1467 = vmul.f32 1.0, %v1466
    %v1468 = vrcp.pop %v1465
    %v1469 = vmul.f32 1.0, %v1468
    %v1470 = vadd.f32 %v328, %v1373
    %v1471 = vadd.f32 %v334, %v1379
    %v1472 = vxor.u32 %v1470, 2147483648
    %v1473 = vxor.u32 %v1471, 2147483648
    %v1474 = vmul.f32 %v1472, 1.442695
    %v1475 = vpow.pop %v1474
    %v1476 = vmul.f32 %v1473, 1.442695
    %v1477 = vpow.pop %v1476
    %v1478 = vadd.f32 %v1475, 1.0
    %v1479 = vadd.f32 %v1477, 1.0
    %v1480 = vrcp.pop %v1478
    %v1481 = vmul.f32 1.0, %v1480
    %v1482 = vrcp.pop %v1479
    %v1483 = vmul.f32 1.0, %v1482
    %v1484 = vmul.f32 %v1467, %v1448
    %v1485 = vmul.f32 %v1469, %v1453
    %v1486 = vadd.f32 %v479, %v1484
    %v1487 = vadd.f32 %v484, %v1485
    %v1488 = vtanh.pop %v1486
    %v1489 = vtanh.pop %v1487
    %v1490 = vsub.f32 1.0, %v1481
    %v1491 = vsub.f32 1.0, %v1483
    %v1492 = vmul.f32 %v1490, %v1488
    %v1493 = vmul.f32 %v1491, %v1489
    %v1494 = vmul.f32 %v1481, %v1299
    %v1495 = vmul.f32 %v1483, %v1300
    %v1496 = vadd.f32 %v1492, %v1494
    %v1497 = vadd.f32 %v1493, %v1495
    %s1498 = scalar_lea.vmem [#allocation2], 64
    %1499 = vst [vmem:[%s1498] sm:$0xff] %v1496
    %1500 = vst [vmem:[%s1498 + $0x8] sm:$0xff] %v1497
    %1501 = vmatprep.subr.mxu0 %v66
    %1502 = vmatpush1.msra.mxu0 %v65
    %1503 = vmatprep.subr.mxu0 %v69
    %1504 = vmatpush1.msra.mxu0 %v68
    %1505 = vmatprep.subr.mxu0 %v72
    %1506 = vmatpush1.msra.mxu0 %v71
    %1507 = vmatprep.subr.mxu0 %v75
    %1508 = vmatpush1.msra.mxu0 %v74
    %1509 = vmatprep.subr.mxu0 %v78
    %1510 = vmatpush1.msra.mxu0 %v77
    %1511 = vmatprep.subr.mxu0 %v81
    %1512 = vmatpush1.msra.mxu0 %v80
    %1513 = vmatprep.subr.mxu0 %v84
    %1514 = vmatpush1.msra.mxu0 %v83
    %1515 = vmatprep.subr.mxu0 %v87
    %1516 = vmatpush1.msra.mxu0 %v86
    %1517 = vmatprep.subr.mxu0 %v90
    %1518 = vmatpush1.msra.mxu0 %v89
    %1519 = vmatprep.subr.mxu0 %v93
    %1520 = vmatpush1.msra.mxu0 %v92
    %1521 = vmatprep.subr.mxu0 %v96
    %1522 = vmatpush1.msra.mxu0 %v95
    %1523 = vmatprep.subr.mxu0 %v99
    %1524 = vmatpush1.msra.mxu0 %v98
    %1525 = vmatprep.subr.mxu0 %v102
    %1526 = vmatpush1.msra.mxu0 %v101
    %1527 = vmatprep.subr.mxu0 %v105
    %1528 = vmatpush1.msra.mxu0 %v104
    %1529 = vmatprep.subr.mxu0 %v108
    %1530 = vmatpush1.msra.mxu0 %v107
    %1531 = vmatprep.subr.mxu0 %v111
    %1532 = vmatpush1.msra.mxu0 %v110
    %1533 = vmatprep.subr.mxu0 0.0
    %1534 = vmatpush1.msra.mxu0 0.0
    %1535 = vmatprep.subr.mxu0 0.0
    %1536 = vmatpush1.msra.mxu0 0.0
    %1537 = vmatprep.subr.mxu0 0.0
    %1538 = vmatpush1.msra.mxu0 0.0
    %1539 = vmatprep.subr.mxu0 0.0
    %1540 = vmatpush1.msra.mxu0 0.0
    %1541 = vmatprep.subr.mxu0 0.0
    %1542 = vmatpush1.msra.mxu0 0.0
    %1543 = vmatprep.subr.mxu0 0.0
    %1544 = vmatpush1.msra.mxu0 0.0
    %1545 = vmatprep.subr.mxu0 0.0
    %1546 = vmatpush1.msra.mxu0 0.0
    %1547 = vmatprep.subr.mxu0 0.0
    %1548 = vmatpush1.msra.mxu0 0.0
    %1549 = vmatprep.subr.mxu0 0.0
    %1550 = vmatpush1.msra.mxu0 0.0
    %1551 = vmatprep.subr.mxu0 0.0
    %1552 = vmatpush1.msra.mxu0 0.0
    %1553 = vmatprep.subr.mxu0 0.0
    %1554 = vmatpush1.msra.mxu0 0.0
    %1555 = vmatprep.subr.mxu0 0.0
    %1556 = vmatpush1.msra.mxu0 0.0
    %1557 = vmatprep.subr.mxu0 0.0
    %1558 = vmatpush1.msra.mxu0 0.0
    %1559 = vmatprep.subr.mxu0 0.0
    %1560 = vmatpush1.msra.mxu0 0.0
    %1561 = vmatprep.subr.mxu0 0.0
    %1562 = vmatpush1.msra.mxu0 0.0
    %1563 = vmatprep.subr.mxu0 0.0
    %1564 = vmatpush1.msra.mxu0 0.0
    %1565 = vmatprep.mubr.f32.mxu0 0.0
    %1566 = vmatmul.mubr.f32.gmra.mrb[0].mxu0 %v1496
    %v1567 = vpop.f32.mrb[0].mxu0
    %v1568 = vadd.f32 %v118, %v1567
    %v1569 = vpop.f32.mrb[0].mxu0
    %v1570 = vadd.f32 %v122, %v1569
    %1571 = vmatprep.mubr.f32.mxu0 0.0
    %1572 = vmatmul.mubr.f32.gmra.mrb[0].mxu0 %v1497
    %v1573 = vpop.f32.mrb[0].mxu0
    %v1574 = vadd.f32 %v118, %v1573
    %v1575 = vpop.f32.mrb[0].mxu0
    %v1576 = vadd.f32 %v122, %v1575
    %1577 = vdwg.mxu0
    %1578 = vmatprep.subr.mxu0 0.0
    %1579 = vmatpush1.msra.mxu0 %v67
    %1580 = vmatprep.subr.mxu0 0.0
    %1581 = vmatpush1.msra.mxu0 %v70
    %1582 = vmatprep.subr.mxu0 0.0
    %1583 = vmatpush1.msra.mxu0 %v73
    %1584 = vmatprep.subr.mxu0 0.0
    %1585 = vmatpush1.msra.mxu0 %v76
    %1586 = vmatprep.subr.mxu0 0.0
    %1587 = vmatpush1.msra.mxu0 %v79
    %1588 = vmatprep.subr.mxu0 0.0
    %1589 = vmatpush1.msra.mxu0 %v82
    %1590 = vmatprep.subr.mxu0 0.0
    %1591 = vmatpush1.msra.mxu0 %v85
    %1592 = vmatprep.subr.mxu0 0.0
    %1593 = vmatpush1.msra.mxu0 %v88
    %1594 = vmatprep.subr.mxu0 0.0
    %1595 = vmatpush1.msra.mxu0 %v91
    %1596 = vmatprep.subr.mxu0 0.0
    %1597 = vmatpush1.msra.mxu0 %v94
    %1598 = vmatprep.subr.mxu0 0.0
    %1599 = vmatpush1.msra.mxu0 %v97
    %1600 = vmatprep.subr.mxu0 0.0
    %1601 = vmatpush1.msra.mxu0 %v100
    %1602 = vmatprep.subr.mxu0 0.0
    %1603 = vmatpush1.msra.mxu0 %v103
    %1604 = vmatprep.subr.mxu0 0.0
    %1605 = vmatpush1.msra.mxu0 %v106
    %1606 = vmatprep.subr.mxu0 0.0
    %1607 = vmatpush1.msra.mxu0 %v109
    %1608 = vmatprep.subr.mxu0 0.0
    %1609 = vmatpush1.msra.mxu0 %v112
    %1610 = vmatprep.subr.mxu0 0.0
    %1611 = vmatpush1.msra.mxu0 0.0
    %1612 = vmatprep.subr.mxu0 0.0
    %1613 = vmatpush1.msra.mxu0 0.0
    %1614 = vmatprep.subr.mxu0 0.0
    %1615 = vmatpush1.msra.mxu0 0.0
    %1616 = vmatprep.subr.mxu0 0.0
    %1617 = vmatpush1.msra.mxu0 0.0
    %1618 = vmatprep.subr.mxu0 0.0
    %1619 = vmatpush1.msra.mxu0 0.0
    %1620 = vmatprep.subr.mxu0 0.0
    %1621 = vmatpush1.msra.mxu0 0.0
    %1622 = vmatprep.subr.mxu0 0.0
    %1623 = vmatpush1.msra.mxu0 0.0
    %1624 = vmatprep.subr.mxu0 0.0
    %1625 = vmatpush1.msra.mxu0 0.0
    %1626 = vmatprep.subr.mxu0 0.0
    %1627 = vmatpush1.msra.mxu0 0.0
    %1628 = vmatprep.subr.mxu0 0.0
    %1629 = vmatpush1.msra.mxu0 0.0
    %1630 = vmatprep.subr.mxu0 0.0
    %1631 = vmatpush1.msra.mxu0 0.0
    %1632 = vmatprep.subr.mxu0 0.0
    %1633 = vmatpush1.msra.mxu0 0.0
    %1634 = vmatprep.subr.mxu0 0.0
    %1635 = vmatpush1.msra.mxu0 0.0
    %1636 = vmatprep.subr.mxu0 0.0
    %1637 = vmatpush1.msra.mxu0 0.0
    %1638 = vmatprep.subr.mxu0 0.0
    %1639 = vmatpush1.msra.mxu0 0.0
    %1640 = vmatprep.subr.mxu0 0.0
    %1641 = vmatpush1.msra.mxu0 0.0
    %1642 = vmatprep.mubr.f32.mxu0 0.0
    %1643 = vmatmul.mubr.f32.gmra.mrb[0].mxu0 %v1496
    %v1644 = vpop.f32.mrb[0].mxu0
    %v1645 = vadd.f32 %v126, %v1644
    %v1646 = vpop.f32.mrb[0].mxu0
    %1647 = vmatprep.mubr.f32.mxu0 0.0
    %1648 = vmatmul.mubr.f32.gmra.mrb[0].mxu0 %v1497
    %v1649 = vpop.f32.mrb[0].mxu0
    %v1650 = vadd.f32 %v126, %v1649
    %v1651 = vpop.f32.mrb[0].mxu0
    %1652 = vdwg.mxu0
    %v1653 = vadd.f32 %v338, %v1568
    %v1654 = vadd.f32 %v344, %v1574
    %v1655 = vxor.u32 %v1653, 2147483648
    %v1656 = vxor.u32 %v1654, 2147483648
    %v1657 = vmul.f32 %v1655, 1.442695
    %v1658 = vpow.pop %v1657
    %v1659 = vmul.f32 %v1656, 1.442695
    %v1660 = vpow.pop %v1659
    %v1661 = vadd.f32 %v1658, 1.0
    %v1662 = vadd.f32 %v1660, 1.0
    %v1663 = vrcp.pop %v1661
    %v1664 = vmul.f32 1.0, %v1663
    %v1665 = vrcp.pop %v1662
    %v1666 = vmul.f32 1.0, %v1665
    %v1667 = vadd.f32 %v340, %v1570
    %v1668 = vadd.f32 %v346, %v1576
    %v1669 = vxor.u32 %v1667, 2147483648
    %v1670 = vxor.u32 %v1668, 2147483648
    %v1671 = vmul.f32 %v1669, 1.442695
    %v1672 = vpow.pop %v1671
    %v1673 = vmul.f32 %v1670, 1.442695
    %v1674 = vpow.pop %v1673
    %v1675 = vadd.f32 %v1672, 1.0
    %v1676 = vadd.f32 %v1674, 1.0
    %v1677 = vrcp.pop %v1675
    %v1678 = vmul.f32 1.0, %v1677
    %v1679 = vrcp.pop %v1676
    %v1680 = vmul.f32 1.0, %v1679
    %v1681 = vmul.f32 %v1664, %v1645
    %v1682 = vmul.f32 %v1666, %v1650
    %v1683 = vadd.f32 %v489, %v1681
    %v1684 = vadd.f32 %v494, %v1682
    %v1685 = vtanh.pop %v1683
    %v1686 = vtanh.pop %v1684
    %v1687 = vsub.f32 1.0, %v1678
    %v1688 = vsub.f32 1.0, %v1680
    %v1689 = vmul.f32 %v1687, %v1685
    %v1690 = vmul.f32 %v1688, %v1686
    %v1691 = vmul.f32 %v1678, %v1496
    %v1692 = vmul.f32 %v1680, %v1497
    %v1693 = vadd.f32 %v1689, %v1691
    %v1694 = vadd.f32 %v1690, %v1692
    %s1695 = scalar_lea.vmem [#allocation2], 80
    %1696 = vst [vmem:[%s1695] sm:$0xff] %v1693
    %1697 = vst [vmem:[%s1695 + $0x8] sm:$0xff] %v1694
    %1698 = vmatprep.subr.mxu0 %v66
    %1699 = vmatpush1.msra.mxu0 %v65
    %1700 = vmatprep.subr.mxu0 %v69
    %1701 = vmatpush1.msra.mxu0 %v68
    %1702 = vmatprep.subr.mxu0 %v72
    %1703 = vmatpush1.msra.mxu0 %v71
    %1704 = vmatprep.subr.mxu0 %v75
    %1705 = vmatpush1.msra.mxu0 %v74
    %1706 = vmatprep.subr.mxu0 %v78
    %1707 = vmatpush1.msra.mxu0 %v77
    %1708 = vmatprep.subr.mxu0 %v81
    %1709 = vmatpush1.msra.mxu0 %v80
    %1710 = vmatprep.subr.mxu0 %v84
    %1711 = vmatpush1.msra.mxu0 %v83
    %1712 = vmatprep.subr.mxu0 %v87
    %1713 = vmatpush1.msra.mxu0 %v86
    %1714 = vmatprep.subr.mxu0 %v90
    %1715 = vmatpush1.msra.mxu0 %v89
    %1716 = vmatprep.subr.mxu0 %v93
    %1717 = vmatpush1.msra.mxu0 %v92
    %1718 = vmatprep.subr.mxu0 %v96
    %1719 = vmatpush1.msra.mxu0 %v95
    %1720 = vmatprep.subr.mxu0 %v99
    %1721 = vmatpush1.msra.mxu0 %v98
    %1722 = vmatprep.subr.mxu0 %v102
    %1723 = vmatpush1.msra.mxu0 %v101
    %1724 = vmatprep.subr.mxu0 %v105
    %1725 = vmatpush1.msra.mxu0 %v104
    %1726 = vmatprep.subr.mxu0 %v108
    %1727 = vmatpush1.msra.mxu0 %v107
    %1728 = vmatprep.subr.mxu0 %v111
    %1729 = vmatpush1.msra.mxu0 %v110
    %1730 = vmatprep.subr.mxu0 0.0
    %1731 = vmatpush1.msra.mxu0 0.0
    %1732 = vmatprep.subr.mxu0 0.0
    %1733 = vmatpush1.msra.mxu0 0.0
    %1734 = vmatprep.subr.mxu0 0.0
    %1735 = vmatpush1.msra.mxu0 0.0
    %1736 = vmatprep.subr.mxu0 0.0
    %1737 = vmatpush1.msra.mxu0 0.0
    %1738 = vmatprep.subr.mxu0 0.0
    %1739 = vmatpush1.msra.mxu0 0.0
    %1740 = vmatprep.subr.mxu0 0.0
    %1741 = vmatpush1.msra.mxu0 0.0
    %1742 = vmatprep.subr.mxu0 0.0
    %1743 = vmatpush1.msra.mxu0 0.0
    %1744 = vmatprep.subr.mxu0 0.0
    %1745 = vmatpush1.msra.mxu0 0.0
    %1746 = vmatprep.subr.mxu0 0.0
    %1747 = vmatpush1.msra.mxu0 0.0
    %1748 = vmatprep.subr.mxu0 0.0
    %1749 = vmatpush1.msra.mxu0 0.0
    %1750 = vmatprep.subr.mxu0 0.0
    %1751 = vmatpush1.msra.mxu0 0.0
    %1752 = vmatprep.subr.mxu0 0.0
    %1753 = vmatpush1.msra.mxu0 0.0
    %1754 = vmatprep.subr.mxu0 0.0
    %1755 = vmatpush1.msra.mxu0 0.0
    %1756 = vmatprep.subr.mxu0 0.0
    %1757 = vmatpush1.msra.mxu0 0.0
    %1758 = vmatprep.subr.mxu0 0.0
    %1759 = vmatpush1.msra.mxu0 0.0
    %1760 = vmatprep.subr.mxu0 0.0
    %1761 = vmatpush1.msra.mxu0 0.0
    %1762 = vmatprep.mubr.f32.mxu0 0.0
    %1763 = vmatmul.mubr.f32.gmra.mrb[0].mxu0 %v1693
    %v1764 = vpop.f32.mrb[0].mxu0
    %v1765 = vadd.f32 %v118, %v1764
    %v1766 = vpop.f32.mrb[0].mxu0
    %v1767 = vadd.f32 %v122, %v1766
    %1768 = vmatprep.mubr.f32.mxu0 0.0
    %1769 = vmatmul.mubr.f32.gmra.mrb[0].mxu0 %v1694
    %v1770 = vpop.f32.mrb[0].mxu0
    %v1771 = vadd.f32 %v118, %v1770
    %v1772 = vpop.f32.mrb[0].mxu0
    %v1773 = vadd.f32 %v122, %v1772
    %1774 = vdwg.mxu0
    %1775 = vmatprep.subr.mxu0 0.0
    %1776 = vmatpush1.msra.mxu0 %v67
    %1777 = vmatprep.subr.mxu0 0.0
    %1778 = vmatpush1.msra.mxu0 %v70
    %1779 = vmatprep.subr.mxu0 0.0
    %1780 = vmatpush1.msra.mxu0 %v73
    %1781 = vmatprep.subr.mxu0 0.0
    %1782 = vmatpush1.msra.mxu0 %v76
    %1783 = vmatprep.subr.mxu0 0.0
    %1784 = vmatpush1.msra.mxu0 %v79
    %1785 = vmatprep.subr.mxu0 0.0
    %1786 = vmatpush1.msra.mxu0 %v82
    %1787 = vmatprep.subr.mxu0 0.0
    %1788 = vmatpush1.msra.mxu0 %v85
    %1789 = vmatprep.subr.mxu0 0.0
    %1790 = vmatpush1.msra.mxu0 %v88
    %1791 = vmatprep.subr.mxu0 0.0
    %1792 = vmatpush1.msra.mxu0 %v91
    %1793 = vmatprep.subr.mxu0 0.0
    %1794 = vmatpush1.msra.mxu0 %v94
    %1795 = vmatprep.subr.mxu0 0.0
    %1796 = vmatpush1.msra.mxu0 %v97
    %1797 = vmatprep.subr.mxu0 0.0
    %1798 = vmatpush1.msra.mxu0 %v100
    %1799 = vmatprep.subr.mxu0 0.0
    %1800 = vmatpush1.msra.mxu0 %v103
    %1801 = vmatprep.subr.mxu0 0.0
    %1802 = vmatpush1.msra.mxu0 %v106
    %1803 = vmatprep.subr.mxu0 0.0
    %1804 = vmatpush1.msra.mxu0 %v109
    %1805 = vmatprep.subr.mxu0 0.0
    %1806 = vmatpush1.msra.mxu0 %v112
    %1807 = vmatprep.subr.mxu0 0.0
    %1808 = vmatpush1.msra.mxu0 0.0
    %1809 = vmatprep.subr.mxu0 0.0
    %1810 = vmatpush1.msra.mxu0 0.0
    %1811 = vmatprep.subr.mxu0 0.0
    %1812 = vmatpush1.msra.mxu0 0.0
    %1813 = vmatprep.subr.mxu0 0.0
    %1814 = vmatpush1.msra.mxu0 0.0
    %1815 = vmatprep.subr.mxu0 0.0
    %1816 = vmatpush1.msra.mxu0 0.0
    %1817 = vmatprep.subr.mxu0 0.0
    %1818 = vmatpush1.msra.mxu0 0.0
    %1819 = vmatprep.subr.mxu0 0.0
    %1820 = vmatpush1.msra.mxu0 0.0
    %1821 = vmatprep.subr.mxu0 0.0
    %1822 = vmatpush1.msra.mxu0 0.0
    %1823 = vmatprep.subr.mxu0 0.0
    %1824 = vmatpush1.msra.mxu0 0.0
    %1825 = vmatprep.subr.mxu0 0.0
    %1826 = vmatpush1.msra.mxu0 0.0
    %1827 = vmatprep.subr.mxu0 0.0
    %1828 = vmatpush1.msra.mxu0 0.0
    %1829 = vmatprep.subr.mxu0 0.0
    %1830 = vmatpush1.msra.mxu0 0.0
    %1831 = vmatprep.subr.mxu0 0.0
    %1832 = vmatpush1.msra.mxu0 0.0
    %1833 = vmatprep.subr.mxu0 0.0
    %1834 = vmatpush1.msra.mxu0 0.0
    %1835 = vmatprep.subr.mxu0 0.0
    %1836 = vmatpush1.msra.mxu0 0.0
    %1837 = vmatprep.subr.mxu0 0.0
    %1838 = vmatpush1.msra.mxu0 0.0
    %1839 = vmatprep.mubr.f32.mxu0 0.0
    %1840 = vmatmul.mubr.f32.gmra.mrb[0].mxu0 %v1693
    %v1841 = vpop.f32.mrb[0].mxu0
    %v1842 = vadd.f32 %v126, %v1841
    %v1843 = vpop.f32.mrb[0].mxu0
    %1844 = vmatprep.mubr.f32.mxu0 0.0
    %1845 = vmatmul.mubr.f32.gmra.mrb[0].mxu0 %v1694
    %v1846 = vpop.f32.mrb[0].mxu0
    %v1847 = vadd.f32 %v126, %v1846
    %v1848 = vpop.f32.mrb[0].mxu0
    %1849 = vdwg.mxu0
    %v1850 = vadd.f32 %v350, %v1765
    %v1851 = vadd.f32 %v356, %v1771
    %v1852 = vxor.u32 %v1850, 2147483648
    %v1853 = vxor.u32 %v1851, 2147483648
    %v1854 = vmul.f32 %v1852, 1.442695
    %v1855 = vpow.pop %v1854
    %v1856 = vmul.f32 %v1853, 1.442695
    %v1857 = vpow.pop %v1856
    %v1858 = vadd.f32 %v1855, 1.0
    %v1859 = vadd.f32 %v1857, 1.0
    %v1860 = vrcp.pop %v1858
    %v1861 = vmul.f32 1.0, %v1860
    %v1862 = vrcp.pop %v1859
    %v1863 = vmul.f32 1.0, %v1862
    %v1864 = vadd.f32 %v352, %v1767
    %v1865 = vadd.f32 %v358, %v1773
    %v1866 = vxor.u32 %v1864, 2147483648
    %v1867 = vxor.u32 %v1865, 2147483648
    %v1868 = vmul.f32 %v1866, 1.442695
    %v1869 = vpow.pop %v1868
    %v1870 = vmul.f32 %v1867, 1.442695
    %v1871 = vpow.pop %v1870
    %v1872 = vadd.f32 %v1869, 1.0
    %v1873 = vadd.f32 %v1871, 1.0
    %v1874 = vrcp.pop %v1872
    %v1875 = vmul.f32 1.0, %v1874
    %v1876 = vrcp.pop %v1873
    %v1877 = vmul.f32 1.0, %v1876
    %v1878 = vmul.f32 %v1861, %v1842
    %v1879 = vmul.f32 %v1863, %v1847
    %v1880 = vadd.f32 %v499, %v1878
    %v1881 = vadd.f32 %v504, %v1879
    %v1882 = vtanh.pop %v1880
    %v1883 = vtanh.pop %v1881
    %v1884 = vsub.f32 1.0, %v1875
    %v1885 = vsub.f32 1.0, %v1877
    %v1886 = vmul.f32 %v1884, %v1882
    %v1887 = vmul.f32 %v1885, %v1883
    %v1888 = vmul.f32 %v1875, %v1693
    %v1889 = vmul.f32 %v1877, %v1694
    %v1890 = vadd.f32 %v1886, %v1888
    %v1891 = vadd.f32 %v1887, %v1889
    %s1892 = scalar_lea.vmem [#allocation2], 96
    %1893 = vst [vmem:[%s1892] sm:$0xff] %v1890
    %1894 = vst [vmem:[%s1892 + $0x8] sm:$0xff] %v1891
    %1895 = vmatprep.subr.mxu0 %v66
    %1896 = vmatpush1.msra.mxu0 %v65
    %1897 = vmatprep.subr.mxu0 %v69
    %1898 = vmatpush1.msra.mxu0 %v68
    %1899 = vmatprep.subr.mxu0 %v72
    %1900 = vmatpush1.msra.mxu0 %v71
    %1901 = vmatprep.subr.mxu0 %v75
    %1902 = vmatpush1.msra.mxu0 %v74
    %1903 = vmatprep.subr.mxu0 %v78
    %1904 = vmatpush1.msra.mxu0 %v77
    %1905 = vmatprep.subr.mxu0 %v81
    %1906 = vmatpush1.msra.mxu0 %v80
    %1907 = vmatprep.subr.mxu0 %v84
    %1908 = vmatpush1.msra.mxu0 %v83
    %1909 = vmatprep.subr.mxu0 %v87
    %1910 = vmatpush1.msra.mxu0 %v86
    %1911 = vmatprep.subr.mxu0 %v90
    %1912 = vmatpush1.msra.mxu0 %v89
    %1913 = vmatprep.subr.mxu0 %v93
    %1914 = vmatpush1.msra.mxu0 %v92
    %1915 = vmatprep.subr.mxu0 %v96
    %1916 = vmatpush1.msra.mxu0 %v95
    %1917 = vmatprep.subr.mxu0 %v99
    %1918 = vmatpush1.msra.mxu0 %v98
    %1919 = vmatprep.subr.mxu0 %v102
    %1920 = vmatpush1.msra.mxu0 %v101
    %1921 = vmatprep.subr.mxu0 %v105
    %1922 = vmatpush1.msra.mxu0 %v104
    %1923 = vmatprep.subr.mxu0 %v108
    %1924 = vmatpush1.msra.mxu0 %v107
    %1925 = vmatprep.subr.mxu0 %v111
    %1926 = vmatpush1.msra.mxu0 %v110
    %1927 = vmatprep.subr.mxu0 0.0
    %1928 = vmatpush1.msra.mxu0 0.0
    %1929 = vmatprep.subr.mxu0 0.0
    %1930 = vmatpush1.msra.mxu0 0.0
    %1931 = vmatprep.subr.mxu0 0.0
    %1932 = vmatpush1.msra.mxu0 0.0
    %1933 = vmatprep.subr.mxu0 0.0
    %1934 = vmatpush1.msra.mxu0 0.0
    %1935 = vmatprep.subr.mxu0 0.0
    %1936 = vmatpush1.msra.mxu0 0.0
    %1937 = vmatprep.subr.mxu0 0.0
    %1938 = vmatpush1.msra.mxu0 0.0
    %1939 = vmatprep.subr.mxu0 0.0
    %1940 = vmatpush1.msra.mxu0 0.0
    %1941 = vmatprep.subr.mxu0 0.0
    %1942 = vmatpush1.msra.mxu0 0.0
    %1943 = vmatprep.subr.mxu0 0.0
    %1944 = vmatpush1.msra.mxu0 0.0
    %1945 = vmatprep.subr.mxu0 0.0
    %1946 = vmatpush1.msra.mxu0 0.0
    %1947 = vmatprep.subr.mxu0 0.0
    %1948 = vmatpush1.msra.mxu0 0.0
    %1949 = vmatprep.subr.mxu0 0.0
    %1950 = vmatpush1.msra.mxu0 0.0
    %1951 = vmatprep.subr.mxu0 0.0
    %1952 = vmatpush1.msra.mxu0 0.0
    %1953 = vmatprep.subr.mxu0 0.0
    %1954 = vmatpush1.msra.mxu0 0.0
    %1955 = vmatprep.subr.mxu0 0.0
    %1956 = vmatpush1.msra.mxu0 0.0
    %1957 = vmatprep.subr.mxu0 0.0
    %1958 = vmatpush1.msra.mxu0 0.0
    %1959 = vmatprep.mubr.f32.mxu0 0.0
    %1960 = vmatmul.mubr.f32.gmra.mrb[0].mxu0 %v1890
    %v1961 = vpop.f32.mrb[0].mxu0
    %v1962 = vadd.f32 %v118, %v1961
    %v1963 = vpop.f32.mrb[0].mxu0
    %v1964 = vadd.f32 %v122, %v1963
    %1965 = vmatprep.mubr.f32.mxu0 0.0
    %1966 = vmatmul.mubr.f32.gmra.mrb[0].mxu0 %v1891
    %v1967 = vpop.f32.mrb[0].mxu0
    %v1968 = vadd.f32 %v118, %v1967
    %v1969 = vpop.f32.mrb[0].mxu0
    %v1970 = vadd.f32 %v122, %v1969
    %1971 = vdwg.mxu0
    %1972 = vmatprep.subr.mxu0 0.0
    %1973 = vmatpush1.msra.mxu0 %v67
    %1974 = vmatprep.subr.mxu0 0.0
    %1975 = vmatpush1.msra.mxu0 %v70
    %1976 = vmatprep.subr.mxu0 0.0
    %1977 = vmatpush1.msra.mxu0 %v73
    %1978 = vmatprep.subr.mxu0 0.0
    %1979 = vmatpush1.msra.mxu0 %v76
    %1980 = vmatprep.subr.mxu0 0.0
    %1981 = vmatpush1.msra.mxu0 %v79
    %1982 = vmatprep.subr.mxu0 0.0
    %1983 = vmatpush1.msra.mxu0 %v82
    %1984 = vmatprep.subr.mxu0 0.0
    %1985 = vmatpush1.msra.mxu0 %v85
    %1986 = vmatprep.subr.mxu0 0.0
    %1987 = vmatpush1.msra.mxu0 %v88
    %1988 = vmatprep.subr.mxu0 0.0
    %1989 = vmatpush1.msra.mxu0 %v91
    %1990 = vmatprep.subr.mxu0 0.0
    %1991 = vmatpush1.msra.mxu0 %v94
    %1992 = vmatprep.subr.mxu0 0.0
    %1993 = vmatpush1.msra.mxu0 %v97
    %1994 = vmatprep.subr.mxu0 0.0
    %1995 = vmatpush1.msra.mxu0 %v100
    %1996 = vmatprep.subr.mxu0 0.0
    %1997 = vmatpush1.msra.mxu0 %v103
    %1998 = vmatprep.subr.mxu0 0.0
    %1999 = vmatpush1.msra.mxu0 %v106
    %2000 = vmatprep.subr.mxu0 0.0
    %2001 = vmatpush1.msra.mxu0 %v109
    %2002 = vmatprep.subr.mxu0 0.0
    %2003 = vmatpush1.msra.mxu0 %v112
    %2004 = vmatprep.subr.mxu0 0.0
    %2005 = vmatpush1.msra.mxu0 0.0
    %2006 = vmatprep.subr.mxu0 0.0
    %2007 = vmatpush1.msra.mxu0 0.0
    %2008 = vmatprep.subr.mxu0 0.0
    %2009 = vmatpush1.msra.mxu0 0.0
    %2010 = vmatprep.subr.mxu0 0.0
    %2011 = vmatpush1.msra.mxu0 0.0
    %2012 = vmatprep.subr.mxu0 0.0
    %2013 = vmatpush1.msra.mxu0 0.0
    %2014 = vmatprep.subr.mxu0 0.0
    %2015 = vmatpush1.msra.mxu0 0.0
    %2016 = vmatprep.subr.mxu0 0.0
    %2017 = vmatpush1.msra.mxu0 0.0
    %2018 = vmatprep.subr.mxu0 0.0
    %2019 = vmatpush1.msra.mxu0 0.0
    %2020 = vmatprep.subr.mxu0 0.0
    %2021 = vmatpush1.msra.mxu0 0.0
    %2022 = vmatprep.subr.mxu0 0.0
    %2023 = vmatpush1.msra.mxu0 0.0
    %2024 = vmatprep.subr.mxu0 0.0
    %2025 = vmatpush1.msra.mxu0 0.0
    %2026 = vmatprep.subr.mxu0 0.0
    %2027 = vmatpush1.msra.mxu0 0.0
    %2028 = vmatprep.subr.mxu0 0.0
    %2029 = vmatpush1.msra.mxu0 0.0
    %2030 = vmatprep.subr.mxu0 0.0
    %2031 = vmatpush1.msra.mxu0 0.0
    %2032 = vmatprep.subr.mxu0 0.0
    %2033 = vmatpush1.msra.mxu0 0.0
    %2034 = vmatprep.subr.mxu0 0.0
    %2035 = vmatpush1.msra.mxu0 0.0
    %2036 = vmatprep.mubr.f32.mxu0 0.0
    %2037 = vmatmul.mubr.f32.gmra.mrb[0].mxu0 %v1890
    %v2038 = vpop.f32.mrb[0].mxu0
    %v2039 = vadd.f32 %v126, %v2038
    %v2040 = vpop.f32.mrb[0].mxu0
    %2041 = vmatprep.mubr.f32.mxu0 0.0
    %2042 = vmatmul.mubr.f32.gmra.mrb[0].mxu0 %v1891
    %v2043 = vpop.f32.mrb[0].mxu0
    %v2044 = vadd.f32 %v126, %v2043
    %v2045 = vpop.f32.mrb[0].mxu0
    %2046 = vdwg.mxu0
    %v2047 = vadd.f32 %v362, %v1962
    %v2048 = vadd.f32 %v368, %v1968
    %v2049 = vxor.u32 %v2047, 2147483648
    %v2050 = vxor.u32 %v2048, 2147483648
    %v2051 = vmul.f32 %v2049, 1.442695
    %v2052 = vpow.pop %v2051
    %v2053 = vmul.f32 %v2050, 1.442695
    %v2054 = vpow.pop %v2053
    %v2055 = vadd.f32 %v2052, 1.0
    %v2056 = vadd.f32 %v2054, 1.0
    %v2057 = vrcp.pop %v2055
    %v2058 = vmul.f32 1.0, %v2057
    %v2059 = vrcp.pop %v2056
    %v2060 = vmul.f32 1.0, %v2059
    %v2061 = vadd.f32 %v364, %v1964
    %v2062 = vadd.f32 %v370, %v1970
    %v2063 = vxor.u32 %v2061, 2147483648
    %v2064 = vxor.u32 %v2062, 2147483648
    %v2065 = vmul.f32 %v2063, 1.442695
    %v2066 = vpow.pop %v2065
    %v2067 = vmul.f32 %v2064, 1.442695
    %v2068 = vpow.pop %v2067
    %v2069 = vadd.f32 %v2066, 1.0
    %v2070 = vadd.f32 %v2068, 1.0
    %v2071 = vrcp.pop %v2069
    %v2072 = vmul.f32 1.0, %v2071
    %v2073 = vrcp.pop %v2070
    %v2074 = vmul.f32 1.0, %v2073
    %v2075 = vmul.f32 %v2058, %v2039
    %v2076 = vmul.f32 %v2060, %v2044
    %v2077 = vadd.f32 %v509, %v2075
    %v2078 = vadd.f32 %v514, %v2076
    %v2079 = vtanh.pop %v2077
    %v2080 = vtanh.pop %v2078
    %v2081 = vsub.f32 1.0, %v2072
    %v2082 = vsub.f32 1.0, %v2074
    %v2083 = vmul.f32 %v2081, %v2079
    %v2084 = vmul.f32 %v2082, %v2080
    %v2085 = vmul.f32 %v2072, %v1890
    %v2086 = vmul.f32 %v2074, %v1891
    %v2087 = vadd.f32 %v2083, %v2085
    %v2088 = vadd.f32 %v2084, %v2086
    %s2089 = scalar_lea.vmem [#allocation2], 112
    %2090 = vst [vmem:[%s2089] sm:$0xff] %v2087
    %2091 = vst [vmem:[%s2089 + $0x8] sm:$0xff] %v2088
    %v2092 = vld [vmem:[#allocation2] sm:$0xff]
    %v2093 = vld [vmem:[#allocation2 + $0x8] sm:$0xff]
    %v2094 = vld [vmem:[#allocation2 + $0x10] sm:$0xff]
    %v2095 = vld [vmem:[#allocation2 + $0x18] sm:$0xff]
    %v2096 = vld [vmem:[#allocation2 + $0x20] sm:$0xff]
    %v2097 = vld [vmem:[#allocation2 + $0x28] sm:$0xff]
    %v2098 = vld [vmem:[#allocation2 + $0x30] sm:$0xff]
    %v2099 = vld [vmem:[#allocation2 + $0x38] sm:$0xff]
    %v2100 = vld [vmem:[#allocation2 + $0x40] sm:$0xff]
    %v2101 = vld [vmem:[#allocation2 + $0x48] sm:$0xff]
    %v2102 = vld [vmem:[#allocation2 + $0x50] sm:$0xff]
    %v2103 = vld [vmem:[#allocation2 + $0x58] sm:$0xff]
    %v2104 = vld [vmem:[#allocation2 + $0x60] sm:$0xff]
    %v2105 = vld [vmem:[#allocation2 + $0x68] sm:$0xff]
    %v2106 = vld [vmem:[#allocation2 + $0x70] sm:$0xff]
    %v2107 = vld [vmem:[#allocation2 + $0x78] sm:$0xff]
    %v2108 = vcombine.low %v2092, %v2096
    %v2109 = vcombine.high %v2092, %v2096
    %v2111 = vunpack.c.l.s4 1983009808
    %v2112 = vunpack.c.0.s8 %v2111
    %v2113 = vlaneseq
    %v2114 = vshrl.u32 %v2113, 7
    %v2115 = vsub.s32 %v2112, %v2114
    %v2116 = vrot.slane %v2108, %v2115
    %v2118 = vunpack.c.l.s4 1983009808
    %v2119 = vunpack.c.0.s8 %v2118
    %v2120 = vlaneseq
    %v2121 = vshrl.u32 %v2120, 7
    %v2122 = vsub.s32 %v2119, %v2121
    %v2123 = vrot.slane %v2109, %v2122
    %v2124 = vcombine.low %v2094, %v2098
    %v2125 = vcombine.high %v2094, %v2098
    %v2127 = vunpack.c.l.s4 1983009808
    %v2128 = vunpack.c.0.s8 %v2127
    %v2129 = vlaneseq
    %v2130 = vshrl.u32 %v2129, 7
    %v2131 = vsub.s32 %v2128, %v2130
    %v2132 = vrot.slane %v2124, %v2131
    %v2134 = vunpack.c.l.s4 1983009808
    %v2135 = vunpack.c.0.s8 %v2134
    %v2136 = vlaneseq
    %v2137 = vshrl.u32 %v2136, 7
    %v2138 = vsub.s32 %v2135, %v2137
    %v2139 = vrot.slane %v2125, %v2138
    %v2140 = vcombine.low %v2100, %v2104
    %v2141 = vcombine.high %v2100, %v2104
    %v2143 = vunpack.c.l.s4 1983009808
    %v2144 = vunpack.c.0.s8 %v2143
    %v2145 = vlaneseq
    %v2146 = vshrl.u32 %v2145, 7
    %v2147 = vsub.s32 %v2144, %v2146
    %v2148 = vrot.slane %v2140, %v2147
    %v2150 = vunpack.c.l.s4 1983009808
    %v2151 = vunpack.c.0.s8 %v2150
    %v2152 = vlaneseq
    %v2153 = vshrl.u32 %v2152, 7
    %v2154 = vsub.s32 %v2151, %v2153
    %v2155 = vrot.slane %v2141, %v2154
    %v2156 = vcombine.low %v2102, %v2106
    %v2157 = vcombine.high %v2102, %v2106
    %v2159 = vunpack.c.l.s4 1983009808
    %v2160 = vunpack.c.0.s8 %v2159
    %v2161 = vlaneseq
    %v2162 = vshrl.u32 %v2161, 7
    %v2163 = vsub.s32 %v2160, %v2162
    %v2164 = vrot.slane %v2156, %v2163
    %v2166 = vunpack.c.l.s4 1983009808
    %v2167 = vunpack.c.0.s8 %v2166
    %v2168 = vlaneseq
    %v2169 = vshrl.u32 %v2168, 7
    %v2170 = vsub.s32 %v2167, %v2169
    %v2171 = vrot.slane %v2157, %v2170
    %v2172 = vcombine.low %v2116, %v2132
    %v2173 = vcombine.high %v2116, %v2132
    %v2175 = vunpack.c.l.s4 1934713408
    %v2176 = vunpack.c.0.s8 %v2175
    %v2177 = vlaneseq
    %v2178 = vshrl.u32 %v2177, 7
    %v2179 = vsub.s32 %v2176, %v2178
    %v2180 = vrot.slane %v2172, %v2179
    %v2182 = vunpack.c.l.s4 1934713408
    %v2183 = vunpack.c.0.s8 %v2182
    %v2184 = vlaneseq
    %v2185 = vshrl.u32 %v2184, 7
    %v2186 = vsub.s32 %v2183, %v2185
    %v2187 = vrot.slane %v2173, %v2186
    %v2188 = vcombine.low %v2123, %v2139
    %v2189 = vcombine.high %v2123, %v2139
    %v2191 = vunpack.c.l.s4 1934713408
    %v2192 = vunpack.c.0.s8 %v2191
    %v2193 = vlaneseq
    %v2194 = vshrl.u32 %v2193, 7
    %v2195 = vsub.s32 %v2192, %v2194
    %v2196 = vrot.slane %v2188, %v2195
    %v2198 = vunpack.c.l.s4 1934713408
    %v2199 = vunpack.c.0.s8 %v2198
    %v2200 = vlaneseq
    %v2201 = vshrl.u32 %v2200, 7
    %v2202 = vsub.s32 %v2199, %v2201
    %v2203 = vrot.slane %v2189, %v2202
    %v2204 = vcombine.low %v2148, %v2164
    %v2205 = vcombine.high %v2148, %v2164
    %v2207 = vunpack.c.l.s4 1934713408
    %v2208 = vunpack.c.0.s8 %v2207
    %v2209 = vlaneseq
    %v2210 = vshrl.u32 %v2209, 7
    %v2211 = vsub.s32 %v2208, %v2210
    %v2212 = vrot.slane %v2204, %v2211
    %v2214 = vunpack.c.l.s4 1934713408
    %v2215 = vunpack.c.0.s8 %v2214
    %v2216 = vlaneseq
    %v2217 = vshrl.u32 %v2216, 7
    %v2218 = vsub.s32 %v2215, %v2217
    %v2219 = vrot.slane %v2205, %v2218
    %v2220 = vcombine.low %v2155, %v2171
    %v2221 = vcombine.high %v2155, %v2171
    %v2223 = vunpack.c.l.s4 1934713408
    %v2224 = vunpack.c.0.s8 %v2223
    %v2225 = vlaneseq
    %v2226 = vshrl.u32 %v2225, 7
    %v2227 = vsub.s32 %v2224, %v2226
    %v2228 = vrot.slane %v2220, %v2227
    %v2230 = vunpack.c.l.s4 1934713408
    %v2231 = vunpack.c.0.s8 %v2230
    %v2232 = vlaneseq
    %v2233 = vshrl.u32 %v2232, 7
    %v2234 = vsub.s32 %v2231, %v2233
    %v2235 = vrot.slane %v2221, %v2234
    %v2236 = vcombine.low %v2180, %v2212
    %v2237 = vcombine.high %v2180, %v2212
    %v2238 = vcombine.low %v2187, %v2219
    %v2239 = vcombine.high %v2187, %v2219
    %v2240 = vcombine.low %v2196, %v2228
    %v2241 = vcombine.high %v2196, %v2228
    %v2242 = vcombine.low %v2203, %v2235
    %v2243 = vcombine.high %v2203, %v2235
    %v2244 = vcombine.low %v2093, %v2097
    %v2245 = vcombine.high %v2093, %v2097
    %v2247 = vunpack.c.l.s4 1983009808
    %v2248 = vunpack.c.0.s8 %v2247
    %v2249 = vlaneseq
    %v2250 = vshrl.u32 %v2249, 7
    %v2251 = vsub.s32 %v2248, %v2250
    %v2252 = vrot.slane %v2244, %v2251
    %v2254 = vunpack.c.l.s4 1983009808
    %v2255 = vunpack.c.0.s8 %v2254
    %v2256 = vlaneseq
    %v2257 = vshrl.u32 %v2256, 7
    %v2258 = vsub.s32 %v2255, %v2257
    %v2259 = vrot.slane %v2245, %v2258
    %v2260 = vcombine.low %v2095, %v2099
    %v2261 = vcombine.high %v2095, %v2099
    %v2263 = vunpack.c.l.s4 1983009808
    %v2264 = vunpack.c.0.s8 %v2263
    %v2265 = vlaneseq
    %v2266 = vshrl.u32 %v2265, 7
    %v2267 = vsub.s32 %v2264, %v2266
    %v2268 = vrot.slane %v2260, %v2267
    %v2270 = vunpack.c.l.s4 1983009808
    %v2271 = vunpack.c.0.s8 %v2270
    %v2272 = vlaneseq
    %v2273 = vshrl.u32 %v2272, 7
    %v2274 = vsub.s32 %v2271, %v2273
    %v2275 = vrot.slane %v2261, %v2274
    %v2276 = vcombine.low %v2101, %v2105
    %v2277 = vcombine.high %v2101, %v2105
    %v2279 = vunpack.c.l.s4 1983009808
    %v2280 = vunpack.c.0.s8 %v2279
    %v2281 = vlaneseq
    %v2282 = vshrl.u32 %v2281, 7
    %v2283 = vsub.s32 %v2280, %v2282
    %v2284 = vrot.slane %v2276, %v2283
    %v2286 = vunpack.c.l.s4 1983009808
    %v2287 = vunpack.c.0.s8 %v2286
    %v2288 = vlaneseq
    %v2289 = vshrl.u32 %v2288, 7
    %v2290 = vsub.s32 %v2287, %v2289
    %v2291 = vrot.slane %v2277, %v2290
    %v2292 = vcombine.low %v2103, %v2107
    %v2293 = vcombine.high %v2103, %v2107
    %v2295 = vunpack.c.l.s4 1983009808
    %v2296 = vunpack.c.0.s8 %v2295
    %v2297 = vlaneseq
    %v2298 = vshrl.u32 %v2297, 7
    %v2299 = vsub.s32 %v2296, %v2298
    %v2300 = vrot.slane %v2292, %v2299
    %v2302 = vunpack.c.l.s4 1983009808
    %v2303 = vunpack.c.0.s8 %v2302
    %v2304 = vlaneseq
    %v2305 = vshrl.u32 %v2304, 7
    %v2306 = vsub.s32 %v2303, %v2305
    %v2307 = vrot.slane %v2293, %v2306
    %v2308 = vcombine.low %v2252, %v2268
    %v2309 = vcombine.high %v2252, %v2268
    %v2311 = vunpack.c.l.s4 1934713408
    %v2312 = vunpack.c.0.s8 %v2311
    %v2313 = vlaneseq
    %v2314 = vshrl.u32 %v2313, 7
    %v2315 = vsub.s32 %v2312, %v2314
    %v2316 = vrot.slane %v2308, %v2315
    %v2318 = vunpack.c.l.s4 1934713408
    %v2319 = vunpack.c.0.s8 %v2318
    %v2320 = vlaneseq
    %v2321 = vshrl.u32 %v2320, 7
    %v2322 = vsub.s32 %v2319, %v2321
    %v2323 = vrot.slane %v2309, %v2322
    %v2324 = vcombine.low %v2259, %v2275
    %v2325 = vcombine.high %v2259, %v2275
    %v2327 = vunpack.c.l.s4 1934713408
    %v2328 = vunpack.c.0.s8 %v2327
    %v2329 = vlaneseq
    %v2330 = vshrl.u32 %v2329, 7
    %v2331 = vsub.s32 %v2328, %v2330
    %v2332 = vrot.slane %v2324, %v2331
    %v2334 = vunpack.c.l.s4 1934713408
    %v2335 = vunpack.c.0.s8 %v2334
    %v2336 = vlaneseq
    %v2337 = vshrl.u32 %v2336, 7
    %v2338 = vsub.s32 %v2335, %v2337
    %v2339 = vrot.slane %v2325, %v2338
    %v2340 = vcombine.low %v2284, %v2300
    %v2341 = vcombine.high %v2284, %v2300
    %v2343 = vunpack.c.l.s4 1934713408
    %v2344 = vunpack.c.0.s8 %v2343
    %v2345 = vlaneseq
    %v2346 = vshrl.u32 %v2345, 7
    %v2347 = vsub.s32 %v2344, %v2346
    %v2348 = vrot.slane %v2340, %v2347
    %v2350 = vunpack.c.l.s4 1934713408
    %v2351 = vunpack.c.0.s8 %v2350
    %v2352 = vlaneseq
    %v2353 = vshrl.u32 %v2352, 7
    %v2354 = vsub.s32 %v2351, %v2353
    %v2355 = vrot.slane %v2341, %v2354
    %v2356 = vcombine.low %v2291, %v2307
    %v2357 = vcombine.high %v2291, %v2307
    %v2359 = vunpack.c.l.s4 1934713408
    %v2360 = vunpack.c.0.s8 %v2359
    %v2361 = vlaneseq
    %v2362 = vshrl.u32 %v2361, 7
    %v2363 = vsub.s32 %v2360, %v2362
    %v2364 = vrot.slane %v2356, %v2363
    %v2366 = vunpack.c.l.s4 1934713408
    %v2367 = vunpack.c.0.s8 %v2366
    %v2368 = vlaneseq
    %v2369 = vshrl.u32 %v2368, 7
    %v2370 = vsub.s32 %v2367, %v2369
    %v2371 = vrot.slane %v2357, %v2370
    %v2372 = vcombine.low %v2316, %v2348
    %v2373 = vcombine.high %v2316, %v2348
    %v2374 = vcombine.low %v2323, %v2355
    %v2375 = vcombine.high %v2323, %v2355
    %v2376 = vcombine.low %v2332, %v2364
    %v2377 = vcombine.high %v2332, %v2364
    %v2378 = vcombine.low %v2339, %v2371
    %v2379 = vcombine.high %v2339, %v2371
    %2380 = vmatprep.subr.mxu0 0.0
    %2381 = vmatpush1.xpose.msra.mxu0 %v2372
    %2382 = vmatprep.subr.mxu0 0.0
    %2383 = vmatpush1.xpose.msra.mxu0 0.0
    %2384 = vmatprep.subr.mxu0 0.0
    %2385 = vmatpush1.xpose.msra.mxu0 0.0
    %2386 = vmatprep.subr.mxu0 0.0
    %2387 = vmatpush1.xpose.msra.mxu0 0.0
    %2388 = vmatprep.subr.mxu0 0.0
    %2389 = vmatpush1.xpose.msra.mxu0 0.0
    %2390 = vmatprep.subr.mxu0 0.0
    %2391 = vmatpush1.xpose.msra.mxu0 0.0
    %2392 = vmatprep.subr.mxu0 0.0
    %2393 = vmatpush1.xpose.msra.mxu0 0.0
    %2394 = vmatprep.subr.mxu0 0.0
    %2395 = vmatpush1.xpose.msra.mxu0 0.0
    %2396 = vmatprep.subr.mxu0 0.0
    %2397 = vmatpush1.xpose.msra.mxu0 0.0
    %2398 = vmatprep.subr.mxu0 0.0
    %2399 = vmatpush1.xpose.msra.mxu0 0.0
    %2400 = vmatprep.subr.mxu0 0.0
    %2401 = vmatpush1.xpose.msra.mxu0 0.0
    %2402 = vmatprep.subr.mxu0 0.0
    %2403 = vmatpush1.xpose.msra.mxu0 0.0
    %2404 = vmatprep.subr.mxu0 0.0
    %2405 = vmatpush1.xpose.msra.mxu0 0.0
    %2406 = vmatprep.subr.mxu0 0.0
    %2407 = vmatpush1.xpose.msra.mxu0 0.0
    %2408 = vmatprep.subr.mxu0 0.0
    %2409 = vmatpush1.xpose.msra.mxu0 0.0
    %2410 = vmatprep.subr.mxu0 0.0
    %2411 = vmatpush1.xpose.msra.mxu0 0.0
    %2412 = vmatprep.subr.mxu0 0.0
    %2413 = vmatpush1.xpose.msra.mxu0 0.0
    %2414 = vmatprep.subr.mxu0 0.0
    %2415 = vmatpush1.xpose.msra.mxu0 0.0
    %2416 = vmatprep.subr.mxu0 0.0
    %2417 = vmatpush1.xpose.msra.mxu0 0.0
    %2418 = vmatprep.subr.mxu0 0.0
    %2419 = vmatpush1.xpose.msra.mxu0 0.0
    %2420 = vmatprep.subr.mxu0 0.0
    %2421 = vmatpush1.xpose.msra.mxu0 0.0
    %2422 = vmatprep.subr.mxu0 0.0
    %2423 = vmatpush1.xpose.msra.mxu0 0.0
    %2424 = vmatprep.subr.mxu0 0.0
    %2425 = vmatpush1.xpose.msra.mxu0 0.0
    %2426 = vmatprep.subr.mxu0 0.0
    %2427 = vmatpush1.xpose.msra.mxu0 0.0
    %2428 = vmatprep.subr.mxu0 0.0
    %2429 = vmatpush1.xpose.msra.mxu0 0.0
    %2430 = vmatprep.subr.mxu0 0.0
    %2431 = vmatpush1.xpose.msra.mxu0 0.0
    %2432 = vmatprep.subr.mxu0 0.0
    %2433 = vmatpush1.xpose.msra.mxu0 0.0
    %2434 = vmatprep.subr.mxu0 0.0
    %2435 = vmatpush1.xpose.msra.mxu0 0.0
    %2436 = vmatprep.subr.mxu0 0.0
    %2437 = vmatpush1.xpose.msra.mxu0 0.0
    %2438 = vmatprep.subr.mxu0 0.0
    %2439 = vmatpush1.xpose.msra.mxu0 0.0
    %2440 = vmatprep.subr.mxu0 0.0
    %2441 = vmatpush1.xpose.msra.mxu0 0.0
    %2442 = vmatprep.subr.mxu0 0.0
    %2443 = vmatpush1.xpose.msra.mxu0 0.0
    %2444 = vmatprep.mubr.f32.mxu0 0.0
    %2445 = vmatmul.mubr.f32.gmra.mrb[0].mxu0 %v2236
    %v2446 = vpop.f32.mrb[0].mxu0
    %v2447 = vadd.f32 0.0, %v2446
    %v2448 = vpop.f32.mrb[0].mxu0
    %2449 = vdwg.mxu0
    %2450 = vmatprep.subr.mxu0 0.0
    %2451 = vmatpush1.xpose.msra.mxu0 %v2373
    %2452 = vmatprep.subr.mxu0 0.0
    %2453 = vmatpush1.xpose.msra.mxu0 0.0
    %2454 = vmatprep.subr.mxu0 0.0
    %2455 = vmatpush1.xpose.msra.mxu0 0.0
    %2456 = vmatprep.subr.mxu0 0.0
    %2457 = vmatpush1.xpose.msra.mxu0 0.0
    %2458 = vmatprep.subr.mxu0 0.0
    %2459 = vmatpush1.xpose.msra.mxu0 0.0
    %2460 = vmatprep.subr.mxu0 0.0
    %2461 = vmatpush1.xpose.msra.mxu0 0.0
    %2462 = vmatprep.subr.mxu0 0.0
    %2463 = vmatpush1.xpose.msra.mxu0 0.0
    %2464 = vmatprep.subr.mxu0 0.0
    %2465 = vmatpush1.xpose.msra.mxu0 0.0
    %2466 = vmatprep.subr.mxu0 0.0
    %2467 = vmatpush1.xpose.msra.mxu0 0.0
    %2468 = vmatprep.subr.mxu0 0.0
    %2469 = vmatpush1.xpose.msra.mxu0 0.0
    %2470 = vmatprep.subr.mxu0 0.0
    %2471 = vmatpush1.xpose.msra.mxu0 0.0
    %2472 = vmatprep.subr.mxu0 0.0
    %2473 = vmatpush1.xpose.msra.mxu0 0.0
    %2474 = vmatprep.subr.mxu0 0.0
    %2475 = vmatpush1.xpose.msra.mxu0 0.0
    %2476 = vmatprep.subr.mxu0 0.0
    %2477 = vmatpush1.xpose.msra.mxu0 0.0
    %2478 = vmatprep.subr.mxu0 0.0
    %2479 = vmatpush1.xpose.msra.mxu0 0.0
    %2480 = vmatprep.subr.mxu0 0.0
    %2481 = vmatpush1.xpose.msra.mxu0 0.0
    %2482 = vmatprep.subr.mxu0 0.0
    %2483 = vmatpush1.xpose.msra.mxu0 0.0
    %2484 = vmatprep.subr.mxu0 0.0
    %2485 = vmatpush1.xpose.msra.mxu0 0.0
    %2486 = vmatprep.subr.mxu0 0.0
    %2487 = vmatpush1.xpose.msra.mxu0 0.0
    %2488 = vmatprep.subr.mxu0 0.0
    %2489 = vmatpush1.xpose.msra.mxu0 0.0
    %2490 = vmatprep.subr.mxu0 0.0
    %2491 = vmatpush1.xpose.msra.mxu0 0.0
    %2492 = vmatprep.subr.mxu0 0.0
    %2493 = vmatpush1.xpose.msra.mxu0 0.0
    %2494 = vmatprep.subr.mxu0 0.0
    %2495 = vmatpush1.xpose.msra.mxu0 0.0
    %2496 = vmatprep.subr.mxu0 0.0
    %2497 = vmatpush1.xpose.msra.mxu0 0.0
    %2498 = vmatprep.subr.mxu0 0.0
    %2499 = vmatpush1.xpose.msra.mxu0 0.0
    %2500 = vmatprep.subr.mxu0 0.0
    %2501 = vmatpush1.xpose.msra.mxu0 0.0
    %2502 = vmatprep.subr.mxu0 0.0
    %2503 = vmatpush1.xpose.msra.mxu0 0.0
    %2504 = vmatprep.subr.mxu0 0.0
    %2505 = vmatpush1.xpose.msra.mxu0 0.0
    %2506 = vmatprep.subr.mxu0 0.0
    %2507 = vmatpush1.xpose.msra.mxu0 0.0
    %2508 = vmatprep.subr.mxu0 0.0
    %2509 = vmatpush1.xpose.msra.mxu0 0.0
    %2510 = vmatprep.subr.mxu0 0.0
    %2511 = vmatpush1.xpose.msra.mxu0 0.0
    %2512 = vmatprep.subr.mxu0 0.0
    %2513 = vmatpush1.xpose.msra.mxu0 0.0
    %2514 = vmatprep.mubr.f32.mxu0 0.0
    %2515 = vmatmul.mubr.f32.gmra.mrb[0].mxu0 %v2237
    %v2516 = vpop.f32.mrb[0].mxu0
    %v2517 = vadd.f32 0.0, %v2516
    %v2518 = vpop.f32.mrb[0].mxu0
    %2519 = vdwg.mxu0
    %2520 = vmatprep.subr.mxu0 0.0
    %2521 = vmatpush1.xpose.msra.mxu0 %v2374
    %2522 = vmatprep.subr.mxu0 0.0
    %2523 = vmatpush1.xpose.msra.mxu0 0.0
    %2524 = vmatprep.subr.mxu0 0.0
    %2525 = vmatpush1.xpose.msra.mxu0 0.0
    %2526 = vmatprep.subr.mxu0 0.0
    %2527 = vmatpush1.xpose.msra.mxu0 0.0
    %2528 = vmatprep.subr.mxu0 0.0
    %2529 = vmatpush1.xpose.msra.mxu0 0.0
    %2530 = vmatprep.subr.mxu0 0.0
    %2531 = vmatpush1.xpose.msra.mxu0 0.0
    %2532 = vmatprep.subr.mxu0 0.0
    %2533 = vmatpush1.xpose.msra.mxu0 0.0
    %2534 = vmatprep.subr.mxu0 0.0
    %2535 = vmatpush1.xpose.msra.mxu0 0.0
    %2536 = vmatprep.subr.mxu0 0.0
    %2537 = vmatpush1.xpose.msra.mxu0 0.0
    %2538 = vmatprep.subr.mxu0 0.0
    %2539 = vmatpush1.xpose.msra.mxu0 0.0
    %2540 = vmatprep.subr.mxu0 0.0
    %2541 = vmatpush1.xpose.msra.mxu0 0.0
    %2542 = vmatprep.subr.mxu0 0.0
    %2543 = vmatpush1.xpose.msra.mxu0 0.0
    %2544 = vmatprep.subr.mxu0 0.0
    %2545 = vmatpush1.xpose.msra.mxu0 0.0
    %2546 = vmatprep.subr.mxu0 0.0
    %2547 = vmatpush1.xpose.msra.mxu0 0.0
    %2548 = vmatprep.subr.mxu0 0.0
    %2549 = vmatpush1.xpose.msra.mxu0 0.0
    %2550 = vmatprep.subr.mxu0 0.0
    %2551 = vmatpush1.xpose.msra.mxu0 0.0
    %2552 = vmatprep.subr.mxu0 0.0
    %2553 = vmatpush1.xpose.msra.mxu0 0.0
    %2554 = vmatprep.subr.mxu0 0.0
    %2555 = vmatpush1.xpose.msra.mxu0 0.0
    %2556 = vmatprep.subr.mxu0 0.0
    %2557 = vmatpush1.xpose.msra.mxu0 0.0
    %2558 = vmatprep.subr.mxu0 0.0
    %2559 = vmatpush1.xpose.msra.mxu0 0.0
    %2560 = vmatprep.subr.mxu0 0.0
    %2561 = vmatpush1.xpose.msra.mxu0 0.0
    %2562 = vmatprep.subr.mxu0 0.0
    %2563 = vmatpush1.xpose.msra.mxu0 0.0
    %2564 = vmatprep.subr.mxu0 0.0
    %2565 = vmatpush1.xpose.msra.mxu0 0.0
    %2566 = vmatprep.subr.mxu0 0.0
    %2567 = vmatpush1.xpose.msra.mxu0 0.0
    %2568 = vmatprep.subr.mxu0 0.0
    %2569 = vmatpush1.xpose.msra.mxu0 0.0
    %2570 = vmatprep.subr.mxu0 0.0
    %2571 = vmatpush1.xpose.msra.mxu0 0.0
    %2572 = vmatprep.subr.mxu0 0.0
    %2573 = vmatpush1.xpose.msra.mxu0 0.0
    %2574 = vmatprep.subr.mxu0 0.0
    %2575 = vmatpush1.xpose.msra.mxu0 0.0
    %2576 = vmatprep.subr.mxu0 0.0
    %2577 = vmatpush1.xpose.msra.mxu0 0.0
    %2578 = vmatprep.subr.mxu0 0.0
    %2579 = vmatpush1.xpose.msra.mxu0 0.0
    %2580 = vmatprep.subr.mxu0 0.0
    %2581 = vmatpush1.xpose.msra.mxu0 0.0
    %2582 = vmatprep.subr.mxu0 0.0
    %2583 = vmatpush1.xpose.msra.mxu0 0.0
    %2584 = vmatprep.mubr.f32.mxu0 0.0
    %2585 = vmatmul.mubr.f32.gmra.mrb[0].mxu0 %v2238
    %v2586 = vpop.f32.mrb[0].mxu0
    %v2587 = vadd.f32 0.0, %v2586
    %v2588 = vpop.f32.mrb[0].mxu0
    %2589 = vdwg.mxu0
    %2590 = vmatprep.subr.mxu0 0.0
    %2591 = vmatpush1.xpose.msra.mxu0 %v2375
    %2592 = vmatprep.subr.mxu0 0.0
    %2593 = vmatpush1.xpose.msra.mxu0 0.0
    %2594 = vmatprep.subr.mxu0 0.0
    %2595 = vmatpush1.xpose.msra.mxu0 0.0
    %2596 = vmatprep.subr.mxu0 0.0
    %2597 = vmatpush1.xpose.msra.mxu0 0.0
    %2598 = vmatprep.subr.mxu0 0.0
    %2599 = vmatpush1.xpose.msra.mxu0 0.0
    %2600 = vmatprep.subr.mxu0 0.0
    %2601 = vmatpush1.xpose.msra.mxu0 0.0
    %2602 = vmatprep.subr.mxu0 0.0
    %2603 = vmatpush1.xpose.msra.mxu0 0.0
    %2604 = vmatprep.subr.mxu0 0.0
    %2605 = vmatpush1.xpose.msra.mxu0 0.0
    %2606 = vmatprep.subr.mxu0 0.0
    %2607 = vmatpush1.xpose.msra.mxu0 0.0
    %2608 = vmatprep.subr.mxu0 0.0
    %2609 = vmatpush1.xpose.msra.mxu0 0.0
    %2610 = vmatprep.subr.mxu0 0.0
    %2611 = vmatpush1.xpose.msra.mxu0 0.0
    %2612 = vmatprep.subr.mxu0 0.0
    %2613 = vmatpush1.xpose.msra.mxu0 0.0
    %2614 = vmatprep.subr.mxu0 0.0
    %2615 = vmatpush1.xpose.msra.mxu0 0.0
    %2616 = vmatprep.subr.mxu0 0.0
    %2617 = vmatpush1.xpose.msra.mxu0 0.0
    %2618 = vmatprep.subr.mxu0 0.0
    %2619 = vmatpush1.xpose.msra.mxu0 0.0
    %2620 = vmatprep.subr.mxu0 0.0
    %2621 = vmatpush1.xpose.msra.mxu0 0.0
    %2622 = vmatprep.subr.mxu0 0.0
    %2623 = vmatpush1.xpose.msra.mxu0 0.0
    %2624 = vmatprep.subr.mxu0 0.0
    %2625 = vmatpush1.xpose.msra.mxu0 0.0
    %2626 = vmatprep.subr.mxu0 0.0
    %2627 = vmatpush1.xpose.msra.mxu0 0.0
    %2628 = vmatprep.subr.mxu0 0.0
    %2629 = vmatpush1.xpose.msra.mxu0 0.0
    %2630 = vmatprep.subr.mxu0 0.0
    %2631 = vmatpush1.xpose.msra.mxu0 0.0
    %2632 = vmatprep.subr.mxu0 0.0
    %2633 = vmatpush1.xpose.msra.mxu0 0.0
    %2634 = vmatprep.subr.mxu0 0.0
    %2635 = vmatpush1.xpose.msra.mxu0 0.0
    %2636 = vmatprep.subr.mxu0 0.0
    %2637 = vmatpush1.xpose.msra.mxu0 0.0
    %2638 = vmatprep.subr.mxu0 0.0
    %2639 = vmatpush1.xpose.msra.mxu0 0.0
    %2640 = vmatprep.subr.mxu0 0.0
    %2641 = vmatpush1.xpose.msra.mxu0 0.0
    %2642 = vmatprep.subr.mxu0 0.0
    %2643 = vmatpush1.xpose.msra.mxu0 0.0
    %2644 = vmatprep.subr.mxu0 0.0
    %2645 = vmatpush1.xpose.msra.mxu0 0.0
    %2646 = vmatprep.subr.mxu0 0.0
    %2647 = vmatpush1.xpose.msra.mxu0 0.0
    %2648 = vmatprep.subr.mxu0 0.0
    %2649 = vmatpush1.xpose.msra.mxu0 0.0
    %2650 = vmatprep.subr.mxu0 0.0
    %2651 = vmatpush1.xpose.msra.mxu0 0.0
    %2652 = vmatprep.subr.mxu0 0.0
    %2653 = vmatpush1.xpose.msra.mxu0 0.0
    %2654 = vmatprep.mubr.f32.mxu0 0.0
    %2655 = vmatmul.mubr.f32.gmra.mrb[0].mxu0 %v2239
    %v2656 = vpop.f32.mrb[0].mxu0
    %v2657 = vadd.f32 0.0, %v2656
    %v2658 = vpop.f32.mrb[0].mxu0
    %2659 = vdwg.mxu0
    %2660 = vmatprep.subr.mxu0 0.0
    %2661 = vmatpush1.xpose.msra.mxu0 %v2376
    %2662 = vmatprep.subr.mxu0 0.0
    %2663 = vmatpush1.xpose.msra.mxu0 0.0
    %2664 = vmatprep.subr.mxu0 0.0
    %2665 = vmatpush1.xpose.msra.mxu0 0.0
    %2666 = vmatprep.subr.mxu0 0.0
    %2667 = vmatpush1.xpose.msra.mxu0 0.0
    %2668 = vmatprep.subr.mxu0 0.0
    %2669 = vmatpush1.xpose.msra.mxu0 0.0
    %2670 = vmatprep.subr.mxu0 0.0
    %2671 = vmatpush1.xpose.msra.mxu0 0.0
    %2672 = vmatprep.subr.mxu0 0.0
    %2673 = vmatpush1.xpose.msra.mxu0 0.0
    %2674 = vmatprep.subr.mxu0 0.0
    %2675 = vmatpush1.xpose.msra.mxu0 0.0
    %2676 = vmatprep.subr.mxu0 0.0
    %2677 = vmatpush1.xpose.msra.mxu0 0.0
    %2678 = vmatprep.subr.mxu0 0.0
    %2679 = vmatpush1.xpose.msra.mxu0 0.0
    %2680 = vmatprep.subr.mxu0 0.0
    %2681 = vmatpush1.xpose.msra.mxu0 0.0
    %2682 = vmatprep.subr.mxu0 0.0
    %2683 = vmatpush1.xpose.msra.mxu0 0.0
    %2684 = vmatprep.subr.mxu0 0.0
    %2685 = vmatpush1.xpose.msra.mxu0 0.0
    %2686 = vmatprep.subr.mxu0 0.0
    %2687 = vmatpush1.xpose.msra.mxu0 0.0
    %2688 = vmatprep.subr.mxu0 0.0
    %2689 = vmatpush1.xpose.msra.mxu0 0.0
    %2690 = vmatprep.subr.mxu0 0.0
    %2691 = vmatpush1.xpose.msra.mxu0 0.0
    %2692 = vmatprep.subr.mxu0 0.0
    %2693 = vmatpush1.xpose.msra.mxu0 0.0
    %2694 = vmatprep.subr.mxu0 0.0
    %2695 = vmatpush1.xpose.msra.mxu0 0.0
    %2696 = vmatprep.subr.mxu0 0.0
    %2697 = vmatpush1.xpose.msra.mxu0 0.0
    %2698 = vmatprep.subr.mxu0 0.0
    %2699 = vmatpush1.xpose.msra.mxu0 0.0
    %2700 = vmatprep.subr.mxu0 0.0
    %2701 = vmatpush1.xpose.msra.mxu0 0.0
    %2702 = vmatprep.subr.mxu0 0.0
    %2703 = vmatpush1.xpose.msra.mxu0 0.0
    %2704 = vmatprep.subr.mxu0 0.0
    %2705 = vmatpush1.xpose.msra.mxu0 0.0
    %2706 = vmatprep.subr.mxu0 0.0
    %2707 = vmatpush1.xpose.msra.mxu0 0.0
    %2708 = vmatprep.subr.mxu0 0.0
    %2709 = vmatpush1.xpose.msra.mxu0 0.0
    %2710 = vmatprep.subr.mxu0 0.0
    %2711 = vmatpush1.xpose.msra.mxu0 0.0
    %2712 = vmatprep.subr.mxu0 0.0
    %2713 = vmatpush1.xpose.msra.mxu0 0.0
    %2714 = vmatprep.subr.mxu0 0.0
    %2715 = vmatpush1.xpose.msra.mxu0 0.0
    %2716 = vmatprep.subr.mxu0 0.0
    %2717 = vmatpush1.xpose.msra.mxu0 0.0
    %2718 = vmatprep.subr.mxu0 0.0
    %2719 = vmatpush1.xpose.msra.mxu0 0.0
    %2720 = vmatprep.subr.mxu0 0.0
    %2721 = vmatpush1.xpose.msra.mxu0 0.0
    %2722 = vmatprep.subr.mxu0 0.0
    %2723 = vmatpush1.xpose.msra.mxu0 0.0
    %2724 = vmatprep.mubr.f32.mxu0 0.0
    %2725 = vmatmul.mubr.f32.gmra.mrb[0].mxu0 %v2240
    %v2726 = vpop.f32.mrb[0].mxu0
    %v2727 = vadd.f32 0.0, %v2726
    %v2728 = vpop.f32.mrb[0].mxu0
    %2729 = vdwg.mxu0
    %2730 = vmatprep.subr.mxu0 0.0
    %2731 = vmatpush1.xpose.msra.mxu0 %v2377
    %2732 = vmatprep.subr.mxu0 0.0
    %2733 = vmatpush1.xpose.msra.mxu0 0.0
    %2734 = vmatprep.subr.mxu0 0.0
    %2735 = vmatpush1.xpose.msra.mxu0 0.0
    %2736 = vmatprep.subr.mxu0 0.0
    %2737 = vmatpush1.xpose.msra.mxu0 0.0
    %2738 = vmatprep.subr.mxu0 0.0
    %2739 = vmatpush1.xpose.msra.mxu0 0.0
    %2740 = vmatprep.subr.mxu0 0.0
    %2741 = vmatpush1.xpose.msra.mxu0 0.0
    %2742 = vmatprep.subr.mxu0 0.0
    %2743 = vmatpush1.xpose.msra.mxu0 0.0
    %2744 = vmatprep.subr.mxu0 0.0
    %2745 = vmatpush1.xpose.msra.mxu0 0.0
    %2746 = vmatprep.subr.mxu0 0.0
    %2747 = vmatpush1.xpose.msra.mxu0 0.0
    %2748 = vmatprep.subr.mxu0 0.0
    %2749 = vmatpush1.xpose.msra.mxu0 0.0
    %2750 = vmatprep.subr.mxu0 0.0
    %2751 = vmatpush1.xpose.msra.mxu0 0.0
    %2752 = vmatprep.subr.mxu0 0.0
    %2753 = vmatpush1.xpose.msra.mxu0 0.0
    %2754 = vmatprep.subr.mxu0 0.0
    %2755 = vmatpush1.xpose.msra.mxu0 0.0
    %2756 = vmatprep.subr.mxu0 0.0
    %2757 = vmatpush1.xpose.msra.mxu0 0.0
    %2758 = vmatprep.subr.mxu0 0.0
    %2759 = vmatpush1.xpose.msra.mxu0 0.0
    %2760 = vmatprep.subr.mxu0 0.0
    %2761 = vmatpush1.xpose.msra.mxu0 0.0
    %2762 = vmatprep.subr.mxu0 0.0
    %2763 = vmatpush1.xpose.msra.mxu0 0.0
    %2764 = vmatprep.subr.mxu0 0.0
    %2765 = vmatpush1.xpose.msra.mxu0 0.0
    %2766 = vmatprep.subr.mxu0 0.0
    %2767 = vmatpush1.xpose.msra.mxu0 0.0
    %2768 = vmatprep.subr.mxu0 0.0
    %2769 = vmatpush1.xpose.msra.mxu0 0.0
    %2770 = vmatprep.subr.mxu0 0.0
    %2771 = vmatpush1.xpose.msra.mxu0 0.0
    %2772 = vmatprep.subr.mxu0 0.0
    %2773 = vmatpush1.xpose.msra.mxu0 0.0
    %2774 = vmatprep.subr.mxu0 0.0
    %2775 = vmatpush1.xpose.msra.mxu0 0.0
    %2776 = vmatprep.subr.mxu0 0.0
    %2777 = vmatpush1.xpose.msra.mxu0 0.0
    %2778 = vmatprep.subr.mxu0 0.0
    %2779 = vmatpush1.xpose.msra.mxu0 0.0
    %2780 = vmatprep.subr.mxu0 0.0
    %2781 = vmatpush1.xpose.msra.mxu0 0.0
    %2782 = vmatprep.subr.mxu0 0.0
    %2783 = vmatpush1.xpose.msra.mxu0 0.0
    %2784 = vmatprep.subr.mxu0 0.0
    %2785 = vmatpush1.xpose.msra.mxu0 0.0
    %2786 = vmatprep.subr.mxu0 0.0
    %2787 = vmatpush1.xpose.msra.mxu0 0.0
    %2788 = vmatprep.subr.mxu0 0.0
    %2789 = vmatpush1.xpose.msra.mxu0 0.0
    %2790 = vmatprep.subr.mxu0 0.0
    %2791 = vmatpush1.xpose.msra.mxu0 0.0
    %2792 = vmatprep.subr.mxu0 0.0
    %2793 = vmatpush1.xpose.msra.mxu0 0.0
    %2794 = vmatprep.mubr.f32.mxu0 0.0
    %2795 = vmatmul.mubr.f32.gmra.mrb[0].mxu0 %v2241
    %v2796 = vpop.f32.mrb[0].mxu0
    %v2797 = vadd.f32 0.0, %v2796
    %v2798 = vpop.f32.mrb[0].mxu0
    %2799 = vdwg.mxu0
    %2800 = vmatprep.subr.mxu0 0.0
    %2801 = vmatpush1.xpose.msra.mxu0 %v2378
    %2802 = vmatprep.subr.mxu0 0.0
    %2803 = vmatpush1.xpose.msra.mxu0 0.0
    %2804 = vmatprep.subr.mxu0 0.0
    %2805 = vmatpush1.xpose.msra.mxu0 0.0
    %2806 = vmatprep.subr.mxu0 0.0
    %2807 = vmatpush1.xpose.msra.mxu0 0.0
    %2808 = vmatprep.subr.mxu0 0.0
    %2809 = vmatpush1.xpose.msra.mxu0 0.0
    %2810 = vmatprep.subr.mxu0 0.0
    %2811 = vmatpush1.xpose.msra.mxu0 0.0
    %2812 = vmatprep.subr.mxu0 0.0
    %2813 = vmatpush1.xpose.msra.mxu0 0.0
    %2814 = vmatprep.subr.mxu0 0.0
    %2815 = vmatpush1.xpose.msra.mxu0 0.0
    %2816 = vmatprep.subr.mxu0 0.0
    %2817 = vmatpush1.xpose.msra.mxu0 0.0
    %2818 = vmatprep.subr.mxu0 0.0
    %2819 = vmatpush1.xpose.msra.mxu0 0.0
    %2820 = vmatprep.subr.mxu0 0.0
    %2821 = vmatpush1.xpose.msra.mxu0 0.0
    %2822 = vmatprep.subr.mxu0 0.0
    %2823 = vmatpush1.xpose.msra.mxu0 0.0
    %2824 = vmatprep.subr.mxu0 0.0
    %2825 = vmatpush1.xpose.msra.mxu0 0.0
    %2826 = vmatprep.subr.mxu0 0.0
    %2827 = vmatpush1.xpose.msra.mxu0 0.0
    %2828 = vmatprep.subr.mxu0 0.0
    %2829 = vmatpush1.xpose.msra.mxu0 0.0
    %2830 = vmatprep.subr.mxu0 0.0
    %2831 = vmatpush1.xpose.msra.mxu0 0.0
    %2832 = vmatprep.subr.mxu0 0.0
    %2833 = vmatpush1.xpose.msra.mxu0 0.0
    %2834 = vmatprep.subr.mxu0 0.0
    %2835 = vmatpush1.xpose.msra.mxu0 0.0
    %2836 = vmatprep.subr.mxu0 0.0
    %2837 = vmatpush1.xpose.msra.mxu0 0.0
    %2838 = vmatprep.subr.mxu0 0.0
    %2839 = vmatpush1.xpose.msra.mxu0 0.0
    %2840 = vmatprep.subr.mxu0 0.0
    %2841 = vmatpush1.xpose.msra.mxu0 0.0
    %2842 = vmatprep.subr.mxu0 0.0
    %2843 = vmatpush1.xpose.msra.mxu0 0.0
    %2844 = vmatprep.subr.mxu0 0.0
    %2845 = vmatpush1.xpose.msra.mxu0 0.0
    %2846 = vmatprep.subr.mxu0 0.0
    %2847 = vmatpush1.xpose.msra.mxu0 0.0
    %2848 = vmatprep.subr.mxu0 0.0
    %2849 = vmatpush1.xpose.msra.mxu0 0.0
    %2850 = vmatprep.subr.mxu0 0.0
    %2851 = vmatpush1.xpose.msra.mxu0 0.0
    %2852 = vmatprep.subr.mxu0 0.0
    %2853 = vmatpush1.xpose.msra.mxu0 0.0
    %2854 = vmatprep.subr.mxu0 0.0
    %2855 = vmatpush1.xpose.msra.mxu0 0.0
    %2856 = vmatprep.subr.mxu0 0.0
    %2857 = vmatpush1.xpose.msra.mxu0 0.0
    %2858 = vmatprep.subr.mxu0 0.0
    %2859 = vmatpush1.xpose.msra.mxu0 0.0
    %2860 = vmatprep.subr.mxu0 0.0
    %2861 = vmatpush1.xpose.msra.mxu0 0.0
    %2862 = vmatprep.subr.mxu0 0.0
    %2863 = vmatpush1.xpose.msra.mxu0 0.0
    %2864 = vmatprep.mubr.f32.mxu0 0.0
    %2865 = vmatmul.mubr.f32.gmra.mrb[0].mxu0 %v2242
    %v2866 = vpop.f32.mrb[0].mxu0
    %v2867 = vadd.f32 0.0, %v2866
    %v2868 = vpop.f32.mrb[0].mxu0
    %2869 = vdwg.mxu0
    %2870 = vmatprep.subr.mxu0 0.0
    %2871 = vmatpush1.xpose.msra.mxu0 %v2379
    %2872 = vmatprep.subr.mxu0 0.0
    %2873 = vmatpush1.xpose.msra.mxu0 0.0
    %2874 = vmatprep.subr.mxu0 0.0
    %2875 = vmatpush1.xpose.msra.mxu0 0.0
    %2876 = vmatprep.subr.mxu0 0.0
    %2877 = vmatpush1.xpose.msra.mxu0 0.0
    %2878 = vmatprep.subr.mxu0 0.0
    %2879 = vmatpush1.xpose.msra.mxu0 0.0
    %2880 = vmatprep.subr.mxu0 0.0
    %2881 = vmatpush1.xpose.msra.mxu0 0.0
    %2882 = vmatprep.subr.mxu0 0.0
    %2883 = vmatpush1.xpose.msra.mxu0 0.0
    %2884 = vmatprep.subr.mxu0 0.0
    %2885 = vmatpush1.xpose.msra.mxu0 0.0
    %2886 = vmatprep.subr.mxu0 0.0
    %2887 = vmatpush1.xpose.msra.mxu0 0.0
    %2888 = vmatprep.subr.mxu0 0.0
    %2889 = vmatpush1.xpose.msra.mxu0 0.0
    %2890 = vmatprep.subr.mxu0 0.0
    %2891 = vmatpush1.xpose.msra.mxu0 0.0
    %2892 = vmatprep.subr.mxu0 0.0
    %2893 = vmatpush1.xpose.msra.mxu0 0.0
    %2894 = vmatprep.subr.mxu0 0.0
    %2895 = vmatpush1.xpose.msra.mxu0 0.0
    %2896 = vmatprep.subr.mxu0 0.0
    %2897 = vmatpush1.xpose.msra.mxu0 0.0
    %2898 = vmatprep.subr.mxu0 0.0
    %2899 = vmatpush1.xpose.msra.mxu0 0.0
    %2900 = vmatprep.subr.mxu0 0.0
    %2901 = vmatpush1.xpose.msra.mxu0 0.0
    %2902 = vmatprep.subr.mxu0 0.0
    %2903 = vmatpush1.xpose.msra.mxu0 0.0
    %2904 = vmatprep.subr.mxu0 0.0
    %2905 = vmatpush1.xpose.msra.mxu0 0.0
    %2906 = vmatprep.subr.mxu0 0.0
    %2907 = vmatpush1.xpose.msra.mxu0 0.0
    %2908 = vmatprep.subr.mxu0 0.0
    %2909 = vmatpush1.xpose.msra.mxu0 0.0
    %2910 = vmatprep.subr.mxu0 0.0
    %2911 = vmatpush1.xpose.msra.mxu0 0.0
    %2912 = vmatprep.subr.mxu0 0.0
    %2913 = vmatpush1.xpose.msra.mxu0 0.0
    %2914 = vmatprep.subr.mxu0 0.0
    %2915 = vmatpush1.xpose.msra.mxu0 0.0
    %2916 = vmatprep.subr.mxu0 0.0
    %2917 = vmatpush1.xpose.msra.mxu0 0.0
    %2918 = vmatprep.subr.mxu0 0.0
    %2919 = vmatpush1.xpose.msra.mxu0 0.0
    %2920 = vmatprep.subr.mxu0 0.0
    %2921 = vmatpush1.xpose.msra.mxu0 0.0
    %2922 = vmatprep.subr.mxu0 0.0
    %2923 = vmatpush1.xpose.msra.mxu0 0.0
    %2924 = vmatprep.subr.mxu0 0.0
    %2925 = vmatpush1.xpose.msra.mxu0 0.0
    %2926 = vmatprep.subr.mxu0 0.0
    %2927 = vmatpush1.xpose.msra.mxu0 0.0
    %2928 = vmatprep.subr.mxu0 0.0
    %2929 = vmatpush1.xpose.msra.mxu0 0.0
    %2930 = vmatprep.subr.mxu0 0.0
    %2931 = vmatpush1.xpose.msra.mxu0 0.0
    %2932 = vmatprep.subr.mxu0 0.0
    %2933 = vmatpush1.xpose.msra.mxu0 0.0
    %2934 = vmatprep.mubr.f32.mxu0 0.0
    %2935 = vmatmul.mubr.f32.gmra.mrb[0].mxu0 %v2243
    %v2936 = vpop.f32.mrb[0].mxu0
    %v2937 = vadd.f32 0.0, %v2936
    %v2938 = vpop.f32.mrb[0].mxu0
    %2939 = vdwg.mxu0
    %v2940 = vtanh.pop %v2447
    %v2941 = vtanh.pop %v2517
    %v2942 = vtanh.pop %v2587
    %v2943 = vtanh.pop %v2657
    %v2944 = vtanh.pop %v2727
    %v2945 = vtanh.pop %v2797
    %v2946 = vtanh.pop %v2867
    %v2947 = vtanh.pop %v2937
    %vm2948 = vcmask 64512
    %v2949 = vsel %vm2948, %v2940, 0.0
    %2950 = vadd.xlane.f32.xlu0 %v2949
    %v2951 = vpop.xlane.xlu0 %2950
    %v2952 = vsel %vm2948, %v2941, 0.0
    %2953 = vadd.xlane.f32.xlu0 %v2952
    %v2954 = vpop.xlane.xlu0 %2953
    %v2955 = vsel %vm2948, %v2942, 0.0
    %2956 = vadd.xlane.f32.xlu0 %v2955
    %v2957 = vpop.xlane.xlu0 %2956
    %v2958 = vsel %vm2948, %v2943, 0.0
    %2959 = vadd.xlane.f32.xlu0 %v2958
    %v2960 = vpop.xlane.xlu0 %2959
    %v2961 = vsel %vm2948, %v2944, 0.0
    %2962 = vadd.xlane.f32.xlu0 %v2961
    %v2963 = vpop.xlane.xlu0 %2962
    %v2964 = vsel %vm2948, %v2945, 0.0
    %2965 = vadd.xlane.f32.xlu0 %v2964
    %v2966 = vpop.xlane.xlu0 %2965
    %v2967 = vsel %vm2948, %v2946, 0.0
    %2968 = vadd.xlane.f32.xlu0 %v2967
    %v2969 = vpop.xlane.xlu0 %2968
    %v2970 = vsel %vm2948, %v2947, 0.0
    %2971 = vadd.xlane.f32.xlu0 %v2970
    %v2972 = vpop.xlane.xlu0 %2971
    %v2973 = vmul.f32 %v2951, 0.125
    %v2974 = vmul.f32 %v2954, 0.125
    %v2975 = vmul.f32 %v2957, 0.125
    %v2976 = vmul.f32 %v2960, 0.125
    %v2977 = vmul.f32 %v2963, 0.125
    %v2978 = vmul.f32 %v2966, 0.125
    %v2979 = vmul.f32 %v2969, 0.125
    %v2980 = vmul.f32 %v2972, 0.125
    %v2989 = vlaneseq
    %v2990 = vand.u32 %v2989, 127
    %v2991 = vlaneseq
    %v2992 = vshrl.u32 %v2991, 7
    %v2993 = vsub.s32 %v2990, %v2992
    %v2994 = vrot.slane %v2973, %v2993
    %v2995 = vlaneseq
    %v2996 = vshrl.u32 %v2995, 7
    %v2997 = vsub.s32 %v2990, %v2996
    %v2998 = vrot.slane %v2974, %v2997
    %v2999 = vlaneseq
    %v3000 = vshrl.u32 %v2999, 7
    %v3001 = vsub.s32 %v2990, %v3000
    %v3002 = vrot.slane %v2975, %v3001
    %v3003 = vlaneseq
    %v3004 = vshrl.u32 %v3003, 7
    %v3005 = vsub.s32 %v2990, %v3004
    %v3006 = vrot.slane %v2976, %v3005
    %v3007 = vlaneseq
    %v3008 = vshrl.u32 %v3007, 7
    %v3009 = vsub.s32 %v2990, %v3008
    %v3010 = vrot.slane %v2977, %v3009
    %v3011 = vlaneseq
    %v3012 = vshrl.u32 %v3011, 7
    %v3013 = vsub.s32 %v2990, %v3012
    %v3014 = vrot.slane %v2978, %v3013
    %v3015 = vlaneseq
    %v3016 = vshrl.u32 %v3015, 7
    %v3017 = vsub.s32 %v2990, %v3016
    %v3018 = vrot.slane %v2979, %v3017
    %v3019 = vlaneseq
    %v3020 = vshrl.u32 %v3019, 7
    %v3021 = vsub.s32 %v2990, %v3020
    %v3022 = vrot.slane %v2980, %v3021
    %vm3023 = vcmask 1041409
    %v3024 = vsel %vm3023, %v2998, %v2994
    %vm3025 = vcmask 1042434
    %v3026 = vsel %vm3025, %v3002, %v3024
    %vm3027 = vcmask 1043459
    %v3028 = vsel %vm3027, %v3006, %v3026
    %vm3029 = vcmask 1044484
    %v3030 = vsel %vm3029, %v3010, %v3028
    %vm3031 = vcmask 1045509
    %v3032 = vsel %vm3031, %v3014, %v3030
    %vm3033 = vcmask 1046534
    %v3034 = vsel %vm3033, %v3018, %v3032
    %vm3035 = vcmask 1047559
    %v3036 = vsel %vm3035, %v3022, %v3034
    %v3038 = vsel %vm2948, %v3036, -inf
    %3039 = vmax.xlane.f32.xlu0 %v3038
    %v3040 = vpop.xlane.xlu0 %3039
    %v3042 = vlaneseq
    %v3043 = vshrl.u32 %v3042, 7
    %v3044 = vsub.s32 0, %v3043
    %v3045 = vrot.slane %v3040, %v3044
    %v3046 = vlaneseq
    %v3047 = vshrl.u32 %v3046, 7
    %v3048 = vsub.s32 1, %v3047
    %v3049 = vrot.slane %v3040, %v3048
    %v3050 = vlaneseq
    %v3051 = vshrl.u32 %v3050, 7
    %v3052 = vsub.s32 2, %v3051
    %v3053 = vrot.slane %v3040, %v3052
    %v3054 = vlaneseq
    %v3055 = vshrl.u32 %v3054, 7
    %v3056 = vsub.s32 3, %v3055
    %v3057 = vrot.slane %v3040, %v3056
    %v3058 = vlaneseq
    %v3059 = vshrl.u32 %v3058, 7
    %v3060 = vsub.s32 4, %v3059
    %v3061 = vrot.slane %v3040, %v3060
    %v3062 = vlaneseq
    %v3063 = vshrl.u32 %v3062, 7
    %v3064 = vsub.s32 5, %v3063
    %v3065 = vrot.slane %v3040, %v3064
    %v3066 = vlaneseq
    %v3067 = vshrl.u32 %v3066, 7
    %v3068 = vsub.s32 6, %v3067
    %v3069 = vrot.slane %v3040, %v3068
    %v3070 = vlaneseq
    %v3071 = vshrl.u32 %v3070, 7
    %v3072 = vsub.s32 7, %v3071
    %v3073 = vrot.slane %v3040, %v3072
    %v3082 = vsub.f32 %v2973, %v3045
    %v3083 = vsub.f32 %v2974, %v3049
    %v3084 = vsub.f32 %v2975, %v3053
    %v3085 = vsub.f32 %v2976, %v3057
    %v3086 = vsub.f32 %v2977, %v3061
    %v3087 = vsub.f32 %v2978, %v3065
    %v3088 = vsub.f32 %v2979, %v3069
    %v3089 = vsub.f32 %v2980, %v3073
    %v3090 = vmul.f32 %v3082, 1.442695
    %v3091 = vpow.pop %v3090
    %v3092 = vmul.f32 %v3083, 1.442695
    %v3093 = vpow.pop %v3092
    %v3094 = vmul.f32 %v3084, 1.442695
    %v3095 = vpow.pop %v3094
    %v3096 = vmul.f32 %v3085, 1.442695
    %v3097 = vpow.pop %v3096
    %v3098 = vmul.f32 %v3086, 1.442695
    %v3099 = vpow.pop %v3098
    %v3100 = vmul.f32 %v3087, 1.442695
    %v3101 = vpow.pop %v3100
    %v3102 = vmul.f32 %v3088, 1.442695
    %v3103 = vpow.pop %v3102
    %v3104 = vmul.f32 %v3089, 1.442695
    %v3105 = vpow.pop %v3104
    %3114 = vset.pattern.permute.xlu0 0
    %3115 = vperm.xlu0 %3114, %v3091
    %v3116 = vpop.permute.xlu0 %3115
    %3117 = vset.pattern.permute.xlu0 0
    %3118 = vperm.xlu0 %3117, %v3093
    %v3119 = vpop.permute.xlu0 %3118
    %3120 = vset.pattern.permute.xlu0 0
    %3121 = vperm.xlu0 %3120, %v3095
    %v3122 = vpop.permute.xlu0 %3121
    %3123 = vset.pattern.permute.xlu0 0
    %3124 = vperm.xlu0 %3123, %v3097
    %v3125 = vpop.permute.xlu0 %3124
    %3126 = vset.pattern.permute.xlu0 0
    %3127 = vperm.xlu0 %3126, %v3099
    %v3128 = vpop.permute.xlu0 %3127
    %3129 = vset.pattern.permute.xlu0 0
    %3130 = vperm.xlu0 %3129, %v3101
    %v3131 = vpop.permute.xlu0 %3130
    %3132 = vset.pattern.permute.xlu0 0
    %3133 = vperm.xlu0 %3132, %v3103
    %v3134 = vpop.permute.xlu0 %3133
    %3135 = vset.pattern.permute.xlu0 0
    %3136 = vperm.xlu0 %3135, %v3105
    %v3137 = vpop.permute.xlu0 %3136
    %v3138 = vlaneseq
    %v3139 = vshrl.u32 %v3138, 7
    %v3140 = vsub.s32 %v2990, %v3139
    %v3141 = vrot.slane %v3116, %v3140
    %v3142 = vlaneseq
    %v3143 = vshrl.u32 %v3142, 7
    %v3144 = vsub.s32 %v2990, %v3143
    %v3145 = vrot.slane %v3119, %v3144
    %v3146 = vlaneseq
    %v3147 = vshrl.u32 %v3146, 7
    %v3148 = vsub.s32 %v2990, %v3147
    %v3149 = vrot.slane %v3122, %v3148
    %v3150 = vlaneseq
    %v3151 = vshrl.u32 %v3150, 7
    %v3152 = vsub.s32 %v2990, %v3151
    %v3153 = vrot.slane %v3125, %v3152
    %v3154 = vlaneseq
    %v3155 = vshrl.u32 %v3154, 7
    %v3156 = vsub.s32 %v2990, %v3155
    %v3157 = vrot.slane %v3128, %v3156
    %v3158 = vlaneseq
    %v3159 = vshrl.u32 %v3158, 7
    %v3160 = vsub.s32 %v2990, %v3159
    %v3161 = vrot.slane %v3131, %v3160
    %v3162 = vlaneseq
    %v3163 = vshrl.u32 %v3162, 7
    %v3164 = vsub.s32 %v2990, %v3163
    %v3165 = vrot.slane %v3134, %v3164
    %v3166 = vlaneseq
    %v3167 = vshrl.u32 %v3166, 7
    %v3168 = vsub.s32 %v2990, %v3167
    %v3169 = vrot.slane %v3137, %v3168
    %v3170 = vsel %vm3023, %v3145, %v3141
    %v3171 = vsel %vm3025, %v3149, %v3170
    %v3172 = vsel %vm3027, %v3153, %v3171
    %v3173 = vsel %vm3029, %v3157, %v3172
    %v3174 = vsel %vm3031, %v3161, %v3173
    %v3175 = vsel %vm3033, %v3165, %v3174
    %v3176 = vsel %vm3035, %v3169, %v3175
    %v3178 = vsel %vm2948, %v3176, 0.0
    %3179 = vadd.xlane.f32.xlu0 %v3178
    %v3180 = vpop.xlane.xlu0 %3179
    %v3181 = vrcp.pop %v3180
    %v3183 = vlaneseq
    %v3184 = vshrl.u32 %v3183, 7
    %v3185 = vsub.s32 0, %v3184
    %v3186 = vrot.slane %v3181, %v3185
    %v3187 = vlaneseq
    %v3188 = vshrl.u32 %v3187, 7
    %v3189 = vsub.s32 1, %v3188
    %v3190 = vrot.slane %v3181, %v3189
    %v3191 = vlaneseq
    %v3192 = vshrl.u32 %v3191, 7
    %v3193 = vsub.s32 2, %v3192
    %v3194 = vrot.slane %v3181, %v3193
    %v3195 = vlaneseq
    %v3196 = vshrl.u32 %v3195, 7
    %v3197 = vsub.s32 3, %v3196
    %v3198 = vrot.slane %v3181, %v3197
    %v3199 = vlaneseq
    %v3200 = vshrl.u32 %v3199, 7
    %v3201 = vsub.s32 4, %v3200
    %v3202 = vrot.slane %v3181, %v3201
    %v3203 = vlaneseq
    %v3204 = vshrl.u32 %v3203, 7
    %v3205 = vsub.s32 5, %v3204
    %v3206 = vrot.slane %v3181, %v3205
    %v3207 = vlaneseq
    %v3208 = vshrl.u32 %v3207, 7
    %v3209 = vsub.s32 6, %v3208
    %v3210 = vrot.slane %v3181, %v3209
    %v3211 = vlaneseq
    %v3212 = vshrl.u32 %v3211, 7
    %v3213 = vsub.s32 7, %v3212
    %v3214 = vrot.slane %v3181, %v3213
    %v3223 = vmul.f32 %v3091, %v3186
    %v3224 = vmul.f32 %v3093, %v3190
    %v3225 = vmul.f32 %v3095, %v3194
    %v3226 = vmul.f32 %v3097, %v3198
    %v3227 = vmul.f32 %v3099, %v3202
    %v3228 = vmul.f32 %v3101, %v3206
    %v3229 = vmul.f32 %v3103, %v3210
    %v3230 = vmul.f32 %v3105, %v3214
    %v3231 = vrot.slane %v2949, 4
    %v3232 = vadd.f32 %v2949, %v3231
    %v3233 = vrot.slane %v3232, 2
    %v3234 = vadd.f32 %v3232, %v3233
    %v3235 = vrot.slane %v3234, 1
    %v3236 = vadd.f32 %v3234, %v3235
    %v3237 = vrot.slane %v2952, 4
    %v3238 = vadd.f32 %v2952, %v3237
    %v3239 = vrot.slane %v3238, 2
    %v3240 = vadd.f32 %v3238, %v3239
    %v3241 = vrot.slane %v3240, 1
    %v3242 = vadd.f32 %v3240, %v3241
    %v3243 = vrot.slane %v2955, 4
    %v3244 = vadd.f32 %v2955, %v3243
    %v3245 = vrot.slane %v3244, 2
    %v3246 = vadd.f32 %v3244, %v3245
    %v3247 = vrot.slane %v3246, 1
    %v3248 = vadd.f32 %v3246, %v3247
    %v3249 = vrot.slane %v2958, 4
    %v3250 = vadd.f32 %v2958, %v3249
    %v3251 = vrot.slane %v3250, 2
    %v3252 = vadd.f32 %v3250, %v3251
    %v3253 = vrot.slane %v3252, 1
    %v3254 = vadd.f32 %v3252, %v3253
    %v3255 = vrot.slane %v2961, 4
    %v3256 = vadd.f32 %v2961, %v3255
    %v3257 = vrot.slane %v3256, 2
    %v3258 = vadd.f32 %v3256, %v3257
    %v3259 = vrot.slane %v3258, 1
    %v3260 = vadd.f32 %v3258, %v3259
    %v3261 = vrot.slane %v2964, 4
    %v3262 = vadd.f32 %v2964, %v3261
    %v3263 = vrot.slane %v3262, 2
    %v3264 = vadd.f32 %v3262, %v3263
    %v3265 = vrot.slane %v3264, 1
    %v3266 = vadd.f32 %v3264, %v3265
    %v3267 = vrot.slane %v2967, 4
    %v3268 = vadd.f32 %v2967, %v3267
    %v3269 = vrot.slane %v3268, 2
    %v3270 = vadd.f32 %v3268, %v3269
    %v3271 = vrot.slane %v3270, 1
    %v3272 = vadd.f32 %v3270, %v3271
    %v3273 = vrot.slane %v2970, 4
    %v3274 = vadd.f32 %v2970, %v3273
    %v3275 = vrot.slane %v3274, 2
    %v3276 = vadd.f32 %v3274, %v3275
    %v3277 = vrot.slane %v3276, 1
    %v3278 = vadd.f32 %v3276, %v3277
    %v3279 = vmul.f32 %v3236, 0.125
    %v3280 = vmul.f32 %v3242, 0.125
    %v3281 = vmul.f32 %v3248, 0.125
    %v3282 = vmul.f32 %v3254, 0.125
    %v3283 = vmul.f32 %v3260, 0.125
    %v3284 = vmul.f32 %v3266, 0.125
    %v3285 = vmul.f32 %v3272, 0.125
    %v3286 = vmul.f32 %v3278, 0.125
    %v3295 = vsel %vm3023, %v3280, %v3279
    %v3296 = vsel %vm3025, %v3281, %v3295
    %v3297 = vsel %vm3027, %v3282, %v3296
    %v3298 = vsel %vm3029, %v3283, %v3297
    %v3299 = vsel %vm3031, %v3284, %v3298
    %v3300 = vsel %vm3033, %v3285, %v3299
    %v3301 = vsel %vm3035, %v3286, %v3300
    %v3303 = vsel %vm2948, %v3301, -inf
    %3304 = vmax.xlane.f32.xlu0 %v3303
    %v3305 = vpop.xlane.xlu0 %3304
    %v3307 = vrot.slane %v3305, 1
    %v3308 = vrot.slane %v3305, 2
    %v3309 = vrot.slane %v3305, 3
    %v3310 = vrot.slane %v3305, 4
    %v3311 = vrot.slane %v3305, 5
    %v3312 = vrot.slane %v3305, 6
    %v3313 = vrot.slane %v3305, 7
    %v3322 = vsub.f32 %v3279, %v3305
    %v3323 = vsub.f32 %v3280, %v3307
    %v3324 = vsub.f32 %v3281, %v3308
    %v3325 = vsub.f32 %v3282, %v3309
    %v3326 = vsub.f32 %v3283, %v3310
    %v3327 = vsub.f32 %v3284, %v3311
    %v3328 = vsub.f32 %v3285, %v3312
    %v3329 = vsub.f32 %v3286, %v3313
    %v3330 = vmul.f32 %v3322, 1.442695
    %v3331 = vpow.pop %v3330
    %v3332 = vmul.f32 %v3323, 1.442695
    %v3333 = vpow.pop %v3332
    %v3334 = vmul.f32 %v3324, 1.442695
    %v3335 = vpow.pop %v3334
    %v3336 = vmul.f32 %v3325, 1.442695
    %v3337 = vpow.pop %v3336
    %v3338 = vmul.f32 %v3326, 1.442695
    %v3339 = vpow.pop %v3338
    %v3340 = vmul.f32 %v3327, 1.442695
    %v3341 = vpow.pop %v3340
    %v3342 = vmul.f32 %v3328, 1.442695
    %v3343 = vpow.pop %v3342
    %v3344 = vmul.f32 %v3329, 1.442695
    %v3345 = vpow.pop %v3344
    %v3354 = vrot.slane %v3333, 7
    %v3355 = vsel %vm3023, %v3354, %v3331
    %v3356 = vrot.slane %v3335, 6
    %v3357 = vsel %vm3025, %v3356, %v3355
    %v3358 = vrot.slane %v3337, 5
    %v3359 = vsel %vm3027, %v3358, %v3357
    %v3360 = vrot.slane %v3339, 4
    %v3361 = vsel %vm3029, %v3360, %v3359
    %v3362 = vrot.slane %v3341, 3
    %v3363 = vsel %vm3031, %v3362, %v3361
    %v3364 = vrot.slane %v3343, 2
    %v3365 = vsel %vm3033, %v3364, %v3363
    %v3366 = vrot.slane %v3345, 1
    %v3367 = vsel %vm3035, %v3366, %v3365
    %v3369 = vsel %vm2948, %v3367, 0.0
    %3370 = vadd.xlane.f32.xlu0 %v3369
    %v3371 = vpop.xlane.xlu0 %3370
    %v3372 = vrcp.pop %v3371
    %v3374 = vrot.slane %v3372, 1
    %v3375 = vrot.slane %v3372, 2
    %v3376 = vrot.slane %v3372, 3
    %v3377 = vrot.slane %v3372, 4
    %v3378 = vrot.slane %v3372, 5
    %v3379 = vrot.slane %v3372, 6
    %v3380 = vrot.slane %v3372, 7
    %v3389 = vmul.f32 %v3331, %v3372
    %v3390 = vmul.f32 %v3333, %v3374
    %v3391 = vmul.f32 %v3335, %v3375
    %v3392 = vmul.f32 %v3337, %v3376
    %v3393 = vmul.f32 %v3339, %v3377
    %v3394 = vmul.f32 %v3341, %v3378
    %v3395 = vmul.f32 %v3343, %v3379
    %v3396 = vmul.f32 %v3345, %v3380
    %3398 = vset.pattern.permute.xlu0 0
    %3399 = vperm.xlu0 %3398, %v3223
    %v3400 = vpop.permute.xlu0 %3399
    %3403 = vset.pattern.permute.xlu0 0
    %3404 = vperm.xlu0 %3403, %v3224
    %v3405 = vpop.permute.xlu0 %3404
    %3408 = vset.pattern.permute.xlu0 0
    %3409 = vperm.xlu0 %3408, %v3225
    %v3410 = vpop.permute.xlu0 %3409
    %3413 = vset.pattern.permute.xlu0 0
    %3414 = vperm.xlu0 %3413, %v3226
    %v3415 = vpop.permute.xlu0 %3414
    %3418 = vset.pattern.permute.xlu0 0
    %3419 = vperm.xlu0 %3418, %v3227
    %v3420 = vpop.permute.xlu0 %3419
    %3423 = vset.pattern.permute.xlu0 0
    %3424 = vperm.xlu0 %3423, %v3228
    %v3425 = vpop.permute.xlu0 %3424
    %3428 = vset.pattern.permute.xlu0 0
    %3429 = vperm.xlu0 %3428, %v3229
    %v3430 = vpop.permute.xlu0 %3429
    %3433 = vset.pattern.permute.xlu0 0
    %3434 = vperm.xlu0 %3433, %v3230
    %v3435 = vpop.permute.xlu0 %3434
    %v3437 = vmul.f32 %v2236, %v3400
    %v3438 = vmul.f32 %v2237, %v3405
    %v3439 = vmul.f32 %v2238, %v3410
    %v3440 = vmul.f32 %v2239, %v3415
    %v3441 = vmul.f32 %v2240, %v3420
    %v3442 = vmul.f32 %v2241, %v3425
    %v3443 = vmul.f32 %v2242, %v3430
    %v3444 = vmul.f32 %v2243, %v3435
    %v3445 = vrot.slane %v3437, 4
    %v3446 = vadd.f32 %v3437, %v3445
    %v3447 = vrot.slane %v3446, 2
    %v3448 = vadd.f32 %v3446, %v3447
    %v3449 = vrot.slane %v3448, 1
    %v3450 = vadd.f32 %v3448, %v3449
    %v3451 = vrot.slane %v3438, 4
    %v3452 = vadd.f32 %v3438, %v3451
    %v3453 = vrot.slane %v3452, 2
    %v3454 = vadd.f32 %v3452, %v3453
    %v3455 = vrot.slane %v3454, 1
    %v3456 = vadd.f32 %v3454, %v3455
    %v3457 = vrot.slane %v3439, 4
    %v3458 = vadd.f32 %v3439, %v3457
    %v3459 = vrot.slane %v3458, 2
    %v3460 = vadd.f32 %v3458, %v3459
    %v3461 = vrot.slane %v3460, 1
    %v3462 = vadd.f32 %v3460, %v3461
    %v3463 = vrot.slane %v3440, 4
    %v3464 = vadd.f32 %v3440, %v3463
    %v3465 = vrot.slane %v3464, 2
    %v3466 = vadd.f32 %v3464, %v3465
    %v3467 = vrot.slane %v3466, 1
    %v3468 = vadd.f32 %v3466, %v3467
    %v3469 = vrot.slane %v3441, 4
    %v3470 = vadd.f32 %v3441, %v3469
    %v3471 = vrot.slane %v3470, 2
    %v3472 = vadd.f32 %v3470, %v3471
    %v3473 = vrot.slane %v3472, 1
    %v3474 = vadd.f32 %v3472, %v3473
    %v3475 = vrot.slane %v3442, 4
    %v3476 = vadd.f32 %v3442, %v3475
    %v3477 = vrot.slane %v3476, 2
    %v3478 = vadd.f32 %v3476, %v3477
    %v3479 = vrot.slane %v3478, 1
    %v3480 = vadd.f32 %v3478, %v3479
    %v3481 = vrot.slane %v3443, 4
    %v3482 = vadd.f32 %v3443, %v3481
    %v3483 = vrot.slane %v3482, 2
    %v3484 = vadd.f32 %v3482, %v3483
    %v3485 = vrot.slane %v3484, 1
    %v3486 = vadd.f32 %v3484, %v3485
    %v3487 = vrot.slane %v3444, 4
    %v3488 = vadd.f32 %v3444, %v3487
    %v3489 = vrot.slane %v3488, 2
    %v3490 = vadd.f32 %v3488, %v3489
    %v3491 = vrot.slane %v3490, 1
    %v3492 = vadd.f32 %v3490, %v3491
    %v3501 = vsel %vm3023, %v3456, %v3450
    %v3502 = vsel %vm3025, %v3462, %v3501
    %v3503 = vsel %vm3027, %v3468, %v3502
    %v3504 = vsel %vm3029, %v3474, %v3503
    %v3505 = vsel %vm3031, %v3480, %v3504
    %v3506 = vsel %vm3033, %v3486, %v3505
    %v3507 = vsel %vm3035, %v3492, %v3506
    %3509 = vst [vmem:[#allocation9] sm:$0xff] %v3507
    %v3510 = vlaneseq
    %v3511 = vshrl.u32 %v3510, 7
    %v3512 = vsub.s32 0, %v3511
    %v3513 = vrot.slane %v3389, %v3512
    %3515 = vbcast.lane.b32.xlu0 %v3513, 256
    %v3516 = vpop.permute.xlu0 %3515
    %v3517 = vlaneseq
    %v3518 = vshrl.u32 %v3517, 7
    %v3519 = vsub.s32 0, %v3518
    %v3520 = vrot.slane %v3390, %v3519
    %3522 = vbcast.lane.b32.xlu0 %v3520, 256
    %v3523 = vpop.permute.xlu0 %3522
    %v3524 = vlaneseq
    %v3525 = vshrl.u32 %v3524, 7
    %v3526 = vsub.s32 0, %v3525
    %v3527 = vrot.slane %v3391, %v3526
    %3529 = vbcast.lane.b32.xlu0 %v3527, 256
    %v3530 = vpop.permute.xlu0 %3529
    %v3531 = vlaneseq
    %v3532 = vshrl.u32 %v3531, 7
    %v3533 = vsub.s32 0, %v3532
    %v3534 = vrot.slane %v3392, %v3533
    %3536 = vbcast.lane.b32.xlu0 %v3534, 256
    %v3537 = vpop.permute.xlu0 %3536
    %v3538 = vlaneseq
    %v3539 = vshrl.u32 %v3538, 7
    %v3540 = vsub.s32 0, %v3539
    %v3541 = vrot.slane %v3393, %v3540
    %3543 = vbcast.lane.b32.xlu0 %v3541, 256
    %v3544 = vpop.permute.xlu0 %3543
    %v3545 = vlaneseq
    %v3546 = vshrl.u32 %v3545, 7
    %v3547 = vsub.s32 0, %v3546
    %v3548 = vrot.slane %v3394, %v3547
    %3550 = vbcast.lane.b32.xlu0 %v3548, 256
    %v3551 = vpop.permute.xlu0 %3550
    %v3552 = vlaneseq
    %v3553 = vshrl.u32 %v3552, 7
    %v3554 = vsub.s32 0, %v3553
    %v3555 = vrot.slane %v3395, %v3554
    %3557 = vbcast.lane.b32.xlu0 %v3555, 256
    %v3558 = vpop.permute.xlu0 %3557
    %v3559 = vlaneseq
    %v3560 = vshrl.u32 %v3559, 7
    %v3561 = vsub.s32 0, %v3560
    %v3562 = vrot.slane %v3396, %v3561
    %3564 = vbcast.lane.b32.xlu0 %v3562, 256
    %v3565 = vpop.permute.xlu0 %3564
    %v3566 = vmul.f32 %v2372, %v3516
    %v3567 = vmul.f32 %v2373, %v3523
    %v3568 = vmul.f32 %v2374, %v3530
    %v3569 = vmul.f32 %v2375, %v3537
    %v3570 = vmul.f32 %v2376, %v3544
    %v3571 = vmul.f32 %v2377, %v3551
    %v3572 = vmul.f32 %v2378, %v3558
    %v3573 = vmul.f32 %v2379, %v3565
    %v3574 = vrot.slane %v3566, 4
    %v3575 = vadd.f32 %v3566, %v3574
    %v3576 = vrot.slane %v3575, 2
    %v3577 = vadd.f32 %v3575, %v3576
    %v3578 = vrot.slane %v3577, 1
    %v3579 = vadd.f32 %v3577, %v3578
    %v3580 = vrot.slane %v3567, 4
    %v3581 = vadd.f32 %v3567, %v3580
    %v3582 = vrot.slane %v3581, 2
    %v3583 = vadd.f32 %v3581, %v3582
    %v3584 = vrot.slane %v3583, 1
    %v3585 = vadd.f32 %v3583, %v3584
    %v3586 = vrot.slane %v3568, 4
    %v3587 = vadd.f32 %v3568, %v3586
    %v3588 = vrot.slane %v3587, 2
    %v3589 = vadd.f32 %v3587, %v3588
    %v3590 = vrot.slane %v3589, 1
    %v3591 = vadd.f32 %v3589, %v3590
    %v3592 = vrot.slane %v3569, 4
    %v3593 = vadd.f32 %v3569, %v3592
    %v3594 = vrot.slane %v3593, 2
    %v3595 = vadd.f32 %v3593, %v3594
    %v3596 = vrot.slane %v3595, 1
    %v3597 = vadd.f32 %v3595, %v3596
    %v3598 = vrot.slane %v3570, 4
    %v3599 = vadd.f32 %v3570, %v3598
    %v3600 = vrot.slane %v3599, 2
    %v3601 = vadd.f32 %v3599, %v3600
    %v3602 = vrot.slane %v3601, 1
    %v3603 = vadd.f32 %v3601, %v3602
    %v3604 = vrot.slane %v3571, 4
    %v3605 = vadd.f32 %v3571, %v3604
    %v3606 = vrot.slane %v3605, 2
    %v3607 = vadd.f32 %v3605, %v3606
    %v3608 = vrot.slane %v3607, 1
    %v3609 = vadd.f32 %v3607, %v3608
    %v3610 = vrot.slane %v3572, 4
    %v3611 = vadd.f32 %v3572, %v3610
    %v3612 = vrot.slane %v3611, 2
    %v3613 = vadd.f32 %v3611, %v3612
    %v3614 = vrot.slane %v3613, 1
    %v3615 = vadd.f32 %v3613, %v3614
    %v3616 = vrot.slane %v3573, 4
    %v3617 = vadd.f32 %v3573, %v3616
    %v3618 = vrot.slane %v3617, 2
    %v3619 = vadd.f32 %v3617, %v3618
    %v3620 = vrot.slane %v3619, 1
    %v3621 = vadd.f32 %v3619, %v3620
    %v3630 = vsel %vm3023, %v3585, %v3579
    %v3631 = vsel %vm3025, %v3591, %v3630
    %v3632 = vsel %vm3027, %v3597, %v3631
    %v3633 = vsel %vm3029, %v3603, %v3632
    %v3634 = vsel %vm3031, %v3609, %v3633
    %v3635 = vsel %vm3033, %v3615, %v3634
    %v3636 = vsel %vm3035, %v3621, %v3635
    %3638 = vst [vmem:[#allocation10] sm:$0xff] %v3636
    // Predicated region
    $region34: #{tpu_custom_call.1} parent=1 // pred_check
      _
    $region35: #{tpu_custom_call.1} parent=1 // pred_check_branch
      %3640 = sbr.rel (0) target = $region37
    $region36: #{tpu_custom_call.1} parent=1 // pred_region
      %s3642 = ssub.s32 128, 128
      %3643 = vsyncadd [#allocation5], %s3642
      %s3645 = sshll.u32 [#allocation9], 4
      %s3646 = int_to_ptr.vmem [resolvable:$true] %s3645
      %3648 = dma.vmem_to_hbm [thread:$0]  %s3646, 128, %s5, [#allocation5]
    $region37: #{tpu_custom_call.1} parent=1 // pred_fallthru
      _
    // Predicated region
    $region38: #{tpu_custom_call.1} parent=1 // pred_check
      _
    $region39: #{tpu_custom_call.1} parent=1 // pred_check_branch
      %3650 = sbr.rel (0) target = $region41
    $region40: #{tpu_custom_call.1} parent=1 // pred_region
      %s3652 = ssub.s32 128, 128
      %3653 = vsyncadd [#allocation11], %s3652
      %s3655 = sshll.u32 [#allocation10], 4
      %s3656 = int_to_ptr.vmem [resolvable:$true] %s3655
      %3658 = dma.vmem_to_hbm [thread:$0]  %s3656, 128, %s6, [#allocation11]
    $region41: #{tpu_custom_call.1} parent=1 // pred_fallthru
      _
    // Predicated region
    $region42: #{tpu_custom_call.1} parent=1 // pred_check
      _
    $region43: #{tpu_custom_call.1} parent=1 // pred_check_branch
      %3660 = sbr.rel (0) target = $region45
    $region44: #{tpu_custom_call.1} parent=1 // pred_region
      %3661 = dma.done [#allocation5], 128
    $region45: #{tpu_custom_call.1} parent=1 // pred_fallthru
      _
    // Predicated region
    $region46: #{tpu_custom_call.1} parent=1 // pred_check
      _
    $region47: #{tpu_custom_call.1} parent=1 // pred_check_branch
      %3663 = sbr.rel (0) target = $region49
    $region48: #{tpu_custom_call.1} parent=1 // pred_region
      %3664 = dma.done [#allocation11], 128
    $region49: #{tpu_custom_call.1} parent=1 // pred_fallthru
      _
    %3665 = vsyncpa [#allocation4], 1
    %3666 = vsyncpa [#allocation7], 1
    %3667 = vsyncpa [#allocation5], 1
    %3668 = vsyncpa [#allocation11], 1

</llo_original>
